<compile_context>
chip_gen: v7x
topology: tpu7x:2x2x1
jax: 0.10.0
libtpu: 0.0.40
codegen_flags: <defaults>
</compile_context>

<pallas_src>
import functools

import jax
import jax.numpy as jnp
from jax import lax
from jax.experimental import pallas as pl
from jax.experimental.pallas import tpu as pltpu


# ----------------------------------------------------------------------------
# Fused Pallas kernel: one (batch-block, stream) tile per grid step
# ----------------------------------------------------------------------------
def _fused_layer_kernel(
    x_ref, w_in_ref, b_in_ref, conv_w_ref, conv_b_ref,
    xproj_w_ref, xproj_b_ref, dtp_w_ref, dtp_b_ref,
    a_ref, dskip_ref, w_out_ref, b_out_ref, nw_ref, nb_ref,
    o_ref,
    xact_scr, dt_scr, bc_scr, z_scr, yf_scr, yb_scr,
    *, n_seq, seq_len, k_conv, d_inner, d_state, dt_rank, t_block, eps):
  f32 = jnp.float32
  bf16 = jnp.bfloat16
  L, K, DI, DS, R, TB = seq_len, k_conv, d_inner, d_state, dt_rank, t_block
  DI2 = 2 * DI
  rows = n_seq * L

  # ---------------- phase 1: in_proj (fat-M matmul, bf16 operands) --------------------
  x = x_ref[...].astype(f32)                                          # (rows, D)
  xz = (jnp.dot(x.astype(bf16), w_in_ref[...],
                preferred_element_type=f32) + b_in_ref[...])          # (rows, 2*DI)
  x_in = xz[:, :DI]
  z_scr[...] = xz[:, DI:]

  # ---------------- phase 2: depthwise conv (causal fwd / anti-causal bwd) + SiLU ------
  # per-sequence shifted slices of a zero-padded value; bwd taps are pre-flipped in the
  # wrapper so the backward direction runs as an anti-causal conv on unflipped data.
  x3 = x_in.reshape(n_seq, L, DI)
  zpad = jnp.zeros((n_seq, K - 1, DI), f32)
  xsh = jnp.concatenate([zpad, x3, zpad], axis=1)                     # (n_seq, L+2K-2, DI)
  wf = conv_w_ref[0]                                                  # (K, DI)
  wb = conv_w_ref[1]                                                  # (K, DI)
  acc_f = jnp.zeros((n_seq, L, DI), f32)
  acc_b = jnp.zeros((n_seq, L, DI), f32)
  for k in range(K):                                                  # K = 4, unrolled
    acc_f = acc_f + xsh[:, k:k + L, :] * wf[k:k + 1, :].reshape(1, 1, DI)
    acc_b = acc_b + xsh[:, K - 1 + k:K - 1 + k + L, :] * wb[k:k + 1, :].reshape(1, 1, DI)
  xact3 = (jnp.concatenate([acc_f, acc_b], axis=-1)
           + conv_b_ref[...].reshape(1, 1, DI2))
  xact3 = xact3 * jax.nn.sigmoid(xact3)                               # SiLU, 128 lanes
  xact = xact3.reshape(rows, DI2)
  xact_scr[...] = xact

  # ---------------- phase 3: x_proj (dt/B/C, one bf16 matmul) + low-rank dt_proj -------
  xdbl = (jnp.dot(xact.astype(bf16), xproj_w_ref[...],
                  preferred_element_type=f32) + xproj_b_ref[...])     # (rows, 2R+4DS)
  bc_scr[...] = xdbl[:, 2 * R:]                                       # [B_f|B_b|C_f|C_b]
  dt = jax.nn.softplus(jnp.dot(xdbl[:, :2 * R], dtp_w_ref[...],
                               preferred_element_type=f32) + dtp_b_ref[...])
  dt_scr[...] = dt                                                    # (rows, DI2)

  # ---------------- phase 4: fused bidirectional selective scan ------------------------
  a2 = a_ref[...]                                                     # (DS, DI2), negative
  d2 = dskip_ref[...]                                                 # (1, DI2)
  nblk = L // TB

  def fuse_rows(fblk, bblk, split):
    # scan-ordered fused rows: step t -> fwd row t (natural), bwd row TB-1-t (mirrored)
    rows_ = [jnp.concatenate([fblk[t:t + 1, :split],
                              bblk[TB - 1 - t:TB - t, split:]], axis=1)
             for t in range(TB)]
    return jnp.concatenate(rows_, axis=0)

  for si in range(n_seq):                       # independent sequences in this block
    base = si * L

    def blk_body(blk, h, base=base):
      fs = pl.multiple_of(base + blk * TB, TB)                        # fwd block rows
      bs = pl.multiple_of(base + (L - TB) - blk * TB, TB)             # mirrored bwd rows

      dt_f = dt_scr[pl.ds(fs, TB), :]
      dt_b = dt_scr[pl.ds(bs, TB), :]
      xa_f = xact_scr[pl.ds(fs, TB), :]
      xa_b = xact_scr[pl.ds(bs, TB), :]
      bc_f = bc_scr[pl.ds(fs, TB), :]                                 # (TB, 4*DS)
      bc_b = bc_scr[pl.ds(bs, TB), :]

      # --- hoisted, off-chain block work (EUP/XLU overlap with the recurrence) ---
      dt_s = fuse_rows(dt_f, dt_b, DI)                                # (TB, DI2)
      xa_s = fuse_rows(xa_f, xa_b, DI)
      dtu = dt_s * xa_s
      dA = jnp.exp(dt_s[:, None, :] * a2[None, :, :])                 # (TB, DS, DI2)
      bft = bc_f[:, 0:DS].T                                           # (DS, TB)
      bbt = bc_b[:, DS:2 * DS].T
      cft = bc_f[:, 2 * DS:3 * DS].T
      cbt = bc_b[:, 3 * DS:4 * DS].T
      us = []
      for t in range(TB):
        bcol = jnp.concatenate(
            [jnp.broadcast_to(bft[:, t:t + 1], (DS, DI)),
             jnp.broadcast_to(bbt[:, TB - 1 - t:TB - t], (DS, DI))], axis=1)
        us.append(bcol * dtu[t:t + 1, :])                             # (DS, DI2)

      # --- minimal recurrence: 2 VALU ops per vreg per step, h stays in vregs ---
      hs = []
      for t in range(TB):
        h = dA[t] * h + us[t]
        hs.append(h)

      # --- deferred C-contraction + D skip (off-chain), blocked stores ---
      yrs = []
      for t in range(TB):
        ccol = jnp.concatenate(
            [jnp.broadcast_to(cft[:, t:t + 1], (DS, DI)),
             jnp.broadcast_to(cbt[:, TB - 1 - t:TB - t], (DS, DI))], axis=1)
        yrs.append(jnp.sum(hs[t] * ccol, axis=0, keepdims=True))      # (1, DI2)
      y_s = jnp.concatenate(yrs, axis=0) + d2 * xa_s                  # (TB, DI2)
      yf_scr[pl.ds(fs, TB), :] = y_s[:, :DI]
      y_bwd = jnp.concatenate([y_s[TB - 1 - t:TB - t, DI:DI2] for t in range(TB)],
                              axis=0)                                 # back to natural time
      yb_scr[pl.ds(bs, TB), :] = y_bwd
      return h

    lax.fori_loop(0, nblk, blk_body, jnp.zeros((DS, DI2), f32))

  # ---------------- phase 5: combine, gate, out_proj, LayerNorm + residual -------------
  ysum = yf_scr[...] + yb_scr[...]                                    # (rows, DI)
  zz = z_scr[...]
  gate = zz * jax.nn.sigmoid(zz)                                      # SiLU(z)
  out = (jnp.dot((ysum * gate).astype(bf16), w_out_ref[...],
                 preferred_element_type=f32) + b_out_ref[...])        # (rows, D)
  mean = jnp.mean(out, axis=-1, keepdims=True)
  cen = out - mean
  var = jnp.mean(cen * cen, axis=-1, keepdims=True)
  xres = x_ref[...].astype(f32)
  o_ref[...] = (xres + cen * lax.rsqrt(var + eps) * nw_ref[...]
                + nb_ref[...]).astype(o_ref.dtype)


# ----------------------------------------------------------------------------
# Wrapper: weight packing (lane-fused directions) + single pallas_call
# ----------------------------------------------------------------------------
def _pick_batch_block(batch, seq_len, target_rows=512):
  for cand in range(1, batch + 1):
    if batch % cand == 0 and cand * seq_len >= target_rows:
      return cand
  return batch


def mm_mamba_encoder_layer(primary_x, secondary_x, params, eps=1e-6):
  # TODO(synk): MMBiMamba source is not in the provided module; implemented as a
  # bidirectional (bimamba-v2 style) selective-SSM block shared by both modalities.
  B, L, D = primary_x.shape
  d_inner = params["in_proj_w"].shape[1] // 2
  d_state = params["fwd_A"].shape[0]
  dt_rank = params["fwd_dt_proj_w"].shape[0]
  K = params["fwd_conv_w"].shape[0]
  f32, bf16 = jnp.float32, jnp.bfloat16
  DI, DS, R = d_inner, d_state, dt_rank
  DI2 = 2 * DI

  TB = max(t for t in (8, 4, 2, 1) if L % t == 0)
  bb = _pick_batch_block(B, L)
  if (bb * L) % 8 != 0:
    bb = B                                    # full-extent block is always legal
  rows = bb * L

  x_all = jnp.stack([primary_x, secondary_x], axis=0).astype(f32).reshape(2, B * L, D)

  # in_proj: one (D, 2*d_inner) matmul (x half | z half)
  w_in = params["in_proj_w"].astype(bf16)
  b_in = params["in_proj_b"].reshape(1, DI2).astype(f32)
  # backward direction runs as an anti-causal conv on unflipped data -> reversed taps
  conv_w = jnp.stack([params["fwd_conv_w"],
                      jnp.flip(params["bwd_conv_w"], axis=0)], axis=0).astype(f32)
  conv_b = jnp.concatenate([params["fwd_conv_b"],
                            params["bwd_conv_b"]]).reshape(1, DI2).astype(f32)

  def place(w, d):      # (DI, n) -> (2*DI, n), zero rows for the other direction
    z = jnp.zeros_like(w)
    return jnp.concatenate([w, z] if d == 0 else [z, w], axis=0)

  wxf, wxb = params["fwd_x_proj_w"], params["bwd_x_proj_w"]
  bxf, bxb = params["fwd_x_proj_b0"], params["bwd_x_proj_b0"]
  # one block-diagonal x_proj: columns = [dt_f | dt_b | B_f | B_b | C_f | C_b]
  xproj_w = jnp.concatenate(
      [place(wxf[:, :R], 0), place(wxb[:, :R], 1),
       place(wxf[:, R:R + DS], 0), place(wxb[:, R:R + DS], 1),
       place(wxf[:, R + DS:], 0), place(wxb[:, R + DS:], 1)], axis=1).astype(bf16)
  xproj_b = jnp.concatenate(
      [bxf[:R], bxb[:R], bxf[R:R + DS], bxb[R:R + DS],
       bxf[R + DS:], bxb[R + DS:]]).reshape(1, 2 * R + 4 * DS).astype(f32)

  def blockdiag(a, b):
    top = jnp.concatenate([a, jnp.zeros((a.shape[0], b.shape[1]), a.dtype)], axis=1)
    bot = jnp.concatenate([jnp.zeros((b.shape[0], a.shape[1]), b.dtype), b], axis=1)
    return jnp.concatenate([top, bot], axis=0)

  dtp_w = blockdiag(params["fwd_dt_proj_w"], params["bwd_dt_proj_w"]).astype(f32)  # (2R, DI2)
  dtp_b = jnp.concatenate([params["fwd_dt_proj_b"],
                           params["bwd_dt_proj_b"]]).reshape(1, DI2).astype(f32)
  a2 = jnp.concatenate([params["fwd_A"], params["bwd_A"]], axis=1).astype(f32)     # (DS, DI2)
  d2 = jnp.concatenate([params["fwd_D"], params["bwd_D"]]).reshape(1, DI2).astype(f32)
  w_out = params["out_proj_w"].astype(bf16)                                        # (DI, D)
  b_out = params["out_proj_b"].reshape(1, D).astype(f32)
  nw = jnp.stack([params["norm1_w"].reshape(1, D),
                  params["norm2_w"].reshape(1, D)], axis=0).astype(f32)
  nb_ = jnp.stack([params["norm1_b"].reshape(1, D),
                   params["norm2_b"].reshape(1, D)], axis=0).astype(f32)

  nproj = 2 * R + 4 * DS
  const2 = lambda b, s: (0, 0)
  const3 = lambda b, s: (0, 0, 0)

  kernel = functools.partial(
      _fused_layer_kernel, n_seq=bb, seq_len=L, k_conv=K, d_inner=DI,
      d_state=DS, dt_rank=R, t_block=TB, eps=eps)

  out_all = pl.pallas_call(
      kernel,
      grid=(B // bb, 2),                               # batch blocks leading, then stream
      in_specs=[
          pl.BlockSpec((None, rows, D), lambda b, s: (s, b, 0)),   # x
          pl.BlockSpec((D, DI2), const2),                          # in_proj w (bf16)
          pl.BlockSpec((1, DI2), const2),                          # in_proj b
          pl.BlockSpec((2, K, DI), const3),                        # conv taps (bwd flipped)
          pl.BlockSpec((1, DI2), const2),                          # conv bias
          pl.BlockSpec((DI2, nproj), const2),                      # x_proj (block-diag, bf16)
          pl.BlockSpec((1, nproj), const2),                        # x_proj bias
          pl.BlockSpec((2 * R, DI2), const2),                      # dt_proj (block-diag)
          pl.BlockSpec((1, DI2), const2),                          # dt_proj bias
          pl.BlockSpec((DS, DI2), const2),                         # A (negative)
          pl.BlockSpec((1, DI2), const2),                          # D skip
          pl.BlockSpec((DI, D), const2),                           # out_proj w (bf16)
          pl.BlockSpec((1, D), const2),                            # out_proj b
          pl.BlockSpec((None, 1, D), lambda b, s: (s, 0, 0)),      # LN gamma (per stream)
          pl.BlockSpec((None, 1, D), lambda b, s: (s, 0, 0)),      # LN beta
      ],
      out_specs=pl.BlockSpec((None, rows, D), lambda b, s: (s, b, 0)),
      out_shape=jax.ShapeDtypeStruct((2, B * L, D), f32),
      scratch_shapes=[
          pltpu.VMEM((rows, DI2), f32),                            # xact = SiLU(conv)
          pltpu.VMEM((rows, DI2), f32),                            # dt
          pltpu.VMEM((rows, 4 * DS), f32),                         # B/C
          pltpu.VMEM((rows, DI), f32),                             # z
          pltpu.VMEM((rows, DI), f32),                             # y fwd
          pltpu.VMEM((rows, DI), f32),                             # y bwd
      ],
      compiler_params=pltpu.CompilerParams(
          dimension_semantics=("parallel", "parallel"),
          vmem_limit_bytes=32 * 1024 * 1024),
  )(x_all, w_in, b_in, conv_w, conv_b, xproj_w, xproj_b, dtp_w, dtp_b,
    a2, d2, w_out, b_out, nw, nb_)

  out_all = out_all.reshape(2, B, L, D)
  return out_all[0], out_all[1]


# ----------------------------------------------------------------------------
# Pure-JAX reference (straightforward formulation with flips).
# matmul_dtype=jnp.bfloat16 mirrors the kernel's intentional bf16 MXU operands.
# ----------------------------------------------------------------------------
def _reference_layer(primary_x, secondary_x, params, eps=1e-6, matmul_dtype=None):
  f32 = jnp.float32

  def mm(a, b):
    if matmul_dtype is not None:
      a = a.astype(matmul_dtype)
      b = b.astype(matmul_dtype)
    return jnp.dot(a, b, preferred_element_type=f32)

  silu = lambda v: v * jax.nn.sigmoid(v)

  def causal_conv(x, w, b):                      # x: (B, L, C), w: (K, C)
    K, L = w.shape[0], x.shape[1]
    xpad = jnp.pad(x, ((0, 0), (K - 1, 0), (0, 0)))
    return sum(xpad[:, k:k + L, :] * w[k] for k in range(K)) + b

  def branch(x_in, pre):
    x_act = silu(causal_conv(x_in, params[pre + "conv_w"], params[pre + "conv_b"]))
    x_dbl = mm(x_act, params[pre + "x_proj_w"]) + params[pre + "x_proj_b0"]
    dt_rank = params[pre + "dt_proj_w"].shape[0]
    d_state = params[pre + "A"].shape[0]
    dt = jax.nn.softplus(
        jnp.dot(x_dbl[..., :dt_rank], params[pre + "dt_proj_w"],
                preferred_element_type=f32) + params[pre + "dt_proj_b"])
    Bm = x_dbl[..., dt_rank:dt_rank + d_state]
    Cm = x_dbl[..., dt_rank + d_state:]
    A, Dp = params[pre + "A"], params[pre + "D"]

    def scan_one(u, dtt, Bs, Cs):
      def step(h, inp):
        u_t, dt_t, B_t, C_t = inp
        h = jnp.exp(dt_t[None, :] * A) * h + B_t[:, None] * (dt_t * u_t)[None, :]
        return h, (h * C_t[:, None]).sum(0) + Dp * u_t
      _, ys = lax.scan(step, jnp.zeros_like(A), (u, dtt, Bs, Cs))
      return ys

    return jax.vmap(scan_one)(x_act, dt, Bm, Cm)

  def bimamba(x):
    d_inner = params["in_proj_w"].shape[1] // 2
    xz = mm(x, params["in_proj_w"]) + params["in_proj_b"]
    x_in, z = xz[..., :d_inner], xz[..., d_inner:]
    y_f = branch(x_in, "fwd_")
    y_b = jnp.flip(branch(jnp.flip(x_in, axis=1), "bwd_"), axis=1)
    return mm((y_f + y_b) * silu(z), params["out_proj_w"]) + params["out_proj_b"]

  def ln_res(x, y, w, b):
    m = y.mean(-1, keepdims=True)
    c = y - m
    v = (c * c).mean(-1, keepdims=True)
    return x + c * lax.rsqrt(v + eps) * w + b

  return (ln_res(primary_x, bimamba(primary_x), params["norm1_w"], params["norm1_b"]),
          ln_res(secondary_x, bimamba(secondary_x), params["norm2_w"], params["norm2_b"]))


# ----------------------------------------------------------------------------
# Deterministic parameter init
# ----------------------------------------------------------------------------
def init_params(key, d_model=32, d_state=16, d_conv=4, expand=2):
  d_inner = expand * d_model
  dt_rank = max(1, -(-d_model // 16))            # ceil(d_model / 16)
  keys = jax.random.split(key, 8)

  def nrm(k, shape, scale):
    return (scale * jax.random.normal(k, shape)).astype(jnp.float32)

  p = {}
  p["in_proj_w"] = nrm(keys[0], (d_model, 2 * d_inner), 0.1)
  p["in_proj_b"] = jnp.zeros((2 * d_inner,), jnp.float32)
  p["out_proj_w"] = nrm(keys[1], (d_inner, d_model), 0.1)
  p["out_proj_b"] = jnp.zeros((d_model,), jnp.float32)
  for i, pre in enumerate(["fwd_", "bwd_"]):
    kk = jax.random.split(keys[2 + i], 4)
    p[pre + "conv_w"] = nrm(kk[0], (d_conv, d_inner), 0.3)
    p[pre + "conv_b"] = jnp.zeros((d_inner,), jnp.float32)
    p[pre + "x_proj_w"] = nrm(kk[1], (d_inner, dt_rank + 2 * d_state), 0.1)
    p[pre + "x_proj_b0"] = jnp.zeros((dt_rank + 2 * d_state,), jnp.float32)
    p[pre + "dt_proj_w"] = nrm(kk[2], (dt_rank, d_inner), 0.5)
    p[pre + "dt_proj_b"] = nrm(kk[3], (d_inner,), 0.1)
    # S4D-real init: A = -[1..d_state], stored transposed (d_state, d_inner)
    p[pre + "A"] = -jnp.broadcast_to(
        jnp.arange(1, d_state + 1, dtype=jnp.float32)[:, None], (d_state, d_inner))
    p[pre + "D"] = jnp.ones((d_inner,), jnp.float32)
  p["norm1_w"] = jnp.ones((d_model,), jnp.float32)
  p["norm1_b"] = jnp.zeros((d_model,), jnp.float32)
  p["norm2_w"] = jnp.ones((d_model,), jnp.float32)
  p["norm2_b"] = jnp.zeros((d_model,), jnp.float32)
  return p


if __name__ == "__main__":
  key = jax.random.PRNGKey(0)
  k_params, k_p, k_s = jax.random.split(key, 3)
  B, L, d_model = 2, 8, 32
  params = init_params(k_params, d_model=d_model)
  primary_x = jax.random.normal(k_p, (B, L, d_model), jnp.float32)
  secondary_x = jax.random.normal(k_s, (B, L, d_model), jnp.float32)

  layer = jax.jit(mm_mamba_encoder_layer)
  primary_out, secondary_out = layer(primary_x, secondary_x, params)
  jax.block_until_ready((primary_out, secondary_out))

  assert primary_out.shape == (B, L, d_model)
  assert secondary_out.shape == (B, L, d_model)
  assert bool(jnp.all(jnp.isfinite(primary_out)))
  assert bool(jnp.all(jnp.isfinite(secondary_out)))

  # Tight check: same math with matmul operands rounded to bf16 (the kernel intentionally
  # feeds the MXU bf16 operands with f32 accumulation, per the performance review).
  rb_p, rb_s = _reference_layer(primary_x, secondary_x, params, matmul_dtype=jnp.bfloat16)
  err_b = max(float(jnp.max(jnp.abs(primary_out - rb_p))),
              float(jnp.max(jnp.abs(secondary_out - rb_s))))
  assert err_b < 5e-3, f"mismatch vs bf16-matmul reference: {err_b}"

  # Sanity check vs the all-f32 reference; the tolerance reflects bf16 matmul rounding
  # amplified by the 1/std rescale of the final LayerNorm (intentional, documented).
  rf_p, rf_s = _reference_layer(primary_x, secondary_x, params)
  err_f = max(float(jnp.max(jnp.abs(primary_out - rf_p))),
              float(jnp.max(jnp.abs(secondary_out - rf_s))))
  assert err_f < 3e-1, f"mismatch vs f32 reference: {err_f}"

  print("KERNEL_OK")
</pallas_src>

<mosaic_0001>
module attributes {stable_mosaic.version = 11 : i64} {
  func.func @_fused_layer_kernel(%arg0: i32, %arg1: i32, %arg2: memref<1x16x32xf32, #tpu.memory_space<vmem>>, %arg3: memref<32x128xbf16, #tpu.memory_space<vmem>>, %arg4: memref<1x128xf32, #tpu.memory_space<vmem>>, %arg5: memref<2x4x64xf32, #tpu.memory_space<vmem>>, %arg6: memref<1x128xf32, #tpu.memory_space<vmem>>, %arg7: memref<128x68xbf16, #tpu.memory_space<vmem>>, %arg8: memref<1x68xf32, #tpu.memory_space<vmem>>, %arg9: memref<4x128xf32, #tpu.memory_space<vmem>>, %arg10: memref<1x128xf32, #tpu.memory_space<vmem>>, %arg11: memref<16x128xf32, #tpu.memory_space<vmem>>, %arg12: memref<1x128xf32, #tpu.memory_space<vmem>>, %arg13: memref<64x32xbf16, #tpu.memory_space<vmem>>, %arg14: memref<1x32xf32, #tpu.memory_space<vmem>>, %arg15: memref<1x1x32xf32, #tpu.memory_space<vmem>>, %arg16: memref<1x1x32xf32, #tpu.memory_space<vmem>>, %arg17: memref<1x16x32xf32, #tpu.memory_space<vmem>>, %arg18: memref<16x128xf32, #tpu.memory_space<vmem>>, %arg19: memref<16x128xf32, #tpu.memory_space<vmem>>, %arg20: memref<16x64xf32, #tpu.memory_space<vmem>>, %arg21: memref<16x64xf32, #tpu.memory_space<vmem>>, %arg22: memref<16x64xf32, #tpu.memory_space<vmem>>, %arg23: memref<16x64xf32, #tpu.memory_space<vmem>>) attributes {dimension_semantics = [#tpu.dimension_semantics<parallel>, #tpu.dimension_semantics<parallel>], iteration_bounds = array<i64: 1, 2>, scalar_prefetch = 0 : i64, scratch_operands = 6 : i64, tpu.core_type = #tpu.core_type<tc>, window_params = [{transform_indices = @transform_0, window_bounds = array<i64: 1, 16, 32>}, {pipeline_mode = #tpu.pipeline_mode<synchronous>, transform_indices = @transform_1, window_bounds = array<i64: 32, 128>}, {pipeline_mode = #tpu.pipeline_mode<synchronous>, transform_indices = @transform_2, window_bounds = array<i64: 1, 128>}, {pipeline_mode = #tpu.pipeline_mode<synchronous>, transform_indices = @transform_3, window_bounds = array<i64: 2, 4, 64>}, {pipeline_mode = #tpu.pipeline_mode<synchronous>, transform_indices = @transform_4, window_bounds = array<i64: 1, 128>}, {pipeline_mode = #tpu.pipeline_mode<synchronous>, transform_indices = @transform_5, window_bounds = array<i64: 128, 68>}, {pipeline_mode = #tpu.pipeline_mode<synchronous>, transform_indices = @transform_6, window_bounds = array<i64: 1, 68>}, {pipeline_mode = #tpu.pipeline_mode<synchronous>, transform_indices = @transform_7, window_bounds = array<i64: 4, 128>}, {pipeline_mode = #tpu.pipeline_mode<synchronous>, transform_indices = @transform_8, window_bounds = array<i64: 1, 128>}, {pipeline_mode = #tpu.pipeline_mode<synchronous>, transform_indices = @transform_9, window_bounds = array<i64: 16, 128>}, {pipeline_mode = #tpu.pipeline_mode<synchronous>, transform_indices = @transform_10, window_bounds = array<i64: 1, 128>}, {pipeline_mode = #tpu.pipeline_mode<synchronous>, transform_indices = @transform_11, window_bounds = array<i64: 64, 32>}, {pipeline_mode = #tpu.pipeline_mode<synchronous>, transform_indices = @transform_12, window_bounds = array<i64: 1, 32>}, {transform_indices = @transform_13, window_bounds = array<i64: 1, 1, 32>}, {transform_indices = @transform_14, window_bounds = array<i64: 1, 1, 32>}, {transform_indices = @transform_15, window_bounds = array<i64: 1, 16, 32>}]} {
    %c0 = arith.constant 0 : index
    %c0_0 = arith.constant 0 : index
    %c0_1 = arith.constant 0 : index
    %0 = vector.load %arg2[%c0, %c0_0, %c0_1] : memref<1x16x32xf32, #tpu.memory_space<vmem>>, vector<1x16x32xf32>
    %1 = vector.shape_cast %0 : vector<1x16x32xf32> to vector<16x32xf32>
    %2 = arith.truncf %1 : vector<16x32xf32> to vector<16x32xbf16>
    %c0_2 = arith.constant 0 : index
    %c0_3 = arith.constant 0 : index
    %3 = vector.load %arg3[%c0_2, %c0_3] : memref<32x128xbf16, #tpu.memory_space<vmem>>, vector<32x128xbf16>
    %cst = arith.constant dense<0.000000e+00> : vector<16x128xf32>
    %4 = tpu.matmul %2, %3, %cst {dimension_numbers = #tpu.dot_dimension_numbers<[1], [0], [0], [1], [0, 0, 1, 1], [], []>} : vector<16x32xbf16>, vector<32x128xbf16>, vector<16x128xf32> -> vector<16x128xf32>
    %c0_4 = arith.constant 0 : index
    %c0_5 = arith.constant 0 : index
    %5 = vector.load %arg4[%c0_4, %c0_5] : memref<1x128xf32, #tpu.memory_space<vmem>>, vector<1x128xf32>
    %6 = vector.broadcast %5 : vector<1x128xf32> to vector<16x128xf32>
    %7 = arith.addf %4, %6 : vector<16x128xf32>
    %8 = vector.extract_strided_slice %7 {offsets = [0, 0], sizes = [16, 64], strides = [1, 1]} : vector<16x128xf32> to vector<16x64xf32>
    %9 = vector.extract_strided_slice %7 {offsets = [0, 64], sizes = [16, 64], strides = [1, 1]} : vector<16x128xf32> to vector<16x64xf32>
    %c0_6 = arith.constant 0 : index
    %c0_7 = arith.constant 0 : index
    %10 = vector.load %arg21[%c0_6, %c0_7] : memref<16x64xf32, #tpu.memory_space<vmem>>, vector<16x64xf32>
    tpu.vector_store %arg21[%c0_6, %c0_7], %9 {strides = array<i32>} : memref<16x64xf32, #tpu.memory_space<vmem>>, vector<16x64xf32>,
    %11 = vector.shape_cast %8 : vector<16x64xf32> to vector<2x8x64xf32>
    %cst_8 = arith.constant 0.000000e+00 : f32
    %12 = vector.broadcast %cst_8 : f32 to vector<2x3x64xf32>
    %13 = tpu.concatenate %12, %11, %12 in 1 : vector<2x3x64xf32>, vector<2x8x64xf32>, vector<2x3x64xf32> -> vector<2x14x64xf32>
    %c0_9 = arith.constant 0 : index
    %c0_10 = arith.constant 0 : index
    %c0_11 = arith.constant 0 : index
    %14 = vector.load %arg5[%c0_9, %c0_10, %c0_11] : memref<2x4x64xf32, #tpu.memory_space<vmem>>, vector<1x4x64xf32>
    %15 = vector.shape_cast %14 : vector<1x4x64xf32> to vector<4x64xf32>
    %c1 = arith.constant 1 : index
    %c0_12 = arith.constant 0 : index
    %c0_13 = arith.constant 0 : index
    %16 = vector.load %arg5[%c1, %c0_12, %c0_13] : memref<2x4x64xf32, #tpu.memory_space<vmem>>, vector<1x4x64xf32>
    %17 = vector.shape_cast %16 : vector<1x4x64xf32> to vector<4x64xf32>
    %cst_14 = arith.constant 0.000000e+00 : f32
    %18 = vector.broadcast %cst_14 : f32 to vector<2x8x64xf32>
    %cst_15 = arith.constant 0.000000e+00 : f32
    %19 = vector.broadcast %cst_15 : f32 to vector<2x8x64xf32>
    %20 = vector.extract_strided_slice %13 {offsets = [0, 0, 0], sizes = [2, 8, 64], strides = [1, 1, 1]} : vector<2x14x64xf32> to vector<2x8x64xf32>
    %21 = vector.extract_strided_slice %15 {offsets = [0, 0], sizes = [1, 64], strides = [1, 1]} : vector<4x64xf32> to vector<1x64xf32>
    %22 = vector.shape_cast %21 : vector<1x64xf32> to vector<1x1x64xf32>
    %23 = vector.broadcast %22 : vector<1x1x64xf32> to vector<2x8x64xf32>
    %24 = arith.mulf %20, %23 : vector<2x8x64xf32>
    %25 = arith.addf %18, %24 : vector<2x8x64xf32>
    %26 = vector.extract_strided_slice %13 {offsets = [0, 3, 0], sizes = [2, 8, 64], strides = [1, 1, 1]} : vector<2x14x64xf32> to vector<2x8x64xf32>
    %27 = vector.extract_strided_slice %17 {offsets = [0, 0], sizes = [1, 64], strides = [1, 1]} : vector<4x64xf32> to vector<1x64xf32>
    %28 = vector.shape_cast %27 : vector<1x64xf32> to vector<1x1x64xf32>
    %29 = vector.broadcast %28 : vector<1x1x64xf32> to vector<2x8x64xf32>
    %30 = arith.mulf %26, %29 : vector<2x8x64xf32>
    %31 = arith.addf %19, %30 : vector<2x8x64xf32>
    %32 = vector.extract_strided_slice %13 {offsets = [0, 1, 0], sizes = [2, 8, 64], strides = [1, 1, 1]} : vector<2x14x64xf32> to vector<2x8x64xf32>
    %33 = vector.extract_strided_slice %15 {offsets = [1, 0], sizes = [1, 64], strides = [1, 1]} : vector<4x64xf32> to vector<1x64xf32>
    %34 = vector.shape_cast %33 : vector<1x64xf32> to vector<1x1x64xf32>
    %35 = vector.broadcast %34 : vector<1x1x64xf32> to vector<2x8x64xf32>
    %36 = arith.mulf %32, %35 : vector<2x8x64xf32>
    %37 = arith.addf %25, %36 : vector<2x8x64xf32>
    %38 = vector.extract_strided_slice %13 {offsets = [0, 4, 0], sizes = [2, 8, 64], strides = [1, 1, 1]} : vector<2x14x64xf32> to vector<2x8x64xf32>
    %39 = vector.extract_strided_slice %17 {offsets = [1, 0], sizes = [1, 64], strides = [1, 1]} : vector<4x64xf32> to vector<1x64xf32>
    %40 = vector.shape_cast %39 : vector<1x64xf32> to vector<1x1x64xf32>
    %41 = vector.broadcast %40 : vector<1x1x64xf32> to vector<2x8x64xf32>
    %42 = arith.mulf %38, %41 : vector<2x8x64xf32>
    %43 = arith.addf %31, %42 : vector<2x8x64xf32>
    %44 = vector.extract_strided_slice %13 {offsets = [0, 2, 0], sizes = [2, 8, 64], strides = [1, 1, 1]} : vector<2x14x64xf32> to vector<2x8x64xf32>
    %45 = vector.extract_strided_slice %15 {offsets = [2, 0], sizes = [1, 64], strides = [1, 1]} : vector<4x64xf32> to vector<1x64xf32>
    %46 = vector.shape_cast %45 : vector<1x64xf32> to vector<1x1x64xf32>
    %47 = vector.broadcast %46 : vector<1x1x64xf32> to vector<2x8x64xf32>
    %48 = arith.mulf %44, %47 : vector<2x8x64xf32>
    %49 = arith.addf %37, %48 : vector<2x8x64xf32>
    %50 = vector.extract_strided_slice %13 {offsets = [0, 5, 0], sizes = [2, 8, 64], strides = [1, 1, 1]} : vector<2x14x64xf32> to vector<2x8x64xf32>
    %51 = vector.extract_strided_slice %17 {offsets = [2, 0], sizes = [1, 64], strides = [1, 1]} : vector<4x64xf32> to vector<1x64xf32>
    %52 = vector.shape_cast %51 : vector<1x64xf32> to vector<1x1x64xf32>
    %53 = vector.broadcast %52 : vector<1x1x64xf32> to vector<2x8x64xf32>
    %54 = arith.mulf %50, %53 : vector<2x8x64xf32>
    %55 = arith.addf %43, %54 : vector<2x8x64xf32>
    %56 = vector.extract_strided_slice %13 {offsets = [0, 3, 0], sizes = [2, 8, 64], strides = [1, 1, 1]} : vector<2x14x64xf32> to vector<2x8x64xf32>
    %57 = vector.extract_strided_slice %15 {offsets = [3, 0], sizes = [1, 64], strides = [1, 1]} : vector<4x64xf32> to vector<1x64xf32>
    %58 = vector.shape_cast %57 : vector<1x64xf32> to vector<1x1x64xf32>
    %59 = vector.broadcast %58 : vector<1x1x64xf32> to vector<2x8x64xf32>
    %60 = arith.mulf %56, %59 : vector<2x8x64xf32>
    %61 = arith.addf %49, %60 : vector<2x8x64xf32>
    %62 = vector.extract_strided_slice %13 {offsets = [0, 6, 0], sizes = [2, 8, 64], strides = [1, 1, 1]} : vector<2x14x64xf32> to vector<2x8x64xf32>
    %63 = vector.extract_strided_slice %17 {offsets = [3, 0], sizes = [1, 64], strides = [1, 1]} : vector<4x64xf32> to vector<1x64xf32>
    %64 = vector.shape_cast %63 : vector<1x64xf32> to vector<1x1x64xf32>
    %65 = vector.broadcast %64 : vector<1x1x64xf32> to vector<2x8x64xf32>
    %66 = arith.mulf %62, %65 : vector<2x8x64xf32>
    %67 = arith.addf %55, %66 : vector<2x8x64xf32>
    %68 = tpu.concatenate %61, %67 in 2 : vector<2x8x64xf32>, vector<2x8x64xf32> -> vector<2x8x128xf32>
    %c0_16 = arith.constant 0 : index
    %c0_17 = arith.constant 0 : index
    %69 = vector.load %arg6[%c0_16, %c0_17] : memref<1x128xf32, #tpu.memory_space<vmem>>, vector<1x128xf32>
    %70 = vector.shape_cast %69 : vector<1x128xf32> to vector<1x1x128xf32>
    %71 = vector.broadcast %70 : vector<1x1x128xf32> to vector<2x8x128xf32>
    %72 = arith.addf %68, %71 : vector<2x8x128xf32>
    %73 = arith.negf %72 : vector<2x8x128xf32>
    %74 = math.exp %73 : vector<2x8x128xf32>
    %cst_18 = arith.constant 1.000000e+00 : f32
    %75 = vector.broadcast %cst_18 : f32 to vector<2x8x128xf32>
    %76 = arith.addf %75, %74 : vector<2x8x128xf32>
    %77 = arith.divf %75, %76 : vector<2x8x128xf32>
    %78 = arith.mulf %72, %77 : vector<2x8x128xf32>
    %79 = vector.shape_cast %78 : vector<2x8x128xf32> to vector<16x128xf32>
    %c0_19 = arith.constant 0 : index
    %c0_20 = arith.constant 0 : index
    %80 = vector.load %arg18[%c0_19, %c0_20] : memref<16x128xf32, #tpu.memory_space<vmem>>, vector<16x128xf32>
    tpu.vector_store %arg18[%c0_19, %c0_20], %79 {strides = array<i32>} : memref<16x128xf32, #tpu.memory_space<vmem>>, vector<16x128xf32>,
    %81 = arith.truncf %79 : vector<16x128xf32> to vector<16x128xbf16>
    %c0_21 = arith.constant 0 : index
    %c0_22 = arith.constant 0 : index
    %82 = vector.load %arg7[%c0_21, %c0_22] : memref<128x68xbf16, #tpu.memory_space<vmem>>, vector<128x68xbf16>
    %cst_23 = arith.constant dense<0.000000e+00> : vector<16x68xf32>
    %83 = tpu.matmul %81, %82, %cst_23 {dimension_numbers = #tpu.dot_dimension_numbers<[1], [0], [0], [1], [0, 0, 1, 1], [], []>} : vector<16x128xbf16>, vector<128x68xbf16>, vector<16x68xf32> -> vector<16x68xf32>
    %c0_24 = arith.constant 0 : index
    %c0_25 = arith.constant 0 : index
    %84 = vector.load %arg8[%c0_24, %c0_25] : memref<1x68xf32, #tpu.memory_space<vmem>>, vector<1x68xf32>
    %85 = vector.broadcast %84 : vector<1x68xf32> to vector<16x68xf32>
    %86 = arith.addf %83, %85 : vector<16x68xf32>
    %87 = vector.extract_strided_slice %86 {offsets = [0, 4], sizes = [16, 64], strides = [1, 1]} : vector<16x68xf32> to vector<16x64xf32>
    %c0_26 = arith.constant 0 : index
    %c0_27 = arith.constant 0 : index
    %88 = vector.load %arg20[%c0_26, %c0_27] : memref<16x64xf32, #tpu.memory_space<vmem>>, vector<16x64xf32>
    tpu.vector_store %arg20[%c0_26, %c0_27], %87 {strides = array<i32>} : memref<16x64xf32, #tpu.memory_space<vmem>>, vector<16x64xf32>,
    %89 = vector.extract_strided_slice %86 {offsets = [0, 0], sizes = [16, 4], strides = [1, 1]} : vector<16x68xf32> to vector<16x4xf32>
    %c0_28 = arith.constant 0 : index
    %c0_29 = arith.constant 0 : index
    %90 = vector.load %arg9[%c0_28, %c0_29] : memref<4x128xf32, #tpu.memory_space<vmem>>, vector<4x128xf32>
    %cst_30 = arith.constant dense<0.000000e+00> : vector<16x128xf32>
    %91 = tpu.matmul %89, %90, %cst_30 {dimension_numbers = #tpu.dot_dimension_numbers<[1], [0], [0], [1], [0, 0, 1, 1], [], []>} : vector<16x4xf32>, vector<4x128xf32>, vector<16x128xf32> -> vector<16x128xf32>
    %c0_31 = arith.constant 0 : index
    %c0_32 = arith.constant 0 : index
    %92 = vector.load %arg10[%c0_31, %c0_32] : memref<1x128xf32, #tpu.memory_space<vmem>>, vector<1x128xf32>
    %93 = vector.broadcast %92 : vector<1x128xf32> to vector<16x128xf32>
    %94 = arith.addf %91, %93 : vector<16x128xf32>
    %cst_33 = arith.constant 0.000000e+00 : f32
    %95 = vector.broadcast %cst_33 : f32 to vector<16x128xf32>
    %96 = arith.maximumf %94, %95 : vector<16x128xf32>
    %97 = vector.broadcast %cst_33 : f32 to vector<16x128xf32>
    %98 = arith.subf %94, %97 : vector<16x128xf32>
    %99 = arith.cmpf one, %98, %98 : vector<16x128xf32>
    %100 = vector.broadcast %cst_33 : f32 to vector<16x128xf32>
    %101 = arith.addf %94, %100 : vector<16x128xf32>
    %102 = math.absf %98 : vector<16x128xf32>
    %cst_34 = arith.constant 0.000000e+00 : f32
    %103 = vector.broadcast %cst_34 : f32 to vector<16x128xf32>
    %104 = arith.subf %103, %102 : vector<16x128xf32>
    %105 = math.exp %104 : vector<16x128xf32>
    %106 = math.log1p %105 : vector<16x128xf32>
    %107 = arith.addf %96, %106 : vector<16x128xf32>
    %108 = arith.select %99, %101, %107 : vector<16x128xi1>, vector<16x128xf32>
    %c0_35 = arith.constant 0 : index
    %c0_36 = arith.constant 0 : index
    %109 = vector.load %arg19[%c0_35, %c0_36] : memref<16x128xf32, #tpu.memory_space<vmem>>, vector<16x128xf32>
    tpu.vector_store %arg19[%c0_35, %c0_36], %108 {strides = array<i32>} : memref<16x128xf32, #tpu.memory_space<vmem>>, vector<16x128xf32>,
    %c0_37 = arith.constant 0 : index
    %c0_38 = arith.constant 0 : index
    %110 = vector.load %arg11[%c0_37, %c0_38] : memref<16x128xf32, #tpu.memory_space<vmem>>, vector<16x128xf32>
    %c0_39 = arith.constant 0 : index
    %c0_40 = arith.constant 0 : index
    %111 = vector.load %arg12[%c0_39, %c0_40] : memref<1x128xf32, #tpu.memory_space<vmem>>, vector<1x128xf32>
    %cst_41 = arith.constant 0.000000e+00 : f32
    %112 = vector.broadcast %cst_41 : f32 to vector<16x128xf32>
    %c0_i32 = arith.constant 0 : i32
    %c8_i32 = arith.constant 8 : i32
    %113 = arith.muli %c0_i32, %c8_i32 : i32
    %c0_i32_42 = arith.constant 0 : i32
    %114 = arith.addi %c0_i32_42, %113 : i32
    %115 = tpu.assume_multiple %114, 8 : i32
    %c8_i32_43 = arith.constant 8 : i32
    %116 = arith.muli %c0_i32, %c8_i32_43 : i32
    %c0_i32_44 = arith.constant 0 : i32
    %117 = arith.subi %c0_i32_44, %116 : i32
    %118 = tpu.assume_multiple %117, 8 : i32
    %119 = arith.index_cast %115 : i32 to index
    %c0_45 = arith.constant 0 : index
    %120 = vector.load %arg19[%119, %c0_45] : memref<16x128xf32, #tpu.memory_space<vmem>>, vector<8x128xf32>
    %121 = arith.index_cast %118 : i32 to index
    %c0_46 = arith.constant 0 : index
    %122 = vector.load %arg19[%121, %c0_46] : memref<16x128xf32, #tpu.memory_space<vmem>>, vector<8x128xf32>
    %123 = arith.index_cast %115 : i32 to index
    %c0_47 = arith.constant 0 : index
    %124 = vector.load %arg18[%123, %c0_47] : memref<16x128xf32, #tpu.memory_space<vmem>>, vector<8x128xf32>
    %125 = arith.index_cast %118 : i32 to index
    %c0_48 = arith.constant 0 : index
    %126 = vector.load %arg18[%125, %c0_48] : memref<16x128xf32, #tpu.memory_space<vmem>>, vector<8x128xf32>
    %127 = arith.index_cast %115 : i32 to index
    %c0_49 = arith.constant 0 : index
    %128 = vector.load %arg20[%127, %c0_49] : memref<16x64xf32, #tpu.memory_space<vmem>>, vector<8x64xf32>
    %129 = arith.index_cast %118 : i32 to index
    %c0_50 = arith.constant 0 : index
    %130 = vector.load %arg20[%129, %c0_50] : memref<16x64xf32, #tpu.memory_space<vmem>>, vector<8x64xf32>
    %131 = vector.extract_strided_slice %120 {offsets = [0, 0], sizes = [1, 64], strides = [1, 1]} : vector<8x128xf32> to vector<1x64xf32>
    %132 = vector.extract_strided_slice %122 {offsets = [7, 64], sizes = [1, 64], strides = [1, 1]} : vector<8x128xf32> to vector<1x64xf32>
    %133 = tpu.concatenate %131, %132 in 1 : vector<1x64xf32>, vector<1x64xf32> -> vector<1x128xf32>
    %134 = vector.extract_strided_slice %120 {offsets = [1, 0], sizes = [1, 64], strides = [1, 1]} : vector<8x128xf32> to vector<1x64xf32>
    %135 = vector.extract_strided_slice %122 {offsets = [6, 64], sizes = [1, 64], strides = [1, 1]} : vector<8x128xf32> to vector<1x64xf32>
    %136 = tpu.concatenate %134, %135 in 1 : vector<1x64xf32>, vector<1x64xf32> -> vector<1x128xf32>
    %137 = vector.extract_strided_slice %120 {offsets = [2, 0], sizes = [1, 64], strides = [1, 1]} : vector<8x128xf32> to vector<1x64xf32>
    %138 = vector.extract_strided_slice %122 {offsets = [5, 64], sizes = [1, 64], strides = [1, 1]} : vector<8x128xf32> to vector<1x64xf32>
    %139 = tpu.concatenate %137, %138 in 1 : vector<1x64xf32>, vector<1x64xf32> -> vector<1x128xf32>
    %140 = vector.extract_strided_slice %120 {offsets = [3, 0], sizes = [1, 64], strides = [1, 1]} : vector<8x128xf32> to vector<1x64xf32>
    %141 = vector.extract_strided_slice %122 {offsets = [4, 64], sizes = [1, 64], strides = [1, 1]} : vector<8x128xf32> to vector<1x64xf32>
    %142 = tpu.concatenate %140, %141 in 1 : vector<1x64xf32>, vector<1x64xf32> -> vector<1x128xf32>
    %143 = vector.extract_strided_slice %120 {offsets = [4, 0], sizes = [1, 64], strides = [1, 1]} : vector<8x128xf32> to vector<1x64xf32>
    %144 = vector.extract_strided_slice %122 {offsets = [3, 64], sizes = [1, 64], strides = [1, 1]} : vector<8x128xf32> to vector<1x64xf32>
    %145 = tpu.concatenate %143, %144 in 1 : vector<1x64xf32>, vector<1x64xf32> -> vector<1x128xf32>
    %146 = vector.extract_strided_slice %120 {offsets = [5, 0], sizes = [1, 64], strides = [1, 1]} : vector<8x128xf32> to vector<1x64xf32>
    %147 = vector.extract_strided_slice %122 {offsets = [2, 64], sizes = [1, 64], strides = [1, 1]} : vector<8x128xf32> to vector<1x64xf32>
    %148 = tpu.concatenate %146, %147 in 1 : vector<1x64xf32>, vector<1x64xf32> -> vector<1x128xf32>
    %149 = vector.extract_strided_slice %120 {offsets = [6, 0], sizes = [1, 64], strides = [1, 1]} : vector<8x128xf32> to vector<1x64xf32>
    %150 = vector.extract_strided_slice %122 {offsets = [1, 64], sizes = [1, 64], strides = [1, 1]} : vector<8x128xf32> to vector<1x64xf32>
    %151 = tpu.concatenate %149, %150 in 1 : vector<1x64xf32>, vector<1x64xf32> -> vector<1x128xf32>
    %152 = vector.extract_strided_slice %120 {offsets = [7, 0], sizes = [1, 64], strides = [1, 1]} : vector<8x128xf32> to vector<1x64xf32>
    %153 = vector.extract_strided_slice %122 {offsets = [0, 64], sizes = [1, 64], strides = [1, 1]} : vector<8x128xf32> to vector<1x64xf32>
    %154 = tpu.concatenate %152, %153 in 1 : vector<1x64xf32>, vector<1x64xf32> -> vector<1x128xf32>
    %155 = tpu.concatenate %133, %136, %139, %142, %145, %148, %151, %154 in 0 : vector<1x128xf32>, vector<1x128xf32>, vector<1x128xf32>, vector<1x128xf32>, vector<1x128xf32>, vector<1x128xf32>, vector<1x128xf32>, vector<1x128xf32> -> vector<8x128xf32>
    %156 = vector.extract_strided_slice %124 {offsets = [0, 0], sizes = [1, 64], strides = [1, 1]} : vector<8x128xf32> to vector<1x64xf32>
    %157 = vector.extract_strided_slice %126 {offsets = [7, 64], sizes = [1, 64], strides = [1, 1]} : vector<8x128xf32> to vector<1x64xf32>
    %158 = tpu.concatenate %156, %157 in 1 : vector<1x64xf32>, vector<1x64xf32> -> vector<1x128xf32>
    %159 = vector.extract_strided_slice %124 {offsets = [1, 0], sizes = [1, 64], strides = [1, 1]} : vector<8x128xf32> to vector<1x64xf32>
    %160 = vector.extract_strided_slice %126 {offsets = [6, 64], sizes = [1, 64], strides = [1, 1]} : vector<8x128xf32> to vector<1x64xf32>
    %161 = tpu.concatenate %159, %160 in 1 : vector<1x64xf32>, vector<1x64xf32> -> vector<1x128xf32>
    %162 = vector.extract_strided_slice %124 {offsets = [2, 0], sizes = [1, 64], strides = [1, 1]} : vector<8x128xf32> to vector<1x64xf32>
    %163 = vector.extract_strided_slice %126 {offsets = [5, 64], sizes = [1, 64], strides = [1, 1]} : vector<8x128xf32> to vector<1x64xf32>
    %164 = tpu.concatenate %162, %163 in 1 : vector<1x64xf32>, vector<1x64xf32> -> vector<1x128xf32>
    %165 = vector.extract_strided_slice %124 {offsets = [3, 0], sizes = [1, 64], strides = [1, 1]} : vector<8x128xf32> to vector<1x64xf32>
    %166 = vector.extract_strided_slice %126 {offsets = [4, 64], sizes = [1, 64], strides = [1, 1]} : vector<8x128xf32> to vector<1x64xf32>
    %167 = tpu.concatenate %165, %166 in 1 : vector<1x64xf32>, vector<1x64xf32> -> vector<1x128xf32>
    %168 = vector.extract_strided_slice %124 {offsets = [4, 0], sizes = [1, 64], strides = [1, 1]} : vector<8x128xf32> to vector<1x64xf32>
    %169 = vector.extract_strided_slice %126 {offsets = [3, 64], sizes = [1, 64], strides = [1, 1]} : vector<8x128xf32> to vector<1x64xf32>
    %170 = tpu.concatenate %168, %169 in 1 : vector<1x64xf32>, vector<1x64xf32> -> vector<1x128xf32>
    %171 = vector.extract_strided_slice %124 {offsets = [5, 0], sizes = [1, 64], strides = [1, 1]} : vector<8x128xf32> to vector<1x64xf32>
    %172 = vector.extract_strided_slice %126 {offsets = [2, 64], sizes = [1, 64], strides = [1, 1]} : vector<8x128xf32> to vector<1x64xf32>
    %173 = tpu.concatenate %171, %172 in 1 : vector<1x64xf32>, vector<1x64xf32> -> vector<1x128xf32>
    %174 = vector.extract_strided_slice %124 {offsets = [6, 0], sizes = [1, 64], strides = [1, 1]} : vector<8x128xf32> to vector<1x64xf32>
    %175 = vector.extract_strided_slice %126 {offsets = [1, 64], sizes = [1, 64], strides = [1, 1]} : vector<8x128xf32> to vector<1x64xf32>
    %176 = tpu.concatenate %174, %175 in 1 : vector<1x64xf32>, vector<1x64xf32> -> vector<1x128xf32>
    %177 = vector.extract_strided_slice %124 {offsets = [7, 0], sizes = [1, 64], strides = [1, 1]} : vector<8x128xf32> to vector<1x64xf32>
    %178 = vector.extract_strided_slice %126 {offsets = [0, 64], sizes = [1, 64], strides = [1, 1]} : vector<8x128xf32> to vector<1x64xf32>
    %179 = tpu.concatenate %177, %178 in 1 : vector<1x64xf32>, vector<1x64xf32> -> vector<1x128xf32>
    %180 = tpu.concatenate %158, %161, %164, %167, %170, %173, %176, %179 in 0 : vector<1x128xf32>, vector<1x128xf32>, vector<1x128xf32>, vector<1x128xf32>, vector<1x128xf32>, vector<1x128xf32>, vector<1x128xf32>, vector<1x128xf32> -> vector<8x128xf32>
    %181 = arith.mulf %155, %180 : vector<8x128xf32>
    %182 = vector.shape_cast %155 : vector<8x128xf32> to vector<8x1x128xf32>
    %183 = vector.shape_cast %110 : vector<16x128xf32> to vector<1x16x128xf32>
    %184 = vector.broadcast %182 : vector<8x1x128xf32> to vector<8x16x128xf32>
    %185 = vector.broadcast %183 : vector<1x16x128xf32> to vector<8x16x128xf32>
    %186 = arith.mulf %184, %185 : vector<8x16x128xf32>
    %187 = math.exp %186 : vector<8x16x128xf32>
    %188 = vector.extract_strided_slice %128 {offsets = [0, 0], sizes = [8, 16], strides = [1, 1]} : vector<8x64xf32> to vector<8x16xf32>
    %189 = tpu.transpose %188, [1, 0] : vector<8x16xf32> -> vector<16x8xf32>
    %190 = vector.extract_strided_slice %130 {offsets = [0, 16], sizes = [8, 16], strides = [1, 1]} : vector<8x64xf32> to vector<8x16xf32>
    %191 = tpu.transpose %190, [1, 0] : vector<8x16xf32> -> vector<16x8xf32>
    %192 = vector.extract_strided_slice %128 {offsets = [0, 32], sizes = [8, 16], strides = [1, 1]} : vector<8x64xf32> to vector<8x16xf32>
    %193 = tpu.transpose %192, [1, 0] : vector<8x16xf32> -> vector<16x8xf32>
    %194 = vector.extract_strided_slice %130 {offsets = [0, 48], sizes = [8, 16], strides = [1, 1]} : vector<8x64xf32> to vector<8x16xf32>
    %195 = tpu.transpose %194, [1, 0] : vector<8x16xf32> -> vector<16x8xf32>
    %196 = vector.extract_strided_slice %189 {offsets = [0, 0], sizes = [16, 1], strides = [1, 1]} : vector<16x8xf32> to vector<16x1xf32>
    %197 = vector.shape_cast %196 : vector<16x1xf32> to vector<16x1xf32>
    %198 = vector.broadcast %197 : vector<16x1xf32> to vector<16x64xf32>
    %199 = vector.extract_strided_slice %191 {offsets = [0, 7], sizes = [16, 1], strides = [1, 1]} : vector<16x8xf32> to vector<16x1xf32>
    %200 = vector.shape_cast %199 : vector<16x1xf32> to vector<16x1xf32>
    %201 = vector.broadcast %200 : vector<16x1xf32> to vector<16x64xf32>
    %202 = tpu.concatenate %198, %201 in 1 : vector<16x64xf32>, vector<16x64xf32> -> vector<16x128xf32>
    %203 = vector.extract_strided_slice %181 {offsets = [0, 0], sizes = [1, 128], strides = [1, 1]} : vector<8x128xf32> to vector<1x128xf32>
    %204 = vector.broadcast %203 : vector<1x128xf32> to vector<16x128xf32>
    %205 = arith.mulf %202, %204 : vector<16x128xf32>
    %206 = vector.extract_strided_slice %189 {offsets = [0, 1], sizes = [16, 1], strides = [1, 1]} : vector<16x8xf32> to vector<16x1xf32>
    %207 = vector.shape_cast %206 : vector<16x1xf32> to vector<16x1xf32>
    %208 = vector.broadcast %207 : vector<16x1xf32> to vector<16x64xf32>
    %209 = vector.extract_strided_slice %191 {offsets = [0, 6], sizes = [16, 1], strides = [1, 1]} : vector<16x8xf32> to vector<16x1xf32>
    %210 = vector.shape_cast %209 : vector<16x1xf32> to vector<16x1xf32>
    %211 = vector.broadcast %210 : vector<16x1xf32> to vector<16x64xf32>
    %212 = tpu.concatenate %208, %211 in 1 : vector<16x64xf32>, vector<16x64xf32> -> vector<16x128xf32>
    %213 = vector.extract_strided_slice %181 {offsets = [1, 0], sizes = [1, 128], strides = [1, 1]} : vector<8x128xf32> to vector<1x128xf32>
    %214 = vector.broadcast %213 : vector<1x128xf32> to vector<16x128xf32>
    %215 = arith.mulf %212, %214 : vector<16x128xf32>
    %216 = vector.extract_strided_slice %189 {offsets = [0, 2], sizes = [16, 1], strides = [1, 1]} : vector<16x8xf32> to vector<16x1xf32>
    %217 = vector.shape_cast %216 : vector<16x1xf32> to vector<16x1xf32>
    %218 = vector.broadcast %217 : vector<16x1xf32> to vector<16x64xf32>
    %219 = vector.extract_strided_slice %191 {offsets = [0, 5], sizes = [16, 1], strides = [1, 1]} : vector<16x8xf32> to vector<16x1xf32>
    %220 = vector.shape_cast %219 : vector<16x1xf32> to vector<16x1xf32>
    %221 = vector.broadcast %220 : vector<16x1xf32> to vector<16x64xf32>
    %222 = tpu.concatenate %218, %221 in 1 : vector<16x64xf32>, vector<16x64xf32> -> vector<16x128xf32>
    %223 = vector.extract_strided_slice %181 {offsets = [2, 0], sizes = [1, 128], strides = [1, 1]} : vector<8x128xf32> to vector<1x128xf32>
    %224 = vector.broadcast %223 : vector<1x128xf32> to vector<16x128xf32>
    %225 = arith.mulf %222, %224 : vector<16x128xf32>
    %226 = vector.extract_strided_slice %189 {offsets = [0, 3], sizes = [16, 1], strides = [1, 1]} : vector<16x8xf32> to vector<16x1xf32>
    %227 = vector.shape_cast %226 : vector<16x1xf32> to vector<16x1xf32>
    %228 = vector.broadcast %227 : vector<16x1xf32> to vector<16x64xf32>
    %229 = vector.extract_strided_slice %191 {offsets = [0, 4], sizes = [16, 1], strides = [1, 1]} : vector<16x8xf32> to vector<16x1xf32>
    %230 = vector.shape_cast %229 : vector<16x1xf32> to vector<16x1xf32>
    %231 = vector.broadcast %230 : vector<16x1xf32> to vector<16x64xf32>
    %232 = tpu.concatenate %228, %231 in 1 : vector<16x64xf32>, vector<16x64xf32> -> vector<16x128xf32>
    %233 = vector.extract_strided_slice %181 {offsets = [3, 0], sizes = [1, 128], strides = [1, 1]} : vector<8x128xf32> to vector<1x128xf32>
    %234 = vector.broadcast %233 : vector<1x128xf32> to vector<16x128xf32>
    %235 = arith.mulf %232, %234 : vector<16x128xf32>
    %236 = vector.extract_strided_slice %189 {offsets = [0, 4], sizes = [16, 1], strides = [1, 1]} : vector<16x8xf32> to vector<16x1xf32>
    %237 = vector.shape_cast %236 : vector<16x1xf32> to vector<16x1xf32>
    %238 = vector.broadcast %237 : vector<16x1xf32> to vector<16x64xf32>
    %239 = vector.extract_strided_slice %191 {offsets = [0, 3], sizes = [16, 1], strides = [1, 1]} : vector<16x8xf32> to vector<16x1xf32>
    %240 = vector.shape_cast %239 : vector<16x1xf32> to vector<16x1xf32>
    %241 = vector.broadcast %240 : vector<16x1xf32> to vector<16x64xf32>
    %242 = tpu.concatenate %238, %241 in 1 : vector<16x64xf32>, vector<16x64xf32> -> vector<16x128xf32>
    %243 = vector.extract_strided_slice %181 {offsets = [4, 0], sizes = [1, 128], strides = [1, 1]} : vector<8x128xf32> to vector<1x128xf32>
    %244 = vector.broadcast %243 : vector<1x128xf32> to vector<16x128xf32>
    %245 = arith.mulf %242, %244 : vector<16x128xf32>
    %246 = vector.extract_strided_slice %189 {offsets = [0, 5], sizes = [16, 1], strides = [1, 1]} : vector<16x8xf32> to vector<16x1xf32>
    %247 = vector.shape_cast %246 : vector<16x1xf32> to vector<16x1xf32>
    %248 = vector.broadcast %247 : vector<16x1xf32> to vector<16x64xf32>
    %249 = vector.extract_strided_slice %191 {offsets = [0, 2], sizes = [16, 1], strides = [1, 1]} : vector<16x8xf32> to vector<16x1xf32>
    %250 = vector.shape_cast %249 : vector<16x1xf32> to vector<16x1xf32>
    %251 = vector.broadcast %250 : vector<16x1xf32> to vector<16x64xf32>
    %252 = tpu.concatenate %248, %251 in 1 : vector<16x64xf32>, vector<16x64xf32> -> vector<16x128xf32>
    %253 = vector.extract_strided_slice %181 {offsets = [5, 0], sizes = [1, 128], strides = [1, 1]} : vector<8x128xf32> to vector<1x128xf32>
    %254 = vector.broadcast %253 : vector<1x128xf32> to vector<16x128xf32>
    %255 = arith.mulf %252, %254 : vector<16x128xf32>
    %256 = vector.extract_strided_slice %189 {offsets = [0, 6], sizes = [16, 1], strides = [1, 1]} : vector<16x8xf32> to vector<16x1xf32>
    %257 = vector.shape_cast %256 : vector<16x1xf32> to vector<16x1xf32>
    %258 = vector.broadcast %257 : vector<16x1xf32> to vector<16x64xf32>
    %259 = vector.extract_strided_slice %191 {offsets = [0, 1], sizes = [16, 1], strides = [1, 1]} : vector<16x8xf32> to vector<16x1xf32>
    %260 = vector.shape_cast %259 : vector<16x1xf32> to vector<16x1xf32>
    %261 = vector.broadcast %260 : vector<16x1xf32> to vector<16x64xf32>
    %262 = tpu.concatenate %258, %261 in 1 : vector<16x64xf32>, vector<16x64xf32> -> vector<16x128xf32>
    %263 = vector.extract_strided_slice %181 {offsets = [6, 0], sizes = [1, 128], strides = [1, 1]} : vector<8x128xf32> to vector<1x128xf32>
    %264 = vector.broadcast %263 : vector<1x128xf32> to vector<16x128xf32>
    %265 = arith.mulf %262, %264 : vector<16x128xf32>
    %266 = vector.extract_strided_slice %189 {offsets = [0, 7], sizes = [16, 1], strides = [1, 1]} : vector<16x8xf32> to vector<16x1xf32>
    %267 = vector.shape_cast %266 : vector<16x1xf32> to vector<16x1xf32>
    %268 = vector.broadcast %267 : vector<16x1xf32> to vector<16x64xf32>
    %269 = vector.extract_strided_slice %191 {offsets = [0, 0], sizes = [16, 1], strides = [1, 1]} : vector<16x8xf32> to vector<16x1xf32>
    %270 = vector.shape_cast %269 : vector<16x1xf32> to vector<16x1xf32>
    %271 = vector.broadcast %270 : vector<16x1xf32> to vector<16x64xf32>
    %272 = tpu.concatenate %268, %271 in 1 : vector<16x64xf32>, vector<16x64xf32> -> vector<16x128xf32>
    %273 = vector.extract_strided_slice %181 {offsets = [7, 0], sizes = [1, 128], strides = [1, 1]} : vector<8x128xf32> to vector<1x128xf32>
    %274 = vector.broadcast %273 : vector<1x128xf32> to vector<16x128xf32>
    %275 = arith.mulf %272, %274 : vector<16x128xf32>
    %276 = vector.extract_strided_slice %187 {offsets = [0, 0, 0], sizes = [1, 16, 128], strides = [1, 1, 1]} : vector<8x16x128xf32> to vector<1x16x128xf32>
    %277 = vector.shape_cast %276 : vector<1x16x128xf32> to vector<16x128xf32>
    %278 = arith.mulf %277, %112 : vector<16x128xf32>
    %279 = arith.addf %278, %205 : vector<16x128xf32>
    %280 = vector.extract_strided_slice %187 {offsets = [1, 0, 0], sizes = [1, 16, 128], strides = [1, 1, 1]} : vector<8x16x128xf32> to vector<1x16x128xf32>
    %281 = vector.shape_cast %280 : vector<1x16x128xf32> to vector<16x128xf32>
    %282 = arith.mulf %281, %279 : vector<16x128xf32>
    %283 = arith.addf %282, %215 : vector<16x128xf32>
    %284 = vector.extract_strided_slice %187 {offsets = [2, 0, 0], sizes = [1, 16, 128], strides = [1, 1, 1]} : vector<8x16x128xf32> to vector<1x16x128xf32>
    %285 = vector.shape_cast %284 : vector<1x16x128xf32> to vector<16x128xf32>
    %286 = arith.mulf %285, %283 : vector<16x128xf32>
    %287 = arith.addf %286, %225 : vector<16x128xf32>
    %288 = vector.extract_strided_slice %187 {offsets = [3, 0, 0], sizes = [1, 16, 128], strides = [1, 1, 1]} : vector<8x16x128xf32> to vector<1x16x128xf32>
    %289 = vector.shape_cast %288 : vector<1x16x128xf32> to vector<16x128xf32>
    %290 = arith.mulf %289, %287 : vector<16x128xf32>
    %291 = arith.addf %290, %235 : vector<16x128xf32>
    %292 = vector.extract_strided_slice %187 {offsets = [4, 0, 0], sizes = [1, 16, 128], strides = [1, 1, 1]} : vector<8x16x128xf32> to vector<1x16x128xf32>
    %293 = vector.shape_cast %292 : vector<1x16x128xf32> to vector<16x128xf32>
    %294 = arith.mulf %293, %291 : vector<16x128xf32>
    %295 = arith.addf %294, %245 : vector<16x128xf32>
    %296 = vector.extract_strided_slice %187 {offsets = [5, 0, 0], sizes = [1, 16, 128], strides = [1, 1, 1]} : vector<8x16x128xf32> to vector<1x16x128xf32>
    %297 = vector.shape_cast %296 : vector<1x16x128xf32> to vector<16x128xf32>
    %298 = arith.mulf %297, %295 : vector<16x128xf32>
    %299 = arith.addf %298, %255 : vector<16x128xf32>
    %300 = vector.extract_strided_slice %187 {offsets = [6, 0, 0], sizes = [1, 16, 128], strides = [1, 1, 1]} : vector<8x16x128xf32> to vector<1x16x128xf32>
    %301 = vector.shape_cast %300 : vector<1x16x128xf32> to vector<16x128xf32>
    %302 = arith.mulf %301, %299 : vector<16x128xf32>
    %303 = arith.addf %302, %265 : vector<16x128xf32>
    %304 = vector.extract_strided_slice %187 {offsets = [7, 0, 0], sizes = [1, 16, 128], strides = [1, 1, 1]} : vector<8x16x128xf32> to vector<1x16x128xf32>
    %305 = vector.shape_cast %304 : vector<1x16x128xf32> to vector<16x128xf32>
    %306 = arith.mulf %305, %303 : vector<16x128xf32>
    %307 = arith.addf %306, %275 : vector<16x128xf32>
    %308 = vector.extract_strided_slice %193 {offsets = [0, 0], sizes = [16, 1], strides = [1, 1]} : vector<16x8xf32> to vector<16x1xf32>
    %309 = vector.shape_cast %308 : vector<16x1xf32> to vector<16x1xf32>
    %310 = vector.broadcast %309 : vector<16x1xf32> to vector<16x64xf32>
    %311 = vector.extract_strided_slice %195 {offsets = [0, 7], sizes = [16, 1], strides = [1, 1]} : vector<16x8xf32> to vector<16x1xf32>
    %312 = vector.shape_cast %311 : vector<16x1xf32> to vector<16x1xf32>
    %313 = vector.broadcast %312 : vector<16x1xf32> to vector<16x64xf32>
    %314 = tpu.concatenate %310, %313 in 1 : vector<16x64xf32>, vector<16x64xf32> -> vector<16x128xf32>
    %315 = arith.mulf %279, %314 : vector<16x128xf32>
    %cst_51 = arith.constant dense<0.000000e+00> : vector<128xf32>
    %316 = vector.multi_reduction <add>, %315, %cst_51 [0] : vector<16x128xf32> to vector<128xf32>
    %317 = vector.shape_cast %316 : vector<128xf32> to vector<1x128xf32>
    %318 = vector.extract_strided_slice %193 {offsets = [0, 1], sizes = [16, 1], strides = [1, 1]} : vector<16x8xf32> to vector<16x1xf32>
    %319 = vector.shape_cast %318 : vector<16x1xf32> to vector<16x1xf32>
    %320 = vector.broadcast %319 : vector<16x1xf32> to vector<16x64xf32>
    %321 = vector.extract_strided_slice %195 {offsets = [0, 6], sizes = [16, 1], strides = [1, 1]} : vector<16x8xf32> to vector<16x1xf32>
    %322 = vector.shape_cast %321 : vector<16x1xf32> to vector<16x1xf32>
    %323 = vector.broadcast %322 : vector<16x1xf32> to vector<16x64xf32>
    %324 = tpu.concatenate %320, %323 in 1 : vector<16x64xf32>, vector<16x64xf32> -> vector<16x128xf32>
    %325 = arith.mulf %283, %324 : vector<16x128xf32>
    %cst_52 = arith.constant dense<0.000000e+00> : vector<128xf32>
    %326 = vector.multi_reduction <add>, %325, %cst_52 [0] : vector<16x128xf32> to vector<128xf32>
    %327 = vector.shape_cast %326 : vector<128xf32> to vector<1x128xf32>
    %328 = vector.extract_strided_slice %193 {offsets = [0, 2], sizes = [16, 1], strides = [1, 1]} : vector<16x8xf32> to vector<16x1xf32>
    %329 = vector.shape_cast %328 : vector<16x1xf32> to vector<16x1xf32>
    %330 = vector.broadcast %329 : vector<16x1xf32> to vector<16x64xf32>
    %331 = vector.extract_strided_slice %195 {offsets = [0, 5], sizes = [16, 1], strides = [1, 1]} : vector<16x8xf32> to vector<16x1xf32>
    %332 = vector.shape_cast %331 : vector<16x1xf32> to vector<16x1xf32>
    %333 = vector.broadcast %332 : vector<16x1xf32> to vector<16x64xf32>
    %334 = tpu.concatenate %330, %333 in 1 : vector<16x64xf32>, vector<16x64xf32> -> vector<16x128xf32>
    %335 = arith.mulf %287, %334 : vector<16x128xf32>
    %cst_53 = arith.constant dense<0.000000e+00> : vector<128xf32>
    %336 = vector.multi_reduction <add>, %335, %cst_53 [0] : vector<16x128xf32> to vector<128xf32>
    %337 = vector.shape_cast %336 : vector<128xf32> to vector<1x128xf32>
    %338 = vector.extract_strided_slice %193 {offsets = [0, 3], sizes = [16, 1], strides = [1, 1]} : vector<16x8xf32> to vector<16x1xf32>
    %339 = vector.shape_cast %338 : vector<16x1xf32> to vector<16x1xf32>
    %340 = vector.broadcast %339 : vector<16x1xf32> to vector<16x64xf32>
    %341 = vector.extract_strided_slice %195 {offsets = [0, 4], sizes = [16, 1], strides = [1, 1]} : vector<16x8xf32> to vector<16x1xf32>
    %342 = vector.shape_cast %341 : vector<16x1xf32> to vector<16x1xf32>
    %343 = vector.broadcast %342 : vector<16x1xf32> to vector<16x64xf32>
    %344 = tpu.concatenate %340, %343 in 1 : vector<16x64xf32>, vector<16x64xf32> -> vector<16x128xf32>
    %345 = arith.mulf %291, %344 : vector<16x128xf32>
    %cst_54 = arith.constant dense<0.000000e+00> : vector<128xf32>
    %346 = vector.multi_reduction <add>, %345, %cst_54 [0] : vector<16x128xf32> to vector<128xf32>
    %347 = vector.shape_cast %346 : vector<128xf32> to vector<1x128xf32>
    %348 = vector.extract_strided_slice %193 {offsets = [0, 4], sizes = [16, 1], strides = [1, 1]} : vector<16x8xf32> to vector<16x1xf32>
    %349 = vector.shape_cast %348 : vector<16x1xf32> to vector<16x1xf32>
    %350 = vector.broadcast %349 : vector<16x1xf32> to vector<16x64xf32>
    %351 = vector.extract_strided_slice %195 {offsets = [0, 3], sizes = [16, 1], strides = [1, 1]} : vector<16x8xf32> to vector<16x1xf32>
    %352 = vector.shape_cast %351 : vector<16x1xf32> to vector<16x1xf32>
    %353 = vector.broadcast %352 : vector<16x1xf32> to vector<16x64xf32>
    %354 = tpu.concatenate %350, %353 in 1 : vector<16x64xf32>, vector<16x64xf32> -> vector<16x128xf32>
    %355 = arith.mulf %295, %354 : vector<16x128xf32>
    %cst_55 = arith.constant dense<0.000000e+00> : vector<128xf32>
    %356 = vector.multi_reduction <add>, %355, %cst_55 [0] : vector<16x128xf32> to vector<128xf32>
    %357 = vector.shape_cast %356 : vector<128xf32> to vector<1x128xf32>
    %358 = vector.extract_strided_slice %193 {offsets = [0, 5], sizes = [16, 1], strides = [1, 1]} : vector<16x8xf32> to vector<16x1xf32>
    %359 = vector.shape_cast %358 : vector<16x1xf32> to vector<16x1xf32>
    %360 = vector.broadcast %359 : vector<16x1xf32> to vector<16x64xf32>
    %361 = vector.extract_strided_slice %195 {offsets = [0, 2], sizes = [16, 1], strides = [1, 1]} : vector<16x8xf32> to vector<16x1xf32>
    %362 = vector.shape_cast %361 : vector<16x1xf32> to vector<16x1xf32>
    %363 = vector.broadcast %362 : vector<16x1xf32> to vector<16x64xf32>
    %364 = tpu.concatenate %360, %363 in 1 : vector<16x64xf32>, vector<16x64xf32> -> vector<16x128xf32>
    %365 = arith.mulf %299, %364 : vector<16x128xf32>
    %cst_56 = arith.constant dense<0.000000e+00> : vector<128xf32>
    %366 = vector.multi_reduction <add>, %365, %cst_56 [0] : vector<16x128xf32> to vector<128xf32>
    %367 = vector.shape_cast %366 : vector<128xf32> to vector<1x128xf32>
    %368 = vector.extract_strided_slice %193 {offsets = [0, 6], sizes = [16, 1], strides = [1, 1]} : vector<16x8xf32> to vector<16x1xf32>
    %369 = vector.shape_cast %368 : vector<16x1xf32> to vector<16x1xf32>
    %370 = vector.broadcast %369 : vector<16x1xf32> to vector<16x64xf32>
    %371 = vector.extract_strided_slice %195 {offsets = [0, 1], sizes = [16, 1], strides = [1, 1]} : vector<16x8xf32> to vector<16x1xf32>
    %372 = vector.shape_cast %371 : vector<16x1xf32> to vector<16x1xf32>
    %373 = vector.broadcast %372 : vector<16x1xf32> to vector<16x64xf32>
    %374 = tpu.concatenate %370, %373 in 1 : vector<16x64xf32>, vector<16x64xf32> -> vector<16x128xf32>
    %375 = arith.mulf %303, %374 : vector<16x128xf32>
    %cst_57 = arith.constant dense<0.000000e+00> : vector<128xf32>
    %376 = vector.multi_reduction <add>, %375, %cst_57 [0] : vector<16x128xf32> to vector<128xf32>
    %377 = vector.shape_cast %376 : vector<128xf32> to vector<1x128xf32>
    %378 = vector.extract_strided_slice %193 {offsets = [0, 7], sizes = [16, 1], strides = [1, 1]} : vector<16x8xf32> to vector<16x1xf32>
    %379 = vector.shape_cast %378 : vector<16x1xf32> to vector<16x1xf32>
    %380 = vector.broadcast %379 : vector<16x1xf32> to vector<16x64xf32>
    %381 = vector.extract_strided_slice %195 {offsets = [0, 0], sizes = [16, 1], strides = [1, 1]} : vector<16x8xf32> to vector<16x1xf32>
    %382 = vector.shape_cast %381 : vector<16x1xf32> to vector<16x1xf32>
    %383 = vector.broadcast %382 : vector<16x1xf32> to vector<16x64xf32>
    %384 = tpu.concatenate %380, %383 in 1 : vector<16x64xf32>, vector<16x64xf32> -> vector<16x128xf32>
    %385 = arith.mulf %307, %384 : vector<16x128xf32>
    %cst_58 = arith.constant dense<0.000000e+00> : vector<128xf32>
    %386 = vector.multi_reduction <add>, %385, %cst_58 [0] : vector<16x128xf32> to vector<128xf32>
    %387 = vector.shape_cast %386 : vector<128xf32> to vector<1x128xf32>
    %388 = tpu.concatenate %317, %327, %337, %347, %357, %367, %377, %387 in 0 : vector<1x128xf32>, vector<1x128xf32>, vector<1x128xf32>, vector<1x128xf32>, vector<1x128xf32>, vector<1x128xf32>, vector<1x128xf32>, vector<1x128xf32> -> vector<8x128xf32>
    %389 = vector.broadcast %111 : vector<1x128xf32> to vector<8x128xf32>
    %390 = arith.mulf %389, %180 : vector<8x128xf32>
    %391 = arith.addf %388, %390 : vector<8x128xf32>
    %392 = vector.extract_strided_slice %391 {offsets = [0, 0], sizes = [8, 64], strides = [1, 1]} : vector<8x128xf32> to vector<8x64xf32>
    %393 = arith.index_cast %115 : i32 to index
    %c0_59 = arith.constant 0 : index
    %394 = vector.load %arg22[%393, %c0_59] : memref<16x64xf32, #tpu.memory_space<vmem>>, vector<8x64xf32>
    tpu.vector_store %arg22[%393, %c0_59], %392 {strides = array<i32>} : memref<16x64xf32, #tpu.memory_space<vmem>>, vector<8x64xf32>,
    %395 = vector.extract_strided_slice %391 {offsets = [7, 64], sizes = [1, 64], strides = [1, 1]} : vector<8x128xf32> to vector<1x64xf32>
    %396 = vector.extract_strided_slice %391 {offsets = [6, 64], sizes = [1, 64], strides = [1, 1]} : vector<8x128xf32> to vector<1x64xf32>
    %397 = vector.extract_strided_slice %391 {offsets = [5, 64], sizes = [1, 64], strides = [1, 1]} : vector<8x128xf32> to vector<1x64xf32>
    %398 = vector.extract_strided_slice %391 {offsets = [4, 64], sizes = [1, 64], strides = [1, 1]} : vector<8x128xf32> to vector<1x64xf32>
    %399 = vector.extract_strided_slice %391 {offsets = [3, 64], sizes = [1, 64], strides = [1, 1]} : vector<8x128xf32> to vector<1x64xf32>
    %400 = vector.extract_strided_slice %391 {offsets = [2, 64], sizes = [1, 64], strides = [1, 1]} : vector<8x128xf32> to vector<1x64xf32>
    %401 = vector.extract_strided_slice %391 {offsets = [1, 64], sizes = [1, 64], strides = [1, 1]} : vector<8x128xf32> to vector<1x64xf32>
    %402 = vector.extract_strided_slice %391 {offsets = [0, 64], sizes = [1, 64], strides = [1, 1]} : vector<8x128xf32> to vector<1x64xf32>
    %403 = tpu.concatenate %395, %396, %397, %398, %399, %400, %401, %402 in 0 : vector<1x64xf32>, vector<1x64xf32>, vector<1x64xf32>, vector<1x64xf32>, vector<1x64xf32>, vector<1x64xf32>, vector<1x64xf32>, vector<1x64xf32> -> vector<8x64xf32>
    %404 = arith.index_cast %118 : i32 to index
    %c0_60 = arith.constant 0 : index
    %405 = vector.load %arg23[%404, %c0_60] : memref<16x64xf32, #tpu.memory_space<vmem>>, vector<8x64xf32>
    tpu.vector_store %arg23[%404, %c0_60], %403 {strides = array<i32>} : memref<16x64xf32, #tpu.memory_space<vmem>>, vector<8x64xf32>,
    %c1_i32 = arith.constant 1 : i32
    %cst_61 = arith.constant 0.000000e+00 : f32
    %406 = vector.broadcast %cst_61 : f32 to vector<16x128xf32>
    %c0_i32_62 = arith.constant 0 : i32
    %c8_i32_63 = arith.constant 8 : i32
    %407 = arith.muli %c0_i32_62, %c8_i32_63 : i32
    %c8_i32_64 = arith.constant 8 : i32
    %408 = arith.addi %c8_i32_64, %407 : i32
    %409 = tpu.assume_multiple %408, 8 : i32
    %c8_i32_65 = arith.constant 8 : i32
    %410 = arith.muli %c0_i32_62, %c8_i32_65 : i32
    %c8_i32_66 = arith.constant 8 : i32
    %411 = arith.subi %c8_i32_66, %410 : i32
    %412 = tpu.assume_multiple %411, 8 : i32
    %413 = arith.index_cast %409 : i32 to index
    %c0_67 = arith.constant 0 : index
    %414 = vector.load %arg19[%413, %c0_67] : memref<16x128xf32, #tpu.memory_space<vmem>>, vector<8x128xf32>
    %415 = arith.index_cast %412 : i32 to index
    %c0_68 = arith.constant 0 : index
    %416 = vector.load %arg19[%415, %c0_68] : memref<16x128xf32, #tpu.memory_space<vmem>>, vector<8x128xf32>
    %417 = arith.index_cast %409 : i32 to index
    %c0_69 = arith.constant 0 : index
    %418 = vector.load %arg18[%417, %c0_69] : memref<16x128xf32, #tpu.memory_space<vmem>>, vector<8x128xf32>
    %419 = arith.index_cast %412 : i32 to index
    %c0_70 = arith.constant 0 : index
    %420 = vector.load %arg18[%419, %c0_70] : memref<16x128xf32, #tpu.memory_space<vmem>>, vector<8x128xf32>
    %421 = arith.index_cast %409 : i32 to index
    %c0_71 = arith.constant 0 : index
    %422 = vector.load %arg20[%421, %c0_71] : memref<16x64xf32, #tpu.memory_space<vmem>>, vector<8x64xf32>
    %423 = arith.index_cast %412 : i32 to index
    %c0_72 = arith.constant 0 : index
    %424 = vector.load %arg20[%423, %c0_72] : memref<16x64xf32, #tpu.memory_space<vmem>>, vector<8x64xf32>
    %425 = vector.extract_strided_slice %414 {offsets = [0, 0], sizes = [1, 64], strides = [1, 1]} : vector<8x128xf32> to vector<1x64xf32>
    %426 = vector.extract_strided_slice %416 {offsets = [7, 64], sizes = [1, 64], strides = [1, 1]} : vector<8x128xf32> to vector<1x64xf32>
    %427 = tpu.concatenate %425, %426 in 1 : vector<1x64xf32>, vector<1x64xf32> -> vector<1x128xf32>
    %428 = vector.extract_strided_slice %414 {offsets = [1, 0], sizes = [1, 64], strides = [1, 1]} : vector<8x128xf32> to vector<1x64xf32>
    %429 = vector.extract_strided_slice %416 {offsets = [6, 64], sizes = [1, 64], strides = [1, 1]} : vector<8x128xf32> to vector<1x64xf32>
    %430 = tpu.concatenate %428, %429 in 1 : vector<1x64xf32>, vector<1x64xf32> -> vector<1x128xf32>
    %431 = vector.extract_strided_slice %414 {offsets = [2, 0], sizes = [1, 64], strides = [1, 1]} : vector<8x128xf32> to vector<1x64xf32>
    %432 = vector.extract_strided_slice %416 {offsets = [5, 64], sizes = [1, 64], strides = [1, 1]} : vector<8x128xf32> to vector<1x64xf32>
    %433 = tpu.concatenate %431, %432 in 1 : vector<1x64xf32>, vector<1x64xf32> -> vector<1x128xf32>
    %434 = vector.extract_strided_slice %414 {offsets = [3, 0], sizes = [1, 64], strides = [1, 1]} : vector<8x128xf32> to vector<1x64xf32>
    %435 = vector.extract_strided_slice %416 {offsets = [4, 64], sizes = [1, 64], strides = [1, 1]} : vector<8x128xf32> to vector<1x64xf32>
    %436 = tpu.concatenate %434, %435 in 1 : vector<1x64xf32>, vector<1x64xf32> -> vector<1x128xf32>
    %437 = vector.extract_strided_slice %414 {offsets = [4, 0], sizes = [1, 64], strides = [1, 1]} : vector<8x128xf32> to vector<1x64xf32>
    %438 = vector.extract_strided_slice %416 {offsets = [3, 64], sizes = [1, 64], strides = [1, 1]} : vector<8x128xf32> to vector<1x64xf32>
    %439 = tpu.concatenate %437, %438 in 1 : vector<1x64xf32>, vector<1x64xf32> -> vector<1x128xf32>
    %440 = vector.extract_strided_slice %414 {offsets = [5, 0], sizes = [1, 64], strides = [1, 1]} : vector<8x128xf32> to vector<1x64xf32>
    %441 = vector.extract_strided_slice %416 {offsets = [2, 64], sizes = [1, 64], strides = [1, 1]} : vector<8x128xf32> to vector<1x64xf32>
    %442 = tpu.concatenate %440, %441 in 1 : vector<1x64xf32>, vector<1x64xf32> -> vector<1x128xf32>
    %443 = vector.extract_strided_slice %414 {offsets = [6, 0], sizes = [1, 64], strides = [1, 1]} : vector<8x128xf32> to vector<1x64xf32>
    %444 = vector.extract_strided_slice %416 {offsets = [1, 64], sizes = [1, 64], strides = [1, 1]} : vector<8x128xf32> to vector<1x64xf32>
    %445 = tpu.concatenate %443, %444 in 1 : vector<1x64xf32>, vector<1x64xf32> -> vector<1x128xf32>
    %446 = vector.extract_strided_slice %414 {offsets = [7, 0], sizes = [1, 64], strides = [1, 1]} : vector<8x128xf32> to vector<1x64xf32>
    %447 = vector.extract_strided_slice %416 {offsets = [0, 64], sizes = [1, 64], strides = [1, 1]} : vector<8x128xf32> to vector<1x64xf32>
    %448 = tpu.concatenate %446, %447 in 1 : vector<1x64xf32>, vector<1x64xf32> -> vector<1x128xf32>
    %449 = tpu.concatenate %427, %430, %433, %436, %439, %442, %445, %448 in 0 : vector<1x128xf32>, vector<1x128xf32>, vector<1x128xf32>, vector<1x128xf32>, vector<1x128xf32>, vector<1x128xf32>, vector<1x128xf32>, vector<1x128xf32> -> vector<8x128xf32>
    %450 = vector.extract_strided_slice %418 {offsets = [0, 0], sizes = [1, 64], strides = [1, 1]} : vector<8x128xf32> to vector<1x64xf32>
    %451 = vector.extract_strided_slice %420 {offsets = [7, 64], sizes = [1, 64], strides = [1, 1]} : vector<8x128xf32> to vector<1x64xf32>
    %452 = tpu.concatenate %450, %451 in 1 : vector<1x64xf32>, vector<1x64xf32> -> vector<1x128xf32>
    %453 = vector.extract_strided_slice %418 {offsets = [1, 0], sizes = [1, 64], strides = [1, 1]} : vector<8x128xf32> to vector<1x64xf32>
    %454 = vector.extract_strided_slice %420 {offsets = [6, 64], sizes = [1, 64], strides = [1, 1]} : vector<8x128xf32> to vector<1x64xf32>
    %455 = tpu.concatenate %453, %454 in 1 : vector<1x64xf32>, vector<1x64xf32> -> vector<1x128xf32>
    %456 = vector.extract_strided_slice %418 {offsets = [2, 0], sizes = [1, 64], strides = [1, 1]} : vector<8x128xf32> to vector<1x64xf32>
    %457 = vector.extract_strided_slice %420 {offsets = [5, 64], sizes = [1, 64], strides = [1, 1]} : vector<8x128xf32> to vector<1x64xf32>
    %458 = tpu.concatenate %456, %457 in 1 : vector<1x64xf32>, vector<1x64xf32> -> vector<1x128xf32>
    %459 = vector.extract_strided_slice %418 {offsets = [3, 0], sizes = [1, 64], strides = [1, 1]} : vector<8x128xf32> to vector<1x64xf32>
    %460 = vector.extract_strided_slice %420 {offsets = [4, 64], sizes = [1, 64], strides = [1, 1]} : vector<8x128xf32> to vector<1x64xf32>
    %461 = tpu.concatenate %459, %460 in 1 : vector<1x64xf32>, vector<1x64xf32> -> vector<1x128xf32>
    %462 = vector.extract_strided_slice %418 {offsets = [4, 0], sizes = [1, 64], strides = [1, 1]} : vector<8x128xf32> to vector<1x64xf32>
    %463 = vector.extract_strided_slice %420 {offsets = [3, 64], sizes = [1, 64], strides = [1, 1]} : vector<8x128xf32> to vector<1x64xf32>
    %464 = tpu.concatenate %462, %463 in 1 : vector<1x64xf32>, vector<1x64xf32> -> vector<1x128xf32>
    %465 = vector.extract_strided_slice %418 {offsets = [5, 0], sizes = [1, 64], strides = [1, 1]} : vector<8x128xf32> to vector<1x64xf32>
    %466 = vector.extract_strided_slice %420 {offsets = [2, 64], sizes = [1, 64], strides = [1, 1]} : vector<8x128xf32> to vector<1x64xf32>
    %467 = tpu.concatenate %465, %466 in 1 : vector<1x64xf32>, vector<1x64xf32> -> vector<1x128xf32>
    %468 = vector.extract_strided_slice %418 {offsets = [6, 0], sizes = [1, 64], strides = [1, 1]} : vector<8x128xf32> to vector<1x64xf32>
    %469 = vector.extract_strided_slice %420 {offsets = [1, 64], sizes = [1, 64], strides = [1, 1]} : vector<8x128xf32> to vector<1x64xf32>
    %470 = tpu.concatenate %468, %469 in 1 : vector<1x64xf32>, vector<1x64xf32> -> vector<1x128xf32>
    %471 = vector.extract_strided_slice %418 {offsets = [7, 0], sizes = [1, 64], strides = [1, 1]} : vector<8x128xf32> to vector<1x64xf32>
    %472 = vector.extract_strided_slice %420 {offsets = [0, 64], sizes = [1, 64], strides = [1, 1]} : vector<8x128xf32> to vector<1x64xf32>
    %473 = tpu.concatenate %471, %472 in 1 : vector<1x64xf32>, vector<1x64xf32> -> vector<1x128xf32>
    %474 = tpu.concatenate %452, %455, %458, %461, %464, %467, %470, %473 in 0 : vector<1x128xf32>, vector<1x128xf32>, vector<1x128xf32>, vector<1x128xf32>, vector<1x128xf32>, vector<1x128xf32>, vector<1x128xf32>, vector<1x128xf32> -> vector<8x128xf32>
    %475 = arith.mulf %449, %474 : vector<8x128xf32>
    %476 = vector.shape_cast %449 : vector<8x128xf32> to vector<8x1x128xf32>
    %477 = vector.shape_cast %110 : vector<16x128xf32> to vector<1x16x128xf32>
    %478 = vector.broadcast %476 : vector<8x1x128xf32> to vector<8x16x128xf32>
    %479 = vector.broadcast %477 : vector<1x16x128xf32> to vector<8x16x128xf32>
    %480 = arith.mulf %478, %479 : vector<8x16x128xf32>
    %481 = math.exp %480 : vector<8x16x128xf32>
    %482 = vector.extract_strided_slice %422 {offsets = [0, 0], sizes = [8, 16], strides = [1, 1]} : vector<8x64xf32> to vector<8x16xf32>
    %483 = tpu.transpose %482, [1, 0] : vector<8x16xf32> -> vector<16x8xf32>
    %484 = vector.extract_strided_slice %424 {offsets = [0, 16], sizes = [8, 16], strides = [1, 1]} : vector<8x64xf32> to vector<8x16xf32>
    %485 = tpu.transpose %484, [1, 0] : vector<8x16xf32> -> vector<16x8xf32>
    %486 = vector.extract_strided_slice %422 {offsets = [0, 32], sizes = [8, 16], strides = [1, 1]} : vector<8x64xf32> to vector<8x16xf32>
    %487 = tpu.transpose %486, [1, 0] : vector<8x16xf32> -> vector<16x8xf32>
    %488 = vector.extract_strided_slice %424 {offsets = [0, 48], sizes = [8, 16], strides = [1, 1]} : vector<8x64xf32> to vector<8x16xf32>
    %489 = tpu.transpose %488, [1, 0] : vector<8x16xf32> -> vector<16x8xf32>
    %490 = vector.extract_strided_slice %483 {offsets = [0, 0], sizes = [16, 1], strides = [1, 1]} : vector<16x8xf32> to vector<16x1xf32>
    %491 = vector.shape_cast %490 : vector<16x1xf32> to vector<16x1xf32>
    %492 = vector.broadcast %491 : vector<16x1xf32> to vector<16x64xf32>
    %493 = vector.extract_strided_slice %485 {offsets = [0, 7], sizes = [16, 1], strides = [1, 1]} : vector<16x8xf32> to vector<16x1xf32>
    %494 = vector.shape_cast %493 : vector<16x1xf32> to vector<16x1xf32>
    %495 = vector.broadcast %494 : vector<16x1xf32> to vector<16x64xf32>
    %496 = tpu.concatenate %492, %495 in 1 : vector<16x64xf32>, vector<16x64xf32> -> vector<16x128xf32>
    %497 = vector.extract_strided_slice %475 {offsets = [0, 0], sizes = [1, 128], strides = [1, 1]} : vector<8x128xf32> to vector<1x128xf32>
    %498 = vector.broadcast %497 : vector<1x128xf32> to vector<16x128xf32>
    %499 = arith.mulf %496, %498 : vector<16x128xf32>
    %500 = vector.extract_strided_slice %483 {offsets = [0, 1], sizes = [16, 1], strides = [1, 1]} : vector<16x8xf32> to vector<16x1xf32>
    %501 = vector.shape_cast %500 : vector<16x1xf32> to vector<16x1xf32>
    %502 = vector.broadcast %501 : vector<16x1xf32> to vector<16x64xf32>
    %503 = vector.extract_strided_slice %485 {offsets = [0, 6], sizes = [16, 1], strides = [1, 1]} : vector<16x8xf32> to vector<16x1xf32>
    %504 = vector.shape_cast %503 : vector<16x1xf32> to vector<16x1xf32>
    %505 = vector.broadcast %504 : vector<16x1xf32> to vector<16x64xf32>
    %506 = tpu.concatenate %502, %505 in 1 : vector<16x64xf32>, vector<16x64xf32> -> vector<16x128xf32>
    %507 = vector.extract_strided_slice %475 {offsets = [1, 0], sizes = [1, 128], strides = [1, 1]} : vector<8x128xf32> to vector<1x128xf32>
    %508 = vector.broadcast %507 : vector<1x128xf32> to vector<16x128xf32>
    %509 = arith.mulf %506, %508 : vector<16x128xf32>
    %510 = vector.extract_strided_slice %483 {offsets = [0, 2], sizes = [16, 1], strides = [1, 1]} : vector<16x8xf32> to vector<16x1xf32>
    %511 = vector.shape_cast %510 : vector<16x1xf32> to vector<16x1xf32>
    %512 = vector.broadcast %511 : vector<16x1xf32> to vector<16x64xf32>
    %513 = vector.extract_strided_slice %485 {offsets = [0, 5], sizes = [16, 1], strides = [1, 1]} : vector<16x8xf32> to vector<16x1xf32>
    %514 = vector.shape_cast %513 : vector<16x1xf32> to vector<16x1xf32>
    %515 = vector.broadcast %514 : vector<16x1xf32> to vector<16x64xf32>
    %516 = tpu.concatenate %512, %515 in 1 : vector<16x64xf32>, vector<16x64xf32> -> vector<16x128xf32>
    %517 = vector.extract_strided_slice %475 {offsets = [2, 0], sizes = [1, 128], strides = [1, 1]} : vector<8x128xf32> to vector<1x128xf32>
    %518 = vector.broadcast %517 : vector<1x128xf32> to vector<16x128xf32>
    %519 = arith.mulf %516, %518 : vector<16x128xf32>
    %520 = vector.extract_strided_slice %483 {offsets = [0, 3], sizes = [16, 1], strides = [1, 1]} : vector<16x8xf32> to vector<16x1xf32>
    %521 = vector.shape_cast %520 : vector<16x1xf32> to vector<16x1xf32>
    %522 = vector.broadcast %521 : vector<16x1xf32> to vector<16x64xf32>
    %523 = vector.extract_strided_slice %485 {offsets = [0, 4], sizes = [16, 1], strides = [1, 1]} : vector<16x8xf32> to vector<16x1xf32>
    %524 = vector.shape_cast %523 : vector<16x1xf32> to vector<16x1xf32>
    %525 = vector.broadcast %524 : vector<16x1xf32> to vector<16x64xf32>
    %526 = tpu.concatenate %522, %525 in 1 : vector<16x64xf32>, vector<16x64xf32> -> vector<16x128xf32>
    %527 = vector.extract_strided_slice %475 {offsets = [3, 0], sizes = [1, 128], strides = [1, 1]} : vector<8x128xf32> to vector<1x128xf32>
    %528 = vector.broadcast %527 : vector<1x128xf32> to vector<16x128xf32>
    %529 = arith.mulf %526, %528 : vector<16x128xf32>
    %530 = vector.extract_strided_slice %483 {offsets = [0, 4], sizes = [16, 1], strides = [1, 1]} : vector<16x8xf32> to vector<16x1xf32>
    %531 = vector.shape_cast %530 : vector<16x1xf32> to vector<16x1xf32>
    %532 = vector.broadcast %531 : vector<16x1xf32> to vector<16x64xf32>
    %533 = vector.extract_strided_slice %485 {offsets = [0, 3], sizes = [16, 1], strides = [1, 1]} : vector<16x8xf32> to vector<16x1xf32>
    %534 = vector.shape_cast %533 : vector<16x1xf32> to vector<16x1xf32>
    %535 = vector.broadcast %534 : vector<16x1xf32> to vector<16x64xf32>
    %536 = tpu.concatenate %532, %535 in 1 : vector<16x64xf32>, vector<16x64xf32> -> vector<16x128xf32>
    %537 = vector.extract_strided_slice %475 {offsets = [4, 0], sizes = [1, 128], strides = [1, 1]} : vector<8x128xf32> to vector<1x128xf32>
    %538 = vector.broadcast %537 : vector<1x128xf32> to vector<16x128xf32>
    %539 = arith.mulf %536, %538 : vector<16x128xf32>
    %540 = vector.extract_strided_slice %483 {offsets = [0, 5], sizes = [16, 1], strides = [1, 1]} : vector<16x8xf32> to vector<16x1xf32>
    %541 = vector.shape_cast %540 : vector<16x1xf32> to vector<16x1xf32>
    %542 = vector.broadcast %541 : vector<16x1xf32> to vector<16x64xf32>
    %543 = vector.extract_strided_slice %485 {offsets = [0, 2], sizes = [16, 1], strides = [1, 1]} : vector<16x8xf32> to vector<16x1xf32>
    %544 = vector.shape_cast %543 : vector<16x1xf32> to vector<16x1xf32>
    %545 = vector.broadcast %544 : vector<16x1xf32> to vector<16x64xf32>
    %546 = tpu.concatenate %542, %545 in 1 : vector<16x64xf32>, vector<16x64xf32> -> vector<16x128xf32>
    %547 = vector.extract_strided_slice %475 {offsets = [5, 0], sizes = [1, 128], strides = [1, 1]} : vector<8x128xf32> to vector<1x128xf32>
    %548 = vector.broadcast %547 : vector<1x128xf32> to vector<16x128xf32>
    %549 = arith.mulf %546, %548 : vector<16x128xf32>
    %550 = vector.extract_strided_slice %483 {offsets = [0, 6], sizes = [16, 1], strides = [1, 1]} : vector<16x8xf32> to vector<16x1xf32>
    %551 = vector.shape_cast %550 : vector<16x1xf32> to vector<16x1xf32>
    %552 = vector.broadcast %551 : vector<16x1xf32> to vector<16x64xf32>
    %553 = vector.extract_strided_slice %485 {offsets = [0, 1], sizes = [16, 1], strides = [1, 1]} : vector<16x8xf32> to vector<16x1xf32>
    %554 = vector.shape_cast %553 : vector<16x1xf32> to vector<16x1xf32>
    %555 = vector.broadcast %554 : vector<16x1xf32> to vector<16x64xf32>
    %556 = tpu.concatenate %552, %555 in 1 : vector<16x64xf32>, vector<16x64xf32> -> vector<16x128xf32>
    %557 = vector.extract_strided_slice %475 {offsets = [6, 0], sizes = [1, 128], strides = [1, 1]} : vector<8x128xf32> to vector<1x128xf32>
    %558 = vector.broadcast %557 : vector<1x128xf32> to vector<16x128xf32>
    %559 = arith.mulf %556, %558 : vector<16x128xf32>
    %560 = vector.extract_strided_slice %483 {offsets = [0, 7], sizes = [16, 1], strides = [1, 1]} : vector<16x8xf32> to vector<16x1xf32>
    %561 = vector.shape_cast %560 : vector<16x1xf32> to vector<16x1xf32>
    %562 = vector.broadcast %561 : vector<16x1xf32> to vector<16x64xf32>
    %563 = vector.extract_strided_slice %485 {offsets = [0, 0], sizes = [16, 1], strides = [1, 1]} : vector<16x8xf32> to vector<16x1xf32>
    %564 = vector.shape_cast %563 : vector<16x1xf32> to vector<16x1xf32>
    %565 = vector.broadcast %564 : vector<16x1xf32> to vector<16x64xf32>
    %566 = tpu.concatenate %562, %565 in 1 : vector<16x64xf32>, vector<16x64xf32> -> vector<16x128xf32>
    %567 = vector.extract_strided_slice %475 {offsets = [7, 0], sizes = [1, 128], strides = [1, 1]} : vector<8x128xf32> to vector<1x128xf32>
    %568 = vector.broadcast %567 : vector<1x128xf32> to vector<16x128xf32>
    %569 = arith.mulf %566, %568 : vector<16x128xf32>
    %570 = vector.extract_strided_slice %481 {offsets = [0, 0, 0], sizes = [1, 16, 128], strides = [1, 1, 1]} : vector<8x16x128xf32> to vector<1x16x128xf32>
    %571 = vector.shape_cast %570 : vector<1x16x128xf32> to vector<16x128xf32>
    %572 = arith.mulf %571, %406 : vector<16x128xf32>
    %573 = arith.addf %572, %499 : vector<16x128xf32>
    %574 = vector.extract_strided_slice %481 {offsets = [1, 0, 0], sizes = [1, 16, 128], strides = [1, 1, 1]} : vector<8x16x128xf32> to vector<1x16x128xf32>
    %575 = vector.shape_cast %574 : vector<1x16x128xf32> to vector<16x128xf32>
    %576 = arith.mulf %575, %573 : vector<16x128xf32>
    %577 = arith.addf %576, %509 : vector<16x128xf32>
    %578 = vector.extract_strided_slice %481 {offsets = [2, 0, 0], sizes = [1, 16, 128], strides = [1, 1, 1]} : vector<8x16x128xf32> to vector<1x16x128xf32>
    %579 = vector.shape_cast %578 : vector<1x16x128xf32> to vector<16x128xf32>
    %580 = arith.mulf %579, %577 : vector<16x128xf32>
    %581 = arith.addf %580, %519 : vector<16x128xf32>
    %582 = vector.extract_strided_slice %481 {offsets = [3, 0, 0], sizes = [1, 16, 128], strides = [1, 1, 1]} : vector<8x16x128xf32> to vector<1x16x128xf32>
    %583 = vector.shape_cast %582 : vector<1x16x128xf32> to vector<16x128xf32>
    %584 = arith.mulf %583, %581 : vector<16x128xf32>
    %585 = arith.addf %584, %529 : vector<16x128xf32>
    %586 = vector.extract_strided_slice %481 {offsets = [4, 0, 0], sizes = [1, 16, 128], strides = [1, 1, 1]} : vector<8x16x128xf32> to vector<1x16x128xf32>
    %587 = vector.shape_cast %586 : vector<1x16x128xf32> to vector<16x128xf32>
    %588 = arith.mulf %587, %585 : vector<16x128xf32>
    %589 = arith.addf %588, %539 : vector<16x128xf32>
    %590 = vector.extract_strided_slice %481 {offsets = [5, 0, 0], sizes = [1, 16, 128], strides = [1, 1, 1]} : vector<8x16x128xf32> to vector<1x16x128xf32>
    %591 = vector.shape_cast %590 : vector<1x16x128xf32> to vector<16x128xf32>
    %592 = arith.mulf %591, %589 : vector<16x128xf32>
    %593 = arith.addf %592, %549 : vector<16x128xf32>
    %594 = vector.extract_strided_slice %481 {offsets = [6, 0, 0], sizes = [1, 16, 128], strides = [1, 1, 1]} : vector<8x16x128xf32> to vector<1x16x128xf32>
    %595 = vector.shape_cast %594 : vector<1x16x128xf32> to vector<16x128xf32>
    %596 = arith.mulf %595, %593 : vector<16x128xf32>
    %597 = arith.addf %596, %559 : vector<16x128xf32>
    %598 = vector.extract_strided_slice %481 {offsets = [7, 0, 0], sizes = [1, 16, 128], strides = [1, 1, 1]} : vector<8x16x128xf32> to vector<1x16x128xf32>
    %599 = vector.shape_cast %598 : vector<1x16x128xf32> to vector<16x128xf32>
    %600 = arith.mulf %599, %597 : vector<16x128xf32>
    %601 = arith.addf %600, %569 : vector<16x128xf32>
    %602 = vector.extract_strided_slice %487 {offsets = [0, 0], sizes = [16, 1], strides = [1, 1]} : vector<16x8xf32> to vector<16x1xf32>
    %603 = vector.shape_cast %602 : vector<16x1xf32> to vector<16x1xf32>
    %604 = vector.broadcast %603 : vector<16x1xf32> to vector<16x64xf32>
    %605 = vector.extract_strided_slice %489 {offsets = [0, 7], sizes = [16, 1], strides = [1, 1]} : vector<16x8xf32> to vector<16x1xf32>
    %606 = vector.shape_cast %605 : vector<16x1xf32> to vector<16x1xf32>
    %607 = vector.broadcast %606 : vector<16x1xf32> to vector<16x64xf32>
    %608 = tpu.concatenate %604, %607 in 1 : vector<16x64xf32>, vector<16x64xf32> -> vector<16x128xf32>
    %609 = arith.mulf %573, %608 : vector<16x128xf32>
    %cst_73 = arith.constant dense<0.000000e+00> : vector<128xf32>
    %610 = vector.multi_reduction <add>, %609, %cst_73 [0] : vector<16x128xf32> to vector<128xf32>
    %611 = vector.shape_cast %610 : vector<128xf32> to vector<1x128xf32>
    %612 = vector.extract_strided_slice %487 {offsets = [0, 1], sizes = [16, 1], strides = [1, 1]} : vector<16x8xf32> to vector<16x1xf32>
    %613 = vector.shape_cast %612 : vector<16x1xf32> to vector<16x1xf32>
    %614 = vector.broadcast %613 : vector<16x1xf32> to vector<16x64xf32>
    %615 = vector.extract_strided_slice %489 {offsets = [0, 6], sizes = [16, 1], strides = [1, 1]} : vector<16x8xf32> to vector<16x1xf32>
    %616 = vector.shape_cast %615 : vector<16x1xf32> to vector<16x1xf32>
    %617 = vector.broadcast %616 : vector<16x1xf32> to vector<16x64xf32>
    %618 = tpu.concatenate %614, %617 in 1 : vector<16x64xf32>, vector<16x64xf32> -> vector<16x128xf32>
    %619 = arith.mulf %577, %618 : vector<16x128xf32>
    %cst_74 = arith.constant dense<0.000000e+00> : vector<128xf32>
    %620 = vector.multi_reduction <add>, %619, %cst_74 [0] : vector<16x128xf32> to vector<128xf32>
    %621 = vector.shape_cast %620 : vector<128xf32> to vector<1x128xf32>
    %622 = vector.extract_strided_slice %487 {offsets = [0, 2], sizes = [16, 1], strides = [1, 1]} : vector<16x8xf32> to vector<16x1xf32>
    %623 = vector.shape_cast %622 : vector<16x1xf32> to vector<16x1xf32>
    %624 = vector.broadcast %623 : vector<16x1xf32> to vector<16x64xf32>
    %625 = vector.extract_strided_slice %489 {offsets = [0, 5], sizes = [16, 1], strides = [1, 1]} : vector<16x8xf32> to vector<16x1xf32>
    %626 = vector.shape_cast %625 : vector<16x1xf32> to vector<16x1xf32>
    %627 = vector.broadcast %626 : vector<16x1xf32> to vector<16x64xf32>
    %628 = tpu.concatenate %624, %627 in 1 : vector<16x64xf32>, vector<16x64xf32> -> vector<16x128xf32>
    %629 = arith.mulf %581, %628 : vector<16x128xf32>
    %cst_75 = arith.constant dense<0.000000e+00> : vector<128xf32>
    %630 = vector.multi_reduction <add>, %629, %cst_75 [0] : vector<16x128xf32> to vector<128xf32>
    %631 = vector.shape_cast %630 : vector<128xf32> to vector<1x128xf32>
    %632 = vector.extract_strided_slice %487 {offsets = [0, 3], sizes = [16, 1], strides = [1, 1]} : vector<16x8xf32> to vector<16x1xf32>
    %633 = vector.shape_cast %632 : vector<16x1xf32> to vector<16x1xf32>
    %634 = vector.broadcast %633 : vector<16x1xf32> to vector<16x64xf32>
    %635 = vector.extract_strided_slice %489 {offsets = [0, 4], sizes = [16, 1], strides = [1, 1]} : vector<16x8xf32> to vector<16x1xf32>
    %636 = vector.shape_cast %635 : vector<16x1xf32> to vector<16x1xf32>
    %637 = vector.broadcast %636 : vector<16x1xf32> to vector<16x64xf32>
    %638 = tpu.concatenate %634, %637 in 1 : vector<16x64xf32>, vector<16x64xf32> -> vector<16x128xf32>
    %639 = arith.mulf %585, %638 : vector<16x128xf32>
    %cst_76 = arith.constant dense<0.000000e+00> : vector<128xf32>
    %640 = vector.multi_reduction <add>, %639, %cst_76 [0] : vector<16x128xf32> to vector<128xf32>
    %641 = vector.shape_cast %640 : vector<128xf32> to vector<1x128xf32>
    %642 = vector.extract_strided_slice %487 {offsets = [0, 4], sizes = [16, 1], strides = [1, 1]} : vector<16x8xf32> to vector<16x1xf32>
    %643 = vector.shape_cast %642 : vector<16x1xf32> to vector<16x1xf32>
    %644 = vector.broadcast %643 : vector<16x1xf32> to vector<16x64xf32>
    %645 = vector.extract_strided_slice %489 {offsets = [0, 3], sizes = [16, 1], strides = [1, 1]} : vector<16x8xf32> to vector<16x1xf32>
    %646 = vector.shape_cast %645 : vector<16x1xf32> to vector<16x1xf32>
    %647 = vector.broadcast %646 : vector<16x1xf32> to vector<16x64xf32>
    %648 = tpu.concatenate %644, %647 in 1 : vector<16x64xf32>, vector<16x64xf32> -> vector<16x128xf32>
    %649 = arith.mulf %589, %648 : vector<16x128xf32>
    %cst_77 = arith.constant dense<0.000000e+00> : vector<128xf32>
    %650 = vector.multi_reduction <add>, %649, %cst_77 [0] : vector<16x128xf32> to vector<128xf32>
    %651 = vector.shape_cast %650 : vector<128xf32> to vector<1x128xf32>
    %652 = vector.extract_strided_slice %487 {offsets = [0, 5], sizes = [16, 1], strides = [1, 1]} : vector<16x8xf32> to vector<16x1xf32>
    %653 = vector.shape_cast %652 : vector<16x1xf32> to vector<16x1xf32>
    %654 = vector.broadcast %653 : vector<16x1xf32> to vector<16x64xf32>
    %655 = vector.extract_strided_slice %489 {offsets = [0, 2], sizes = [16, 1], strides = [1, 1]} : vector<16x8xf32> to vector<16x1xf32>
    %656 = vector.shape_cast %655 : vector<16x1xf32> to vector<16x1xf32>
    %657 = vector.broadcast %656 : vector<16x1xf32> to vector<16x64xf32>
    %658 = tpu.concatenate %654, %657 in 1 : vector<16x64xf32>, vector<16x64xf32> -> vector<16x128xf32>
    %659 = arith.mulf %593, %658 : vector<16x128xf32>
    %cst_78 = arith.constant dense<0.000000e+00> : vector<128xf32>
    %660 = vector.multi_reduction <add>, %659, %cst_78 [0] : vector<16x128xf32> to vector<128xf32>
    %661 = vector.shape_cast %660 : vector<128xf32> to vector<1x128xf32>
    %662 = vector.extract_strided_slice %487 {offsets = [0, 6], sizes = [16, 1], strides = [1, 1]} : vector<16x8xf32> to vector<16x1xf32>
    %663 = vector.shape_cast %662 : vector<16x1xf32> to vector<16x1xf32>
    %664 = vector.broadcast %663 : vector<16x1xf32> to vector<16x64xf32>
    %665 = vector.extract_strided_slice %489 {offsets = [0, 1], sizes = [16, 1], strides = [1, 1]} : vector<16x8xf32> to vector<16x1xf32>
    %666 = vector.shape_cast %665 : vector<16x1xf32> to vector<16x1xf32>
    %667 = vector.broadcast %666 : vector<16x1xf32> to vector<16x64xf32>
    %668 = tpu.concatenate %664, %667 in 1 : vector<16x64xf32>, vector<16x64xf32> -> vector<16x128xf32>
    %669 = arith.mulf %597, %668 : vector<16x128xf32>
    %cst_79 = arith.constant dense<0.000000e+00> : vector<128xf32>
    %670 = vector.multi_reduction <add>, %669, %cst_79 [0] : vector<16x128xf32> to vector<128xf32>
    %671 = vector.shape_cast %670 : vector<128xf32> to vector<1x128xf32>
    %672 = vector.extract_strided_slice %487 {offsets = [0, 7], sizes = [16, 1], strides = [1, 1]} : vector<16x8xf32> to vector<16x1xf32>
    %673 = vector.shape_cast %672 : vector<16x1xf32> to vector<16x1xf32>
    %674 = vector.broadcast %673 : vector<16x1xf32> to vector<16x64xf32>
    %675 = vector.extract_strided_slice %489 {offsets = [0, 0], sizes = [16, 1], strides = [1, 1]} : vector<16x8xf32> to vector<16x1xf32>
    %676 = vector.shape_cast %675 : vector<16x1xf32> to vector<16x1xf32>
    %677 = vector.broadcast %676 : vector<16x1xf32> to vector<16x64xf32>
    %678 = tpu.concatenate %674, %677 in 1 : vector<16x64xf32>, vector<16x64xf32> -> vector<16x128xf32>
    %679 = arith.mulf %601, %678 : vector<16x128xf32>
    %cst_80 = arith.constant dense<0.000000e+00> : vector<128xf32>
    %680 = vector.multi_reduction <add>, %679, %cst_80 [0] : vector<16x128xf32> to vector<128xf32>
    %681 = vector.shape_cast %680 : vector<128xf32> to vector<1x128xf32>
    %682 = tpu.concatenate %611, %621, %631, %641, %651, %661, %671, %681 in 0 : vector<1x128xf32>, vector<1x128xf32>, vector<1x128xf32>, vector<1x128xf32>, vector<1x128xf32>, vector<1x128xf32>, vector<1x128xf32>, vector<1x128xf32> -> vector<8x128xf32>
    %683 = vector.broadcast %111 : vector<1x128xf32> to vector<8x128xf32>
    %684 = arith.mulf %683, %474 : vector<8x128xf32>
    %685 = arith.addf %682, %684 : vector<8x128xf32>
    %686 = vector.extract_strided_slice %685 {offsets = [0, 0], sizes = [8, 64], strides = [1, 1]} : vector<8x128xf32> to vector<8x64xf32>
    %687 = arith.index_cast %409 : i32 to index
    %c0_81 = arith.constant 0 : index
    %688 = vector.load %arg22[%687, %c0_81] : memref<16x64xf32, #tpu.memory_space<vmem>>, vector<8x64xf32>
    tpu.vector_store %arg22[%687, %c0_81], %686 {strides = array<i32>} : memref<16x64xf32, #tpu.memory_space<vmem>>, vector<8x64xf32>,
    %689 = vector.extract_strided_slice %685 {offsets = [7, 64], sizes = [1, 64], strides = [1, 1]} : vector<8x128xf32> to vector<1x64xf32>
    %690 = vector.extract_strided_slice %685 {offsets = [6, 64], sizes = [1, 64], strides = [1, 1]} : vector<8x128xf32> to vector<1x64xf32>
    %691 = vector.extract_strided_slice %685 {offsets = [5, 64], sizes = [1, 64], strides = [1, 1]} : vector<8x128xf32> to vector<1x64xf32>
    %692 = vector.extract_strided_slice %685 {offsets = [4, 64], sizes = [1, 64], strides = [1, 1]} : vector<8x128xf32> to vector<1x64xf32>
    %693 = vector.extract_strided_slice %685 {offsets = [3, 64], sizes = [1, 64], strides = [1, 1]} : vector<8x128xf32> to vector<1x64xf32>
    %694 = vector.extract_strided_slice %685 {offsets = [2, 64], sizes = [1, 64], strides = [1, 1]} : vector<8x128xf32> to vector<1x64xf32>
    %695 = vector.extract_strided_slice %685 {offsets = [1, 64], sizes = [1, 64], strides = [1, 1]} : vector<8x128xf32> to vector<1x64xf32>
    %696 = vector.extract_strided_slice %685 {offsets = [0, 64], sizes = [1, 64], strides = [1, 1]} : vector<8x128xf32> to vector<1x64xf32>
    %697 = tpu.concatenate %689, %690, %691, %692, %693, %694, %695, %696 in 0 : vector<1x64xf32>, vector<1x64xf32>, vector<1x64xf32>, vector<1x64xf32>, vector<1x64xf32>, vector<1x64xf32>, vector<1x64xf32>, vector<1x64xf32> -> vector<8x64xf32>
    %698 = arith.index_cast %412 : i32 to index
    %c0_82 = arith.constant 0 : index
    %699 = vector.load %arg23[%698, %c0_82] : memref<16x64xf32, #tpu.memory_space<vmem>>, vector<8x64xf32>
    tpu.vector_store %arg23[%698, %c0_82], %697 {strides = array<i32>} : memref<16x64xf32, #tpu.memory_space<vmem>>, vector<8x64xf32>,
    %c1_i32_83 = arith.constant 1 : i32
    %c0_84 = arith.constant 0 : index
    %c0_85 = arith.constant 0 : index
    %700 = vector.load %arg22[%c0_84, %c0_85] : memref<16x64xf32, #tpu.memory_space<vmem>>, vector<16x64xf32>
    %c0_86 = arith.constant 0 : index
    %c0_87 = arith.constant 0 : index
    %701 = vector.load %arg23[%c0_86, %c0_87] : memref<16x64xf32, #tpu.memory_space<vmem>>, vector<16x64xf32>
    %702 = arith.addf %700, %701 : vector<16x64xf32>
    %c0_88 = arith.constant 0 : index
    %c0_89 = arith.constant 0 : index
    %703 = vector.load %arg21[%c0_88, %c0_89] : memref<16x64xf32, #tpu.memory_space<vmem>>, vector<16x64xf32>
    %704 = arith.negf %703 : vector<16x64xf32>
    %705 = math.exp %704 : vector<16x64xf32>
    %cst_90 = arith.constant 1.000000e+00 : f32
    %706 = vector.broadcast %cst_90 : f32 to vector<16x64xf32>
    %707 = arith.addf %706, %705 : vector<16x64xf32>
    %708 = arith.divf %706, %707 : vector<16x64xf32>
    %709 = arith.mulf %703, %708 : vector<16x64xf32>
    %710 = arith.mulf %702, %709 : vector<16x64xf32>
    %711 = arith.truncf %710 : vector<16x64xf32> to vector<16x64xbf16>
    %c0_91 = arith.constant 0 : index
    %c0_92 = arith.constant 0 : index
    %712 = vector.load %arg13[%c0_91, %c0_92] : memref<64x32xbf16, #tpu.memory_space<vmem>>, vector<64x32xbf16>
    %cst_93 = arith.constant dense<0.000000e+00> : vector<16x32xf32>
    %713 = tpu.matmul %711, %712, %cst_93 {dimension_numbers = #tpu.dot_dimension_numbers<[1], [0], [0], [1], [0, 0, 1, 1], [], []>} : vector<16x64xbf16>, vector<64x32xbf16>, vector<16x32xf32> -> vector<16x32xf32>
    %c0_94 = arith.constant 0 : index
    %c0_95 = arith.constant 0 : index
    %714 = vector.load %arg14[%c0_94, %c0_95] : memref<1x32xf32, #tpu.memory_space<vmem>>, vector<1x32xf32>
    %715 = vector.broadcast %714 : vector<1x32xf32> to vector<16x32xf32>
    %716 = arith.addf %713, %715 : vector<16x32xf32>
    %cst_96 = arith.constant dense<0.000000e+00> : vector<16xf32>
    %717 = vector.multi_reduction <add>, %716, %cst_96 [1] : vector<16x32xf32> to vector<16xf32>
    %718 = vector.shape_cast %717 : vector<16xf32> to vector<16x1xf32>
    %cst_97 = arith.constant 3.200000e+01 : f32
    %719 = vector.broadcast %cst_97 : f32 to vector<16x1xf32>
    %720 = arith.divf %718, %719 : vector<16x1xf32>
    %721 = vector.broadcast %720 : vector<16x1xf32> to vector<16x32xf32>
    %722 = arith.subf %716, %721 : vector<16x32xf32>
    %723 = arith.mulf %722, %722 : vector<16x32xf32>
    %cst_98 = arith.constant dense<0.000000e+00> : vector<16xf32>
    %724 = vector.multi_reduction <add>, %723, %cst_98 [1] : vector<16x32xf32> to vector<16xf32>
    %725 = vector.shape_cast %724 : vector<16xf32> to vector<16x1xf32>
    %cst_99 = arith.constant 3.200000e+01 : f32
    %726 = vector.broadcast %cst_99 : f32 to vector<16x1xf32>
    %727 = arith.divf %725, %726 : vector<16x1xf32>
    %c0_100 = arith.constant 0 : index
    %c0_101 = arith.constant 0 : index
    %c0_102 = arith.constant 0 : index
    %728 = vector.load %arg2[%c0_100, %c0_101, %c0_102] : memref<1x16x32xf32, #tpu.memory_space<vmem>>, vector<1x16x32xf32>
    %729 = vector.shape_cast %728 : vector<1x16x32xf32> to vector<16x32xf32>
    %cst_103 = arith.constant 9.99999997E-7 : f32
    %730 = vector.broadcast %cst_103 : f32 to vector<16x1xf32>
    %731 = arith.addf %727, %730 : vector<16x1xf32>
    %732 = math.rsqrt %731 : vector<16x1xf32>
    %733 = vector.broadcast %732 : vector<16x1xf32> to vector<16x32xf32>
    %734 = arith.mulf %722, %733 : vector<16x32xf32>
    %c0_104 = arith.constant 0 : index
    %c0_105 = arith.constant 0 : index
    %c0_106 = arith.constant 0 : index
    %735 = vector.load %arg15[%c0_104, %c0_105, %c0_106] : memref<1x1x32xf32, #tpu.memory_space<vmem>>, vector<1x1x32xf32>
    %736 = vector.shape_cast %735 : vector<1x1x32xf32> to vector<1x32xf32>
    %737 = vector.broadcast %736 : vector<1x32xf32> to vector<16x32xf32>
    %738 = arith.mulf %734, %737 : vector<16x32xf32>
    %739 = arith.addf %729, %738 : vector<16x32xf32>
    %c0_107 = arith.constant 0 : index
    %c0_108 = arith.constant 0 : index
    %c0_109 = arith.constant 0 : index
    %740 = vector.load %arg16[%c0_107, %c0_108, %c0_109] : memref<1x1x32xf32, #tpu.memory_space<vmem>>, vector<1x1x32xf32>
    %741 = vector.shape_cast %740 : vector<1x1x32xf32> to vector<1x32xf32>
    %742 = vector.broadcast %741 : vector<1x32xf32> to vector<16x32xf32>
    %743 = arith.addf %739, %742 : vector<16x32xf32>
    %c0_110 = arith.constant 0 : index
    %c0_111 = arith.constant 0 : index
    %c0_112 = arith.constant 0 : index
    %744 = vector.load %arg17[%c0_110, %c0_111, %c0_112] : memref<1x16x32xf32, #tpu.memory_space<vmem>>, vector<1x16x32xf32>
    %745 = vector.shape_cast %744 : vector<1x16x32xf32> to vector<16x32xf32>
    %746 = vector.shape_cast %743 : vector<16x32xf32> to vector<1x16x32xf32>
    tpu.vector_store %arg17[%c0_110, %c0_111, %c0_112], %746 {strides = array<i32>} : memref<1x16x32xf32, #tpu.memory_space<vmem>>, vector<1x16x32xf32>,
    return
  }
  func.func @transform_0(%arg0: i32, %arg1: i32) -> (i32, i32, i32) {
    %c0_i32 = arith.constant 0 : i32
    %c0_i32_0 = arith.constant 0 : i32
    return %arg1, %arg0, %c0_i32 : i32, i32, i32
  }
  func.func @transform_1(%arg0: i32, %arg1: i32) -> (i32, i32) {
    %c0_i32 = arith.constant 0 : i32
    %c0_i32_0 = arith.constant 0 : i32
    %c0_i32_1 = arith.constant 0 : i32
    return %c0_i32, %c0_i32_0 : i32, i32
  }
  func.func @transform_2(%arg0: i32, %arg1: i32) -> (i32, i32) {
    %c0_i32 = arith.constant 0 : i32
    %c0_i32_0 = arith.constant 0 : i32
    %c0_i32_1 = arith.constant 0 : i32
    return %c0_i32, %c0_i32_0 : i32, i32
  }
  func.func @transform_3(%arg0: i32, %arg1: i32) -> (i32, i32, i32) {
    %c0_i32 = arith.constant 0 : i32
    %c0_i32_0 = arith.constant 0 : i32
    %c0_i32_1 = arith.constant 0 : i32
    %c0_i32_2 = arith.constant 0 : i32
    return %c0_i32, %c0_i32_0, %c0_i32_1 : i32, i32, i32
  }
  func.func @transform_4(%arg0: i32, %arg1: i32) -> (i32, i32) {
    %c0_i32 = arith.constant 0 : i32
    %c0_i32_0 = arith.constant 0 : i32
    %c0_i32_1 = arith.constant 0 : i32
    return %c0_i32, %c0_i32_0 : i32, i32
  }
  func.func @transform_5(%arg0: i32, %arg1: i32) -> (i32, i32) {
    %c0_i32 = arith.constant 0 : i32
    %c0_i32_0 = arith.constant 0 : i32
    %c0_i32_1 = arith.constant 0 : i32
    return %c0_i32, %c0_i32_0 : i32, i32
  }
  func.func @transform_6(%arg0: i32, %arg1: i32) -> (i32, i32) {
    %c0_i32 = arith.constant 0 : i32
    %c0_i32_0 = arith.constant 0 : i32
    %c0_i32_1 = arith.constant 0 : i32
    return %c0_i32, %c0_i32_0 : i32, i32
  }
  func.func @transform_7(%arg0: i32, %arg1: i32) -> (i32, i32) {
    %c0_i32 = arith.constant 0 : i32
    %c0_i32_0 = arith.constant 0 : i32
    %c0_i32_1 = arith.constant 0 : i32
    return %c0_i32, %c0_i32_0 : i32, i32
  }
  func.func @transform_8(%arg0: i32, %arg1: i32) -> (i32, i32) {
    %c0_i32 = arith.constant 0 : i32
    %c0_i32_0 = arith.constant 0 : i32
    %c0_i32_1 = arith.constant 0 : i32
    return %c0_i32, %c0_i32_0 : i32, i32
  }
  func.func @transform_9(%arg0: i32, %arg1: i32) -> (i32, i32) {
    %c0_i32 = arith.constant 0 : i32
    %c0_i32_0 = arith.constant 0 : i32
    %c0_i32_1 = arith.constant 0 : i32
    return %c0_i32, %c0_i32_0 : i32, i32
  }
  func.func @transform_10(%arg0: i32, %arg1: i32) -> (i32, i32) {
    %c0_i32 = arith.constant 0 : i32
    %c0_i32_0 = arith.constant 0 : i32
    %c0_i32_1 = arith.constant 0 : i32
    return %c0_i32, %c0_i32_0 : i32, i32
  }
  func.func @transform_11(%arg0: i32, %arg1: i32) -> (i32, i32) {
    %c0_i32 = arith.constant 0 : i32
    %c0_i32_0 = arith.constant 0 : i32
    %c0_i32_1 = arith.constant 0 : i32
    return %c0_i32, %c0_i32_0 : i32, i32
  }
  func.func @transform_12(%arg0: i32, %arg1: i32) -> (i32, i32) {
    %c0_i32 = arith.constant 0 : i32
    %c0_i32_0 = arith.constant 0 : i32
    %c0_i32_1 = arith.constant 0 : i32
    return %c0_i32, %c0_i32_0 : i32, i32
  }
  func.func @transform_13(%arg0: i32, %arg1: i32) -> (i32, i32, i32) {
    %c0_i32 = arith.constant 0 : i32
    %c0_i32_0 = arith.constant 0 : i32
    %c0_i32_1 = arith.constant 0 : i32
    return %arg1, %c0_i32, %c0_i32_0 : i32, i32, i32
  }
  func.func @transform_14(%arg0: i32, %arg1: i32) -> (i32, i32, i32) {
    %c0_i32 = arith.constant 0 : i32
    %c0_i32_0 = arith.constant 0 : i32
    %c0_i32_1 = arith.constant 0 : i32
    return %arg1, %c0_i32, %c0_i32_0 : i32, i32, i32
  }
  func.func @transform_15(%arg0: i32, %arg1: i32) -> (i32, i32, i32) {
    %c0_i32 = arith.constant 0 : i32
    %c0_i32_0 = arith.constant 0 : i32
    return %arg1, %arg0, %c0_i32 : i32, i32, i32
  }
}

</mosaic_0001>

<llo_original>
// kernel: mm_mamba_encoder_layer.1
$region0: #{mm_mamba_encoder_layer.1}
  #allocation0 [shape = 'u32[]', space=smem, size = 0x4, offset = 0x4, fixed_abs, tag = 'smem constant byte address 0x4 - core index']
  #allocation1 [shape = 'u32[144,128]{1,0:T(1,128)}', space=vmem, size = 0x12000, scoped, tag = 'internal scratch']
  #allocation2 [shape = 'f32[16,128]{1,0:T(8,128)}', space=vmem, size = 0x2000, scoped, tag = 'scratch operand']
  #allocation3 [shape = 'f32[16,128]{1,0:T(8,128)}', space=vmem, size = 0x2000, scoped, tag = 'scratch operand']
  #allocation4 [shape = 'f32[16,64]{1,0:T(8,128)}', space=vmem, size = 0x2000, scoped, tag = 'scratch operand']
  #allocation5 [shape = 'f32[16,64]{1,0:T(8,128)}', space=vmem, size = 0x2000, scoped, tag = 'scratch operand']
  #allocation6 [shape = 'f32[16,64]{1,0:T(8,128)}', space=vmem, size = 0x2000, scoped, tag = 'scratch operand']
  #allocation7 [shape = 'f32[16,64]{1,0:T(8,128)}', space=vmem, size = 0x2000, scoped, tag = 'scratch operand']
  %s0 = inlined_call_operand.vmem [shape: f32[2,16,32], index: 0, kind: input, shape index: {}]
  %s1 = inlined_call_operand.vmem [shape: bf16[32,128], index: 1, kind: input, shape index: {}]
  %s2 = inlined_call_operand.vmem [shape: f32[1,128], index: 2, kind: input, shape index: {}]
  %s3 = inlined_call_operand.vmem [shape: f32[2,4,64], index: 3, kind: input, shape index: {}]
  %s4 = inlined_call_operand.vmem [shape: f32[1,128], index: 4, kind: input, shape index: {}]
  %s5 = inlined_call_operand.vmem [shape: bf16[128,68], index: 5, kind: input, shape index: {}]
  %s6 = inlined_call_operand.vmem [shape: f32[1,68], index: 6, kind: input, shape index: {}]
  %s7 = inlined_call_operand.vmem [shape: f32[4,128], index: 7, kind: input, shape index: {}]
  %s8 = inlined_call_operand.vmem [shape: f32[1,128], index: 8, kind: input, shape index: {}]
  %s9 = inlined_call_operand.vmem [shape: f32[16,128], index: 9, kind: input, shape index: {}]
  %s10 = inlined_call_operand.vmem [shape: f32[1,128], index: 10, kind: input, shape index: {}]
  %s11 = inlined_call_operand.vmem [shape: bf16[64,32], index: 11, kind: input, shape index: {}]
  %s12 = inlined_call_operand.vmem [shape: f32[1,32], index: 12, kind: input, shape index: {}]
  %s13 = inlined_call_operand.vmem [shape: f32[2,1,32], index: 13, kind: input, shape index: {}]
  %s14 = inlined_call_operand.vmem [shape: f32[2,1,32], index: 14, kind: input, shape index: {}]
  %s15 = inlined_call_operand.vmem [shape: f32[2,16,32], index: 15, kind: output, shape index: {}]
  %s16 = sld [smem:[#allocation0]]
  $region93: #{mm_mamba_encoder_layer.1} parent=0
    _
  %s18 = ssub.s32 1, %s16
  %s19 = scalar_select 0, %s18, %s16
  loop: start=0, step=1, limit=4
  $region2: #{mm_mamba_encoder_layer.1} parent=0 // loop_pre_header
    _
  $region3: #{mm_mamba_encoder_layer.1} parent=0 // loop_header
    %s21 = sphi 0, %s25
    %p22 = scmp.ge.s32.totalorder %s21, 4
    %s28 = sphi 0, %s40
    %s29 = sphi 0, %s36
    %s30 = sphi 0, %s28
    %s31 = sphi 0, %s29
    %s32 = sphi 0, %s30
    %s33 = sphi 0, %s31
    %s45 = sphi 0, %s47
    %s48 = sphi 0, %s45
    %s49 = sphi 0, %s48
    %s65 = sphi 0, %s49
    %s69 = sphi 0, %s69
    %s71 = sphi 0, %s69
    %s72 = sphi 0, %s71
    %s86 = sphi 0, %s72
    %s90 = sphi 0, %s90
    %s92 = sphi 0, %s90
    %s93 = sphi 0, %s92
    %s107 = sphi 0, %s93
    %s111 = sphi 0, %s111
    %s113 = sphi 0, %s111
    %s114 = sphi 0, %s113
    %s128 = sphi 0, %s114
    %s132 = sphi 0, %s132
    %s134 = sphi 0, %s132
    %s135 = sphi 0, %s134
    %s149 = sphi 0, %s135
    %s153 = sphi 0, %s153
    %s155 = sphi 0, %s153
    %s156 = sphi 0, %s155
    %s170 = sphi 0, %s156
    %s174 = sphi 0, %s174
    %s176 = sphi 0, %s174
    %s177 = sphi 0, %s176
    %s191 = sphi 0, %s177
    %s195 = sphi 0, %s195
    %s197 = sphi 0, %s195
    %s198 = sphi 0, %s197
    %s212 = sphi 0, %s198
    %s216 = sphi 0, %s216
    %s218 = sphi 0, %s216
    %s219 = sphi 0, %s218
    %s233 = sphi 0, %s219
    %s237 = sphi 0, %s237
    %s239 = sphi 0, %s237
    %s240 = sphi 0, %s239
    %s254 = sphi 0, %s240
    %s258 = sphi 0, %s258
    %s260 = sphi 0, %s258
    %s261 = sphi 0, %s260
    %s275 = sphi 0, %s261
    %s279 = sphi 0, %s279
    %s281 = sphi 0, %s279
    %s282 = sphi 0, %s281
    %s296 = sphi 0, %s282
    %s300 = sphi 0, %s300
    %s302 = sphi 0, %s300
    %s303 = sphi 0, %s302
    %s317 = sphi 0, %s303
    %s323 = sphi 0, %s325
    %s326 = sphi 0, %s323
    %s327 = sphi 0, %s326
    %s343 = sphi 0, %s327
    %s349 = sphi 0, %s351
    %s352 = sphi 0, %s349
    %s353 = sphi 0, %s352
    %s369 = sphi 0, %s353
    %s377 = sphi 0, %s379
    %s380 = sphi 0, %s377
    %s381 = sphi 0, %s380
    %s397 = sphi 0, %s381
  $region4: #{mm_mamba_encoder_layer.1} parent=0 // loop_header_branch
    %24 = sbr.rel (%p22) target = $region8
  $region5: #{mm_mamba_encoder_layer.1} parent=0 // loop_body
    %s26 = ssub.s32 %s21, 1
    %s27 = ssub.s32 %s21, 2
    %s34 = sadd.s32 1, %s29
    %p35 = scmp.ge.s32.totalorder %s34, 2
    %s36 = scalar_select %p35, 0, %s34
    %s37 = sadd.s32 1, %s28
    %s38 = scalar_select %p35, %s37, %s28
    %p39 = scmp.ge.s32.totalorder %s38, 1
    %s40 = scalar_select %p39, 0, %s38
    %s41 = ssub.s32 %s29, %s36
    %s42 = ssub.s32 %s28, %s40
    %s43 = sor.u32 %s41, %s42
    %p44 = scmp.eq.s32.totalorder %s43, 0
    %s46 = sadd.s32 %s45, 1
    %s47 = scalar_select %p44, %s45, %s46
    %p50 = pneg %p44
    %p51 = scmp.eq.s32.totalorder %s21, 1
    %p52 = por %p50, %p51
    %p53 = scmp.ne.s32.totalorder %s45, %s48
    %p54 = scmp.eq.s32.totalorder %s21, 0
    %p55 = por %p53, %p54
    %p56 = scmp.ne.s32.totalorder %s45, %s48
    %p57 = scmp.eq.s32.totalorder %s26, 1
    %p58 = por %p56, %p57
    %p59 = scmp.ne.s32.totalorder %s48, %s49
    %p60 = scmp.eq.s32.totalorder %s26, 0
    %p61 = por %p59, %p60
    %p62 = scmp.ne.s32.totalorder %s48, %s49
    %p63 = scmp.eq.s32.totalorder %s27, 1
    %p64 = por %p62, %p63
    %p66 = scmp.ne.s32.totalorder %s49, %s65
    %p67 = scmp.eq.s32.totalorder %s27, 0
    %p68 = por %p66, %p67
    %s70 = sadd.s32 %s69, 1
    %p73 = scmp.eq.s32.totalorder %s21, 1
    %p74 = scmp.ne.s32.totalorder %s69, %s71
    %p75 = scmp.eq.s32.totalorder %s21, 0
    %p76 = por %p74, %p75
    %p77 = scmp.ne.s32.totalorder %s69, %s71
    %p78 = scmp.eq.s32.totalorder %s26, 1
    %p79 = por %p77, %p78
    %p80 = scmp.ne.s32.totalorder %s71, %s72
    %p81 = scmp.eq.s32.totalorder %s26, 0
    %p82 = por %p80, %p81
    %p83 = scmp.ne.s32.totalorder %s71, %s72
    %p84 = scmp.eq.s32.totalorder %s27, 1
    %p85 = por %p83, %p84
    %p87 = scmp.ne.s32.totalorder %s72, %s86
    %p88 = scmp.eq.s32.totalorder %s27, 0
    %p89 = por %p87, %p88
    %s91 = sadd.s32 %s90, 1
    %p94 = scmp.eq.s32.totalorder %s21, 1
    %p95 = scmp.ne.s32.totalorder %s90, %s92
    %p96 = scmp.eq.s32.totalorder %s21, 0
    %p97 = por %p95, %p96
    %p98 = scmp.ne.s32.totalorder %s90, %s92
    %p99 = scmp.eq.s32.totalorder %s26, 1
    %p100 = por %p98, %p99
    %p101 = scmp.ne.s32.totalorder %s92, %s93
    %p102 = scmp.eq.s32.totalorder %s26, 0
    %p103 = por %p101, %p102
    %p104 = scmp.ne.s32.totalorder %s92, %s93
    %p105 = scmp.eq.s32.totalorder %s27, 1
    %p106 = por %p104, %p105
    %p108 = scmp.ne.s32.totalorder %s93, %s107
    %p109 = scmp.eq.s32.totalorder %s27, 0
    %p110 = por %p108, %p109
    %s112 = sadd.s32 %s111, 1
    %p115 = scmp.eq.s32.totalorder %s21, 1
    %p116 = scmp.ne.s32.totalorder %s111, %s113
    %p117 = scmp.eq.s32.totalorder %s21, 0
    %p118 = por %p116, %p117
    %p119 = scmp.ne.s32.totalorder %s111, %s113
    %p120 = scmp.eq.s32.totalorder %s26, 1
    %p121 = por %p119, %p120
    %p122 = scmp.ne.s32.totalorder %s113, %s114
    %p123 = scmp.eq.s32.totalorder %s26, 0
    %p124 = por %p122, %p123
    %p125 = scmp.ne.s32.totalorder %s113, %s114
    %p126 = scmp.eq.s32.totalorder %s27, 1
    %p127 = por %p125, %p126
    %p129 = scmp.ne.s32.totalorder %s114, %s128
    %p130 = scmp.eq.s32.totalorder %s27, 0
    %p131 = por %p129, %p130
    %s133 = sadd.s32 %s132, 1
    %p136 = scmp.eq.s32.totalorder %s21, 1
    %p137 = scmp.ne.s32.totalorder %s132, %s134
    %p138 = scmp.eq.s32.totalorder %s21, 0
    %p139 = por %p137, %p138
    %p140 = scmp.ne.s32.totalorder %s132, %s134
    %p141 = scmp.eq.s32.totalorder %s26, 1
    %p142 = por %p140, %p141
    %p143 = scmp.ne.s32.totalorder %s134, %s135
    %p144 = scmp.eq.s32.totalorder %s26, 0
    %p145 = por %p143, %p144
    %p146 = scmp.ne.s32.totalorder %s134, %s135
    %p147 = scmp.eq.s32.totalorder %s27, 1
    %p148 = por %p146, %p147
    %p150 = scmp.ne.s32.totalorder %s135, %s149
    %p151 = scmp.eq.s32.totalorder %s27, 0
    %p152 = por %p150, %p151
    %s154 = sadd.s32 %s153, 1
    %p157 = scmp.eq.s32.totalorder %s21, 1
    %p158 = scmp.ne.s32.totalorder %s153, %s155
    %p159 = scmp.eq.s32.totalorder %s21, 0
    %p160 = por %p158, %p159
    %p161 = scmp.ne.s32.totalorder %s153, %s155
    %p162 = scmp.eq.s32.totalorder %s26, 1
    %p163 = por %p161, %p162
    %p164 = scmp.ne.s32.totalorder %s155, %s156
    %p165 = scmp.eq.s32.totalorder %s26, 0
    %p166 = por %p164, %p165
    %p167 = scmp.ne.s32.totalorder %s155, %s156
    %p168 = scmp.eq.s32.totalorder %s27, 1
    %p169 = por %p167, %p168
    %p171 = scmp.ne.s32.totalorder %s156, %s170
    %p172 = scmp.eq.s32.totalorder %s27, 0
    %p173 = por %p171, %p172
    %s175 = sadd.s32 %s174, 1
    %p178 = scmp.eq.s32.totalorder %s21, 1
    %p179 = scmp.ne.s32.totalorder %s174, %s176
    %p180 = scmp.eq.s32.totalorder %s21, 0
    %p181 = por %p179, %p180
    %p182 = scmp.ne.s32.totalorder %s174, %s176
    %p183 = scmp.eq.s32.totalorder %s26, 1
    %p184 = por %p182, %p183
    %p185 = scmp.ne.s32.totalorder %s176, %s177
    %p186 = scmp.eq.s32.totalorder %s26, 0
    %p187 = por %p185, %p186
    %p188 = scmp.ne.s32.totalorder %s176, %s177
    %p189 = scmp.eq.s32.totalorder %s27, 1
    %p190 = por %p188, %p189
    %p192 = scmp.ne.s32.totalorder %s177, %s191
    %p193 = scmp.eq.s32.totalorder %s27, 0
    %p194 = por %p192, %p193
    %s196 = sadd.s32 %s195, 1
    %p199 = scmp.eq.s32.totalorder %s21, 1
    %p200 = scmp.ne.s32.totalorder %s195, %s197
    %p201 = scmp.eq.s32.totalorder %s21, 0
    %p202 = por %p200, %p201
    %p203 = scmp.ne.s32.totalorder %s195, %s197
    %p204 = scmp.eq.s32.totalorder %s26, 1
    %p205 = por %p203, %p204
    %p206 = scmp.ne.s32.totalorder %s197, %s198
    %p207 = scmp.eq.s32.totalorder %s26, 0
    %p208 = por %p206, %p207
    %p209 = scmp.ne.s32.totalorder %s197, %s198
    %p210 = scmp.eq.s32.totalorder %s27, 1
    %p211 = por %p209, %p210
    %p213 = scmp.ne.s32.totalorder %s198, %s212
    %p214 = scmp.eq.s32.totalorder %s27, 0
    %p215 = por %p213, %p214
    %s217 = sadd.s32 %s216, 1
    %p220 = scmp.eq.s32.totalorder %s21, 1
    %p221 = scmp.ne.s32.totalorder %s216, %s218
    %p222 = scmp.eq.s32.totalorder %s21, 0
    %p223 = por %p221, %p222
    %p224 = scmp.ne.s32.totalorder %s216, %s218
    %p225 = scmp.eq.s32.totalorder %s26, 1
    %p226 = por %p224, %p225
    %p227 = scmp.ne.s32.totalorder %s218, %s219
    %p228 = scmp.eq.s32.totalorder %s26, 0
    %p229 = por %p227, %p228
    %p230 = scmp.ne.s32.totalorder %s218, %s219
    %p231 = scmp.eq.s32.totalorder %s27, 1
    %p232 = por %p230, %p231
    %p234 = scmp.ne.s32.totalorder %s219, %s233
    %p235 = scmp.eq.s32.totalorder %s27, 0
    %p236 = por %p234, %p235
    %s238 = sadd.s32 %s237, 1
    %p241 = scmp.eq.s32.totalorder %s21, 1
    %p242 = scmp.ne.s32.totalorder %s237, %s239
    %p243 = scmp.eq.s32.totalorder %s21, 0
    %p244 = por %p242, %p243
    %p245 = scmp.ne.s32.totalorder %s237, %s239
    %p246 = scmp.eq.s32.totalorder %s26, 1
    %p247 = por %p245, %p246
    %p248 = scmp.ne.s32.totalorder %s239, %s240
    %p249 = scmp.eq.s32.totalorder %s26, 0
    %p250 = por %p248, %p249
    %p251 = scmp.ne.s32.totalorder %s239, %s240
    %p252 = scmp.eq.s32.totalorder %s27, 1
    %p253 = por %p251, %p252
    %p255 = scmp.ne.s32.totalorder %s240, %s254
    %p256 = scmp.eq.s32.totalorder %s27, 0
    %p257 = por %p255, %p256
    %s259 = sadd.s32 %s258, 1
    %p262 = scmp.eq.s32.totalorder %s21, 1
    %p263 = scmp.ne.s32.totalorder %s258, %s260
    %p264 = scmp.eq.s32.totalorder %s21, 0
    %p265 = por %p263, %p264
    %p266 = scmp.ne.s32.totalorder %s258, %s260
    %p267 = scmp.eq.s32.totalorder %s26, 1
    %p268 = por %p266, %p267
    %p269 = scmp.ne.s32.totalorder %s260, %s261
    %p270 = scmp.eq.s32.totalorder %s26, 0
    %p271 = por %p269, %p270
    %p272 = scmp.ne.s32.totalorder %s260, %s261
    %p273 = scmp.eq.s32.totalorder %s27, 1
    %p274 = por %p272, %p273
    %p276 = scmp.ne.s32.totalorder %s261, %s275
    %p277 = scmp.eq.s32.totalorder %s27, 0
    %p278 = por %p276, %p277
    %s280 = sadd.s32 %s279, 1
    %p283 = scmp.eq.s32.totalorder %s21, 1
    %p284 = scmp.ne.s32.totalorder %s279, %s281
    %p285 = scmp.eq.s32.totalorder %s21, 0
    %p286 = por %p284, %p285
    %p287 = scmp.ne.s32.totalorder %s279, %s281
    %p288 = scmp.eq.s32.totalorder %s26, 1
    %p289 = por %p287, %p288
    %p290 = scmp.ne.s32.totalorder %s281, %s282
    %p291 = scmp.eq.s32.totalorder %s26, 0
    %p292 = por %p290, %p291
    %p293 = scmp.ne.s32.totalorder %s281, %s282
    %p294 = scmp.eq.s32.totalorder %s27, 1
    %p295 = por %p293, %p294
    %p297 = scmp.ne.s32.totalorder %s282, %s296
    %p298 = scmp.eq.s32.totalorder %s27, 0
    %p299 = por %p297, %p298
    %s301 = sadd.s32 %s300, 1
    %p304 = scmp.eq.s32.totalorder %s21, 1
    %p305 = scmp.ne.s32.totalorder %s300, %s302
    %p306 = scmp.eq.s32.totalorder %s21, 0
    %p307 = por %p305, %p306
    %p308 = scmp.ne.s32.totalorder %s300, %s302
    %p309 = scmp.eq.s32.totalorder %s26, 1
    %p310 = por %p308, %p309
    %p311 = scmp.ne.s32.totalorder %s302, %s303
    %p312 = scmp.eq.s32.totalorder %s26, 0
    %p313 = por %p311, %p312
    %p314 = scmp.ne.s32.totalorder %s302, %s303
    %p315 = scmp.eq.s32.totalorder %s27, 1
    %p316 = por %p314, %p315
    %p318 = scmp.ne.s32.totalorder %s303, %s317
    %p319 = scmp.eq.s32.totalorder %s27, 0
    %p320 = por %p318, %p319
    %s321 = ssub.s32 %s29, %s36
    %p322 = scmp.eq.s32.totalorder %s321, 0
    %s324 = sadd.s32 %s323, 1
    %s325 = scalar_select %p322, %s323, %s324
    %p328 = pneg %p322
    %p329 = scmp.eq.s32.totalorder %s21, 1
    %p330 = por %p328, %p329
    %p331 = scmp.ne.s32.totalorder %s323, %s326
    %p332 = scmp.eq.s32.totalorder %s21, 0
    %p333 = por %p331, %p332
    %p334 = scmp.ne.s32.totalorder %s323, %s326
    %p335 = scmp.eq.s32.totalorder %s26, 1
    %p336 = por %p334, %p335
    %p337 = scmp.ne.s32.totalorder %s326, %s327
    %p338 = scmp.eq.s32.totalorder %s26, 0
    %p339 = por %p337, %p338
    %p340 = scmp.ne.s32.totalorder %s326, %s327
    %p341 = scmp.eq.s32.totalorder %s27, 1
    %p342 = por %p340, %p341
    %p344 = scmp.ne.s32.totalorder %s327, %s343
    %p345 = scmp.eq.s32.totalorder %s27, 0
    %p346 = por %p344, %p345
    %s347 = ssub.s32 %s29, %s36
    %p348 = scmp.eq.s32.totalorder %s347, 0
    %s350 = sadd.s32 %s349, 1
    %s351 = scalar_select %p348, %s349, %s350
    %p354 = pneg %p348
    %p355 = scmp.eq.s32.totalorder %s21, 1
    %p356 = por %p354, %p355
    %p357 = scmp.ne.s32.totalorder %s349, %s352
    %p358 = scmp.eq.s32.totalorder %s21, 0
    %p359 = por %p357, %p358
    %p360 = scmp.ne.s32.totalorder %s349, %s352
    %p361 = scmp.eq.s32.totalorder %s26, 1
    %p362 = por %p360, %p361
    %p363 = scmp.ne.s32.totalorder %s352, %s353
    %p364 = scmp.eq.s32.totalorder %s26, 0
    %p365 = por %p363, %p364
    %p366 = scmp.ne.s32.totalorder %s352, %s353
    %p367 = scmp.eq.s32.totalorder %s27, 1
    %p368 = por %p366, %p367
    %p370 = scmp.ne.s32.totalorder %s353, %s369
    %p371 = scmp.eq.s32.totalorder %s27, 0
    %p372 = por %p370, %p371
    %s373 = ssub.s32 %s29, %s36
    %s374 = ssub.s32 %s28, %s40
    %s375 = sor.u32 %s373, %s374
    %p376 = scmp.eq.s32.totalorder %s375, 0
    %s378 = sadd.s32 %s377, 1
    %s379 = scalar_select %p376, %s377, %s378
    %p382 = pneg %p376
    %p383 = scmp.eq.s32.totalorder %s21, 1
    %p384 = por %p382, %p383
    %p385 = scmp.ne.s32.totalorder %s377, %s380
    %p386 = scmp.eq.s32.totalorder %s21, 0
    %p387 = por %p385, %p386
    %p388 = scmp.ne.s32.totalorder %s377, %s380
    %p389 = scmp.eq.s32.totalorder %s26, 1
    %p390 = por %p388, %p389
    %p391 = scmp.ne.s32.totalorder %s380, %s381
    %p392 = scmp.eq.s32.totalorder %s26, 0
    %p393 = por %p391, %p392
    %p394 = scmp.ne.s32.totalorder %s380, %s381
    %p395 = scmp.eq.s32.totalorder %s27, 1
    %p396 = por %p394, %p395
    %p398 = scmp.ne.s32.totalorder %s381, %s397
    %p399 = scmp.eq.s32.totalorder %s27, 0
    %p400 = por %p398, %p399
    %p401 = scmp.le.s32.totalorder 1, %s21
    %p402 = scmp.lt.s32.totalorder %s21, 3
    %p403 = pnand %p401, %p402
    %p404 = pneg %p403
    // Predicated region
    $region9: #{mm_mamba_encoder_layer.1} parent=5 // pred_check
      _
    $region10: #{mm_mamba_encoder_layer.1} parent=5 // pred_check_branch
      %406 = sbr.rel (%p403) target = $region12
    $region11: #{mm_mamba_encoder_layer.1} parent=5 // pred_region
      %s407 = ssub.s32 %s21, 1
      // Predicated region
      $region13: #{mm_mamba_encoder_layer.1} parent=11 // pred_check
        %p408 = pneg %p82
      $region14: #{mm_mamba_encoder_layer.1} parent=11 // pred_check_branch
        %410 = sbr.rel (%p408) target = $region16
      $region15: #{mm_mamba_encoder_layer.1} parent=11 // pred_region
        _
      $region16: #{mm_mamba_encoder_layer.1} parent=11 // pred_fallthru
        _
      // Predicated region
      $region17: #{mm_mamba_encoder_layer.1} parent=11 // pred_check
        %p411 = pneg %p103
      $region18: #{mm_mamba_encoder_layer.1} parent=11 // pred_check_branch
        %413 = sbr.rel (%p411) target = $region20
      $region19: #{mm_mamba_encoder_layer.1} parent=11 // pred_region
        _
      $region20: #{mm_mamba_encoder_layer.1} parent=11 // pred_fallthru
        _
      // Predicated region
      $region21: #{mm_mamba_encoder_layer.1} parent=11 // pred_check
        %p414 = pneg %p124
      $region22: #{mm_mamba_encoder_layer.1} parent=11 // pred_check_branch
        %416 = sbr.rel (%p414) target = $region24
      $region23: #{mm_mamba_encoder_layer.1} parent=11 // pred_region
        _
      $region24: #{mm_mamba_encoder_layer.1} parent=11 // pred_fallthru
        _
      // Predicated region
      $region25: #{mm_mamba_encoder_layer.1} parent=11 // pred_check
        %p417 = pneg %p145
      $region26: #{mm_mamba_encoder_layer.1} parent=11 // pred_check_branch
        %419 = sbr.rel (%p417) target = $region28
      $region27: #{mm_mamba_encoder_layer.1} parent=11 // pred_region
        _
      $region28: #{mm_mamba_encoder_layer.1} parent=11 // pred_fallthru
        _
      // Predicated region
      $region29: #{mm_mamba_encoder_layer.1} parent=11 // pred_check
        %p420 = pneg %p166
      $region30: #{mm_mamba_encoder_layer.1} parent=11 // pred_check_branch
        %422 = sbr.rel (%p420) target = $region32
      $region31: #{mm_mamba_encoder_layer.1} parent=11 // pred_region
        _
      $region32: #{mm_mamba_encoder_layer.1} parent=11 // pred_fallthru
        _
      // Predicated region
      $region33: #{mm_mamba_encoder_layer.1} parent=11 // pred_check
        %p423 = pneg %p187
      $region34: #{mm_mamba_encoder_layer.1} parent=11 // pred_check_branch
        %425 = sbr.rel (%p423) target = $region36
      $region35: #{mm_mamba_encoder_layer.1} parent=11 // pred_region
        _
      $region36: #{mm_mamba_encoder_layer.1} parent=11 // pred_fallthru
        _
      // Predicated region
      $region37: #{mm_mamba_encoder_layer.1} parent=11 // pred_check
        %p426 = pneg %p208
      $region38: #{mm_mamba_encoder_layer.1} parent=11 // pred_check_branch
        %428 = sbr.rel (%p426) target = $region40
      $region39: #{mm_mamba_encoder_layer.1} parent=11 // pred_region
        _
      $region40: #{mm_mamba_encoder_layer.1} parent=11 // pred_fallthru
        _
      // Predicated region
      $region41: #{mm_mamba_encoder_layer.1} parent=11 // pred_check
        %p429 = pneg %p229
      $region42: #{mm_mamba_encoder_layer.1} parent=11 // pred_check_branch
        %431 = sbr.rel (%p429) target = $region44
      $region43: #{mm_mamba_encoder_layer.1} parent=11 // pred_region
        _
      $region44: #{mm_mamba_encoder_layer.1} parent=11 // pred_fallthru
        _
      // Predicated region
      $region45: #{mm_mamba_encoder_layer.1} parent=11 // pred_check
        %p432 = pneg %p250
      $region46: #{mm_mamba_encoder_layer.1} parent=11 // pred_check_branch
        %434 = sbr.rel (%p432) target = $region48
      $region47: #{mm_mamba_encoder_layer.1} parent=11 // pred_region
        _
      $region48: #{mm_mamba_encoder_layer.1} parent=11 // pred_fallthru
        _
      // Predicated region
      $region49: #{mm_mamba_encoder_layer.1} parent=11 // pred_check
        %p435 = pneg %p271
      $region50: #{mm_mamba_encoder_layer.1} parent=11 // pred_check_branch
        %437 = sbr.rel (%p435) target = $region52
      $region51: #{mm_mamba_encoder_layer.1} parent=11 // pred_region
        _
      $region52: #{mm_mamba_encoder_layer.1} parent=11 // pred_fallthru
        _
      // Predicated region
      $region53: #{mm_mamba_encoder_layer.1} parent=11 // pred_check
        %p438 = pneg %p292
      $region54: #{mm_mamba_encoder_layer.1} parent=11 // pred_check_branch
        %440 = sbr.rel (%p438) target = $region56
      $region55: #{mm_mamba_encoder_layer.1} parent=11 // pred_region
        _
      $region56: #{mm_mamba_encoder_layer.1} parent=11 // pred_fallthru
        _
      // Predicated region
      $region57: #{mm_mamba_encoder_layer.1} parent=11 // pred_check
        %p441 = pneg %p313
      $region58: #{mm_mamba_encoder_layer.1} parent=11 // pred_check_branch
        %443 = sbr.rel (%p441) target = $region60
      $region59: #{mm_mamba_encoder_layer.1} parent=11 // pred_region
        _
      $region60: #{mm_mamba_encoder_layer.1} parent=11 // pred_fallthru
        _
    $region12: #{mm_mamba_encoder_layer.1} parent=5 // pred_fallthru
      _
    %p444 = scmp.lt.s32.totalorder %s21, 2
    // Predicated region
    $region61: #{mm_mamba_encoder_layer.1} parent=5 // pred_check
      %p445 = pneg %p444
    $region62: #{mm_mamba_encoder_layer.1} parent=5 // pred_check_branch
      %447 = sbr.rel (%p445) target = $region64
    $region63: #{mm_mamba_encoder_layer.1} parent=5 // pred_region
      // Predicated region
      $region65: #{mm_mamba_encoder_layer.1} parent=63 // pred_check
        %p448 = pneg %p55
      $region66: #{mm_mamba_encoder_layer.1} parent=63 // pred_check_branch
        %450 = sbr.rel (%p448) target = $region68
      $region67: #{mm_mamba_encoder_layer.1} parent=63 // pred_region
        %s451 = smul.u32 2, %s28
        %p452 = scmp.lt.s32.totalorder %s29, 1
        %s453 = scalar_select %p452, %s29, 1
        %p454 = scmp.lt.s32.totalorder %s451, 1
        %s455 = scalar_select %p454, %s451, 1
        %s456 = smul.addr %s453, 2
        %s457 = sadd.s32 %s455, %s456
        %s458 = smul.addr %s457, 8
        %s459 = scalar_lea.vmem %s0, %s458
        %s460 = smul.u32 2, %s28
      $region68: #{mm_mamba_encoder_layer.1} parent=63 // pred_fallthru
        _
      // Predicated region
      $region69: #{mm_mamba_encoder_layer.1} parent=63 // pred_check
        %p461 = pneg %p333
      $region70: #{mm_mamba_encoder_layer.1} parent=63 // pred_check_branch
        %463 = sbr.rel (%p461) target = $region72
      $region71: #{mm_mamba_encoder_layer.1} parent=63 // pred_region
        %p464 = scmp.lt.s32.totalorder %s29, 1
        %s465 = scalar_select %p464, %s29, 1
        %s466 = scalar_lea.vmem %s13, %s465
      $region72: #{mm_mamba_encoder_layer.1} parent=63 // pred_fallthru
        _
      // Predicated region
      $region73: #{mm_mamba_encoder_layer.1} parent=63 // pred_check
        %p467 = pneg %p359
      $region74: #{mm_mamba_encoder_layer.1} parent=63 // pred_check_branch
        %469 = sbr.rel (%p467) target = $region76
      $region75: #{mm_mamba_encoder_layer.1} parent=63 // pred_region
        %p470 = scmp.lt.s32.totalorder %s29, 1
        %s471 = scalar_select %p470, %s29, 1
        %s472 = scalar_lea.vmem %s14, %s471
      $region76: #{mm_mamba_encoder_layer.1} parent=63 // pred_fallthru
        _
    $region64: #{mm_mamba_encoder_layer.1} parent=5 // pred_fallthru
      _
    %p473 = scmp.le.s32.totalorder 1, %s21
    %p474 = scmp.lt.s32.totalorder %s21, 3
    %p475 = pnand %p473, %p474
    %p476 = pneg %p475
    // Predicated region
    $region77: #{mm_mamba_encoder_layer.1} parent=5 // pred_check
      _
    $region78: #{mm_mamba_encoder_layer.1} parent=5 // pred_check_branch
      %478 = sbr.rel (%p475) target = $region80
    $region79: #{mm_mamba_encoder_layer.1} parent=5 // pred_region
      %s479 = ssub.s32 %s21, 1
      %s480 = smul.u32 2, %s30
      %p481 = scmp.lt.s32.totalorder %s31, 1
      %s482 = scalar_select %p481, %s31, 1
      %p483 = scmp.lt.s32.totalorder %s480, 1
      %s484 = scalar_select %p483, %s480, 1
      %s485 = smul.addr %s482, 2
      %s486 = sadd.s32 %s484, %s485
      %s487 = smul.addr %s486, 8
      %s488 = scalar_lea.vmem %s0, %s487
      %p489 = pneg %p61
      %p490 = pneg %p58
      %p491 = pneg %p82
      %p492 = pneg %p79
      %p493 = pneg %p103
      %p494 = pneg %p100
      %p495 = pneg %p124
      %p496 = pneg %p121
      %p497 = pneg %p145
      %p498 = pneg %p142
      %p499 = pneg %p166
      %p500 = pneg %p163
      %p501 = pneg %p187
      %p502 = pneg %p184
      %p503 = pneg %p208
      %p504 = pneg %p205
      %p505 = pneg %p229
      %p506 = pneg %p226
      %p507 = pneg %p250
      %p508 = pneg %p247
      %p509 = pneg %p271
      %p510 = pneg %p268
      %p511 = pneg %p292
      %p512 = pneg %p289
      %p513 = pneg %p313
      %p514 = pneg %p310
      %p515 = scmp.lt.s32.totalorder %s31, 1
      %s516 = scalar_select %p515, %s31, 1
      %s517 = scalar_lea.vmem %s13, %s516
      %p518 = pneg %p339
      %p519 = pneg %p336
      %p520 = scmp.lt.s32.totalorder %s31, 1
      %s521 = scalar_select %p520, %s31, 1
      %s522 = scalar_lea.vmem %s14, %s521
      %p523 = pneg %p365
      %p524 = pneg %p362
      %p525 = pneg %p393
      %p526 = pneg %p390
      %s527 = smul.u32 2, %s30
      %p528 = scmp.lt.s32.totalorder %s31, 1
      %s529 = scalar_select %p528, %s31, 1
      %p530 = scmp.lt.s32.totalorder %s527, 1
      %s531 = scalar_select %p530, %s527, 1
      %s532 = smul.addr %s529, 2
      %s533 = sadd.s32 %s531, %s532
      %s534 = smul.addr %s533, 8
      %s535 = scalar_lea.vmem %s15, %s534
      %s536 = smul.u32 2, %s30
      %p537 = scmp.lt.s32.totalorder %s31, 1
      %s538 = scalar_select %p537, %s31, 1
      %p539 = scmp.lt.s32.totalorder %s536, 1
      %s540 = scalar_select %p539, %s536, 1
      %s541 = smul.addr %s538, 2
      %s542 = sadd.s32 %s540, %s541
      %s543 = smul.addr %s542, 8
      %s544 = scalar_lea.vmem %s0, %s543
      %s545 = smul.u32 2, %s30
      %p546 = scmp.lt.s32.totalorder %s31, 1
      %s547 = scalar_select %p546, %s31, 1
      %s548 = scalar_lea.vmem %s13, %s547
      %p549 = scmp.lt.s32.totalorder %s31, 1
      %s550 = scalar_select %p549, %s31, 1
      %s551 = scalar_lea.vmem %s14, %s550
      %s552 = smul.u32 2, %s30
      %p553 = scmp.lt.s32.totalorder %s31, 1
      %s554 = scalar_select %p553, %s31, 1
      %p555 = scmp.lt.s32.totalorder %s552, 1
      %s556 = scalar_select %p555, %s552, 1
      %s557 = smul.addr %s554, 2
      %s558 = sadd.s32 %s556, %s557
      %s559 = smul.addr %s558, 8
      %s560 = scalar_lea.vmem %s15, %s559
      %s561 = smul.u32 2, %s30
      %v563 = vld [vmem:[%s544] sm:$0xff]
      %v564 = vld [vmem:[%s544 + $0x8] sm:$0xff]
      %v565 = vpack.c.bf16 %v564, %v563
      %v566 = vld [vmem:[%s1] sm:$0xf]
      %v567 = vld [vmem:[%s1 + $0x4] sm:$0xf]
      %v568 = vld [vmem:[%s1 + $0x8] sm:$0xf]
      %v569 = vld [vmem:[%s1 + $0xc] sm:$0xf]
      %v570 = vld [vmem:[%s2] sm:$0x1]
      %v572 = vlaneseq
      %v573 = vshrl.u32 %v572, 7
      %v574 = vsub.s32 0, %v573
      %v575 = vrot.slane %v570, %v574
      %v581 = vunpack.c.l.b16 %v566
      %v582 = vunpack.c.l.b16 %v567
      %v583 = vunpack.c.l.b16 %v568
      %v584 = vunpack.c.l.b16 %v569
      %v585 = vpack.c.b16 %v582, %v581
      %v586 = vpack.c.b16 %v584, %v583
      %vm589 = vcmask 261120
      %v591 = vsel %vm589, %v565, 0
      %593 = vmatprep.subr.bf16.mxu0 0
      %594 = vmatpush1.bf16.msra.mxu0 %v585
      %595 = vmatprep.subr.bf16.mxu0 0
      %596 = vmatpush1.bf16.msra.mxu0 %v586
      %597 = vmatprep.subr.bf16.mxu0 0
      %598 = vmatpush1.bf16.msra.mxu0 0
      %599 = vmatprep.subr.bf16.mxu0 0
      %600 = vmatpush1.bf16.msra.mxu0 0
      %601 = vmatprep.subr.bf16.mxu0 0
      %602 = vmatpush1.bf16.msra.mxu0 0
      %603 = vmatprep.subr.bf16.mxu0 0
      %604 = vmatpush1.bf16.msra.mxu0 0
      %605 = vmatprep.subr.bf16.mxu0 0
      %606 = vmatpush1.bf16.msra.mxu0 0
      %607 = vmatprep.subr.bf16.mxu0 0
      %608 = vmatpush1.bf16.msra.mxu0 0
      %609 = vmatprep.subr.bf16.mxu0 0
      %610 = vmatpush1.bf16.msra.mxu0 0
      %611 = vmatprep.subr.bf16.mxu0 0
      %612 = vmatpush1.bf16.msra.mxu0 0
      %613 = vmatprep.subr.bf16.mxu0 0
      %614 = vmatpush1.bf16.msra.mxu0 0
      %615 = vmatprep.subr.bf16.mxu0 0
      %616 = vmatpush1.bf16.msra.mxu0 0
      %617 = vmatprep.subr.bf16.mxu0 0
      %618 = vmatpush1.bf16.msra.mxu0 0
      %619 = vmatprep.subr.bf16.mxu0 0
      %620 = vmatpush1.bf16.msra.mxu0 0
      %621 = vmatprep.subr.bf16.mxu0 0
      %622 = vmatpush1.bf16.msra.mxu0 0
      %623 = vmatprep.subr.bf16.mxu0 0
      %624 = vmatpush1.bf16.msra.mxu0 0
      %625 = vmatprep.mubr.bf16.mxu0 0
      %626 = vmatmul.mubr.bf16.gmra.mrb[0].mxu0 %v591
      %v627 = vpop.f32.mrb[0].mxu0
      %v628 = vadd.f32 %v575, %v627
      %v629 = vpop.f32.mrb[0].mxu0
      %v630 = vpop.f32.mrb[0].mxu0
      %v631 = vadd.f32 %v575, %v630
      %v632 = vpop.f32.mrb[0].mxu0
      %633 = vdwg.mxu0
      %636 = vrot.lane.b32.xlu0 %v628, 64
      %v637 = vpop.permute.xlu0 %636
      %638 = vrot.lane.b32.xlu0 %v631, 64
      %v639 = vpop.permute.xlu0 %638
      %vm642 = vcmask 523264
      %643 = vst.msk [vmem:[#allocation5] sm:$0xff] %vm642, %v637
      %644 = vst.msk [vmem:[#allocation5 + $0x8] sm:$0xff] %vm642, %v639
      %v645 = vrot.slane %v628, 5
      %v646 = vrot.slane %v631, 5
      %vm649 = vcmask 1042432
      %v650 = vsel %vm649, 0.0, %v645
      %v651 = vsel %vm649, 0.0, %v646
      %v652 = vsel %vm649, %v645, 0.0
      %v653 = vsel %vm649, %v646, 0.0
      %v654 = vld [vmem:[%s3] sm:$0xf]
      %s655 = scalar_lea.vmem %s3, 4
      %v656 = vld [vmem:[%s655] sm:$0xf]
      %v657 = vlaneseq
      %v658 = vshrl.u32 %v657, 7
      %v659 = vsub.s32 0, %v658
      %v660 = vrot.slane %v654, %v659
      %v661 = vmul.f32 %v650, %v660
      %v662 = vmul.f32 %v651, %v660
      %v663 = vadd.f32 %v661, 0.0
      %v664 = vadd.f32 %v662, 0.0
      %v665 = vlaneseq
      %v666 = vshrl.u32 %v665, 7
      %v667 = vsub.s32 0, %v666
      %v668 = vrot.slane %v656, %v667
      %v669 = vmul.f32 %v650, %v668
      %v670 = vmul.f32 %v652, %v668
      %v671 = vmul.f32 %v651, %v668
      %v672 = vmul.f32 %v653, %v668
      %v673 = vadd.f32 %v669, 0.0
      %v674 = vadd.f32 %v670, 0.0
      %v675 = vadd.f32 %v671, 0.0
      %v676 = vadd.f32 %v672, 0.0
      %v677 = vlaneseq
      %v678 = vshrl.u32 %v677, 7
      %v679 = vsub.s32 1, %v678
      %v680 = vrot.slane %v654, %v679
      %v681 = vmul.f32 %v650, %v680
      %v682 = vmul.f32 %v652, %v680
      %v683 = vmul.f32 %v651, %v680
      %v684 = vmul.f32 %v653, %v680
      %vm689 = vcmask 1046528
      %v690 = vrot.slane %v681, 1
      %v691 = vrot.slane %v682, 1
      %v692 = vsel %vm689, %v690, %v691
      %v693 = vrot.slane %v683, 1
      %v694 = vrot.slane %v684, 1
      %v695 = vsel %vm689, %v693, %v694
      %v698 = vadd.f32 %v663, %v692
      %v699 = vadd.f32 %v664, %v695
      %v700 = vlaneseq
      %v701 = vshrl.u32 %v700, 7
      %v702 = vsub.s32 1, %v701
      %v703 = vrot.slane %v656, %v702
      %v704 = vmul.f32 %v650, %v703
      %v705 = vmul.f32 %v652, %v703
      %v706 = vmul.f32 %v651, %v703
      %v707 = vmul.f32 %v653, %v703
      %v712 = vrot.slane %v704, 1
      %v713 = vrot.slane %v705, 1
      %v714 = vsel %vm689, %v712, %v713
      %v715 = vrot.slane %v706, 1
      %v716 = vrot.slane %v707, 1
      %v717 = vsel %vm689, %v715, %v716
      %v722 = vadd.f32 %v673, %v714
      %v723 = vadd.f32 %v674, %v713
      %v724 = vadd.f32 %v675, %v717
      %v725 = vadd.f32 %v676, %v716
      %v726 = vlaneseq
      %v727 = vshrl.u32 %v726, 7
      %v728 = vsub.s32 2, %v727
      %v729 = vrot.slane %v654, %v728
      %v730 = vmul.f32 %v650, %v729
      %v731 = vmul.f32 %v652, %v729
      %v732 = vmul.f32 %v651, %v729
      %v733 = vmul.f32 %v653, %v729
      %vm738 = vcmask 1045504
      %v739 = vrot.slane %v730, 2
      %v740 = vrot.slane %v731, 2
      %v741 = vsel %vm738, %v739, %v740
      %v742 = vrot.slane %v732, 2
      %v743 = vrot.slane %v733, 2
      %v744 = vsel %vm738, %v742, %v743
      %v747 = vadd.f32 %v698, %v741
      %v748 = vadd.f32 %v699, %v744
      %v749 = vlaneseq
      %v750 = vshrl.u32 %v749, 7
      %v751 = vsub.s32 2, %v750
      %v752 = vrot.slane %v656, %v751
      %v753 = vmul.f32 %v650, %v752
      %v754 = vmul.f32 %v652, %v752
      %v755 = vmul.f32 %v651, %v752
      %v756 = vmul.f32 %v653, %v752
      %v761 = vrot.slane %v753, 2
      %v762 = vrot.slane %v754, 2
      %v763 = vsel %vm738, %v761, %v762
      %v764 = vrot.slane %v755, 2
      %v765 = vrot.slane %v756, 2
      %v766 = vsel %vm738, %v764, %v765
      %v771 = vadd.f32 %v722, %v763
      %v772 = vadd.f32 %v723, %v762
      %v773 = vadd.f32 %v724, %v766
      %v774 = vadd.f32 %v725, %v765
      %v775 = vlaneseq
      %v776 = vshrl.u32 %v775, 7
      %v777 = vsub.s32 3, %v776
      %v778 = vrot.slane %v654, %v777
      %v779 = vmul.f32 %v650, %v778
      %v780 = vmul.f32 %v652, %v778
      %v781 = vmul.f32 %v651, %v778
      %v782 = vmul.f32 %v653, %v778
      %vm787 = vcmask 1044480
      %v788 = vrot.slane %v779, 3
      %v789 = vrot.slane %v780, 3
      %v790 = vsel %vm787, %v788, %v789
      %v791 = vrot.slane %v781, 3
      %v792 = vrot.slane %v782, 3
      %v793 = vsel %vm787, %v791, %v792
      %v796 = vadd.f32 %v747, %v790
      %v797 = vadd.f32 %v748, %v793
      %v798 = vlaneseq
      %v799 = vshrl.u32 %v798, 7
      %v800 = vsub.s32 3, %v799
      %v801 = vrot.slane %v656, %v800
      %v802 = vmul.f32 %v650, %v801
      %v803 = vmul.f32 %v652, %v801
      %v804 = vmul.f32 %v651, %v801
      %v805 = vmul.f32 %v653, %v801
      %v810 = vrot.slane %v802, 3
      %v811 = vrot.slane %v803, 3
      %v812 = vsel %vm787, %v810, %v811
      %v813 = vrot.slane %v804, 3
      %v814 = vrot.slane %v805, 3
      %v815 = vsel %vm787, %v813, %v814
      %v820 = vadd.f32 %v771, %v812
      %v821 = vadd.f32 %v772, %v811
      %v822 = vadd.f32 %v773, %v815
      %v823 = vadd.f32 %v774, %v814
      %v828 = vrot.slane %v820, 3
      %v829 = vrot.slane %v821, 3
      %v830 = vsel %vm787, %v828, %v829
      %v831 = vrot.slane %v822, 3
      %v832 = vrot.slane %v823, 3
      %v833 = vsel %vm787, %v831, %v832
      %834 = vrot.lane.b32.xlu0 %v830, 64
      %v835 = vpop.permute.xlu0 %834
      %836 = vrot.lane.b32.xlu0 %v833, 64
      %v837 = vpop.permute.xlu0 %836
      %v840 = vsel %vm642, %v796, %v835
      %v841 = vsel %vm642, %v797, %v837
      %v842 = vld [vmem:[%s4] sm:$0x1]
      %v844 = vlaneseq
      %v845 = vshrl.u32 %v844, 7
      %v846 = vsub.s32 0, %v845
      %v847 = vrot.slane %v842, %v846
      %v849 = vadd.f32 %v840, %v847
      %v850 = vadd.f32 %v841, %v847
      %v851 = vxor.u32 %v849, 2147483648
      %v852 = vxor.u32 %v850, 2147483648
      %v853 = vmul.f32 %v851, 1.442695
      %v854 = vpow.pop %v853
      %v855 = vmul.f32 %v852, 1.442695
      %v856 = vpow.pop %v855
      %v857 = vadd.f32 %v854, 1.0
      %v858 = vadd.f32 %v856, 1.0
      %v859 = vrcp.pop %v857
      %v860 = vmul.f32 1.0, %v859
      %v861 = vrcp.pop %v858
      %v862 = vmul.f32 1.0, %v861
      %v863 = vmul.f32 %v849, %v860
      %v864 = vmul.f32 %v850, %v862
      %865 = vst [vmem:[#allocation2] sm:$0xff] %v863
      %866 = vst [vmem:[#allocation2 + $0x8] sm:$0xff] %v864
      %v867 = vpack.c.bf16 %v864, %v863
      %v868 = vld [vmem:[%s5] sm:$0xf]
      %v869 = vld [vmem:[%s5 + $0x4] sm:$0xf]
      %v870 = vld [vmem:[%s5 + $0x8] sm:$0xf]
      %v871 = vld [vmem:[%s5 + $0xc] sm:$0xf]
      %v872 = vld [vmem:[%s5 + $0x10] sm:$0xf]
      %v873 = vld [vmem:[%s5 + $0x14] sm:$0xf]
      %v874 = vld [vmem:[%s5 + $0x18] sm:$0xf]
      %v875 = vld [vmem:[%s5 + $0x1c] sm:$0xf]
      %v876 = vld [vmem:[%s5 + $0x20] sm:$0xf]
      %v877 = vld [vmem:[%s5 + $0x24] sm:$0xf]
      %v878 = vld [vmem:[%s5 + $0x28] sm:$0xf]
      %v879 = vld [vmem:[%s5 + $0x2c] sm:$0xf]
      %v880 = vld [vmem:[%s5 + $0x30] sm:$0xf]
      %v881 = vld [vmem:[%s5 + $0x34] sm:$0xf]
      %v882 = vld [vmem:[%s5 + $0x38] sm:$0xf]
      %v883 = vld [vmem:[%s5 + $0x3c] sm:$0xf]
      %v884 = vld [vmem:[%s6] sm:$0x1]
      %v886 = vlaneseq
      %v887 = vshrl.u32 %v886, 7
      %v888 = vsub.s32 0, %v887
      %v889 = vrot.slane %v884, %v888
      %v907 = vunpack.c.l.b16 %v868
      %v908 = vunpack.c.l.b16 %v869
      %v909 = vunpack.c.l.b16 %v870
      %v910 = vunpack.c.l.b16 %v871
      %v911 = vunpack.c.l.b16 %v872
      %v912 = vunpack.c.l.b16 %v873
      %v913 = vunpack.c.l.b16 %v874
      %v914 = vunpack.c.l.b16 %v875
      %v915 = vunpack.c.l.b16 %v876
      %v916 = vunpack.c.l.b16 %v877
      %v917 = vunpack.c.l.b16 %v878
      %v918 = vunpack.c.l.b16 %v879
      %v919 = vunpack.c.l.b16 %v880
      %v920 = vunpack.c.l.b16 %v881
      %v921 = vunpack.c.l.b16 %v882
      %v922 = vunpack.c.l.b16 %v883
      %v923 = vpack.c.b16 %v908, %v907
      %v924 = vpack.c.b16 %v910, %v909
      %v925 = vpack.c.b16 %v912, %v911
      %v926 = vpack.c.b16 %v914, %v913
      %v927 = vpack.c.b16 %v916, %v915
      %v928 = vpack.c.b16 %v918, %v917
      %v929 = vpack.c.b16 %v920, %v919
      %v930 = vpack.c.b16 %v922, %v921
      %939 = vmatprep.subr.bf16.mxu0 0
      %940 = vmatpush1.bf16.msra.mxu0 %v923
      %941 = vmatprep.subr.bf16.mxu0 0
      %942 = vmatpush1.bf16.msra.mxu0 %v924
      %943 = vmatprep.subr.bf16.mxu0 0
      %944 = vmatpush1.bf16.msra.mxu0 %v925
      %945 = vmatprep.subr.bf16.mxu0 0
      %946 = vmatpush1.bf16.msra.mxu0 %v926
      %947 = vmatprep.subr.bf16.mxu0 0
      %948 = vmatpush1.bf16.msra.mxu0 %v927
      %949 = vmatprep.subr.bf16.mxu0 0
      %950 = vmatpush1.bf16.msra.mxu0 %v928
      %951 = vmatprep.subr.bf16.mxu0 0
      %952 = vmatpush1.bf16.msra.mxu0 %v929
      %953 = vmatprep.subr.bf16.mxu0 0
      %954 = vmatpush1.bf16.msra.mxu0 %v930
      %955 = vmatprep.subr.bf16.mxu0 0
      %956 = vmatpush1.bf16.msra.mxu0 0
      %957 = vmatprep.subr.bf16.mxu0 0
      %958 = vmatpush1.bf16.msra.mxu0 0
      %959 = vmatprep.subr.bf16.mxu0 0
      %960 = vmatpush1.bf16.msra.mxu0 0
      %961 = vmatprep.subr.bf16.mxu0 0
      %962 = vmatpush1.bf16.msra.mxu0 0
      %963 = vmatprep.subr.bf16.mxu0 0
      %964 = vmatpush1.bf16.msra.mxu0 0
      %965 = vmatprep.subr.bf16.mxu0 0
      %966 = vmatpush1.bf16.msra.mxu0 0
      %967 = vmatprep.subr.bf16.mxu0 0
      %968 = vmatpush1.bf16.msra.mxu0 0
      %969 = vmatprep.subr.bf16.mxu0 0
      %970 = vmatpush1.bf16.msra.mxu0 0
      %971 = vmatprep.mubr.bf16.mxu0 0
      %972 = vmatmul.mubr.bf16.gmra.mrb[0].mxu0 %v867
      %v973 = vpop.f32.mrb[0].mxu0
      %v974 = vadd.f32 %v889, %v973
      %v975 = vpop.f32.mrb[0].mxu0
      %v976 = vpop.f32.mrb[0].mxu0
      %v977 = vadd.f32 %v889, %v976
      %v978 = vpop.f32.mrb[0].mxu0
      %979 = vdwg.mxu0
      %982 = vrot.lane.b32.xlu0 %v974, 124
      %v983 = vpop.permute.xlu0 %982
      %984 = vrot.lane.b32.xlu0 %v977, 124
      %v985 = vpop.permute.xlu0 %984
      %988 = vst.msk [vmem:[#allocation4] sm:$0xff] %vm642, %v983
      %989 = vst.msk [vmem:[#allocation4 + $0x8] sm:$0xff] %vm642, %v985
      %v990 = vld [vmem:[%s7] sm:$0xf]
      %v991 = vld [vmem:[%s8] sm:$0x1]
      %v993 = vlaneseq
      %v994 = vshrl.u32 %v993, 7
      %v995 = vsub.s32 0, %v994
      %v996 = vrot.slane %v991, %v995
      %vm998 = vcmask 31744
      %v999 = vsel %vm998, %v974, 0
      %v1001 = vsel %vm998, %v977, 0
      %vm1003 = vcmask 1043456
      %v1005 = vsel %vm1003, %v990, 0
      %1007 = vmatprep.subr.mxu0 0.0
      %1008 = vmatpush1.msra.mxu0 %v1005
      %1009 = vmatprep.subr.mxu0 0.0
      %1010 = vmatpush1.msra.mxu0 0.0
      %1011 = vmatprep.subr.mxu0 0.0
      %1012 = vmatpush1.msra.mxu0 0.0
      %1013 = vmatprep.subr.mxu0 0.0
      %1014 = vmatpush1.msra.mxu0 0.0
      %1015 = vmatprep.subr.mxu0 0.0
      %1016 = vmatpush1.msra.mxu0 0.0
      %1017 = vmatprep.subr.mxu0 0.0
      %1018 = vmatpush1.msra.mxu0 0.0
      %1019 = vmatprep.subr.mxu0 0.0
      %1020 = vmatpush1.msra.mxu0 0.0
      %1021 = vmatprep.subr.mxu0 0.0
      %1022 = vmatpush1.msra.mxu0 0.0
      %1023 = vmatprep.subr.mxu0 0.0
      %1024 = vmatpush1.msra.mxu0 0.0
      %1025 = vmatprep.subr.mxu0 0.0
      %1026 = vmatpush1.msra.mxu0 0.0
      %1027 = vmatprep.subr.mxu0 0.0
      %1028 = vmatpush1.msra.mxu0 0.0
      %1029 = vmatprep.subr.mxu0 0.0
      %1030 = vmatpush1.msra.mxu0 0.0
      %1031 = vmatprep.subr.mxu0 0.0
      %1032 = vmatpush1.msra.mxu0 0.0
      %1033 = vmatprep.subr.mxu0 0.0
      %1034 = vmatpush1.msra.mxu0 0.0
      %1035 = vmatprep.subr.mxu0 0.0
      %1036 = vmatpush1.msra.mxu0 0.0
      %1037 = vmatprep.subr.mxu0 0.0
      %1038 = vmatpush1.msra.mxu0 0.0
      %1039 = vmatprep.subr.mxu0 0.0
      %1040 = vmatpush1.msra.mxu0 0.0
      %1041 = vmatprep.subr.mxu0 0.0
      %1042 = vmatpush1.msra.mxu0 0.0
      %1043 = vmatprep.subr.mxu0 0.0
      %1044 = vmatpush1.msra.mxu0 0.0
      %1045 = vmatprep.subr.mxu0 0.0
      %1046 = vmatpush1.msra.mxu0 0.0
      %1047 = vmatprep.subr.mxu0 0.0
      %1048 = vmatpush1.msra.mxu0 0.0
      %1049 = vmatprep.subr.mxu0 0.0
      %1050 = vmatpush1.msra.mxu0 0.0
      %1051 = vmatprep.subr.mxu0 0.0
      %1052 = vmatpush1.msra.mxu0 0.0
      %1053 = vmatprep.subr.mxu0 0.0
      %1054 = vmatpush1.msra.mxu0 0.0
      %1055 = vmatprep.subr.mxu0 0.0
      %1056 = vmatpush1.msra.mxu0 0.0
      %1057 = vmatprep.subr.mxu0 0.0
      %1058 = vmatpush1.msra.mxu0 0.0
      %1059 = vmatprep.subr.mxu0 0.0
      %1060 = vmatpush1.msra.mxu0 0.0
      %1061 = vmatprep.subr.mxu0 0.0
      %1062 = vmatpush1.msra.mxu0 0.0
      %1063 = vmatprep.subr.mxu0 0.0
      %1064 = vmatpush1.msra.mxu0 0.0
      %1065 = vmatprep.subr.mxu0 0.0
      %1066 = vmatpush1.msra.mxu0 0.0
      %1067 = vmatprep.subr.mxu0 0.0
      %1068 = vmatpush1.msra.mxu0 0.0
      %1069 = vmatprep.subr.mxu0 0.0
      %1070 = vmatpush1.msra.mxu0 0.0
      %1071 = vmatprep.mubr.f32.mxu0 0.0
      %1072 = vmatmul.mubr.f32.gmra.mrb[0].mxu0 %v999
      %v1073 = vpop.f32.mrb[0].mxu0
      %v1074 = vadd.f32 %v996, %v1073
      %v1075 = vpop.f32.mrb[0].mxu0
      %1076 = vmatprep.mubr.f32.mxu0 0.0
      %1077 = vmatmul.mubr.f32.gmra.mrb[0].mxu0 %v1001
      %v1078 = vpop.f32.mrb[0].mxu0
      %v1079 = vadd.f32 %v996, %v1078
      %v1080 = vpop.f32.mrb[0].mxu0
      %1081 = vdwg.mxu0
      %v1082 = vmax.f32 %v1074, 0.0
      %v1083 = vmax.f32 %v1079, 0.0
      %vm1084 = vcmp.ne.f32.partialorder %v1074, %v1074
      %vm1085 = vcmp.ne.f32.partialorder %v1079, %v1079
      %v1086 = vadd.f32 %v1074, 0.0
      %v1087 = vadd.f32 %v1079, 0.0
      %v1088 = vand.u32 2147483647, %v1074
      %v1089 = vand.u32 2147483647, %v1079
      %v1090 = vsub.f32 0.0, %v1088
      %v1091 = vsub.f32 0.0, %v1089
      %v1092 = vmul.f32 %v1090, 1.442695
      %v1093 = vpow.pop %v1092
      %v1094 = vmul.f32 %v1091, 1.442695
      %v1095 = vpow.pop %v1094
      %v1096 = vadd.f32 %v1093, 1.0
      %v1097 = vlog2.pop %v1096
      %v1098 = vmul.f32 %v1097, 0.6931472
      %v1099 = vmul.f32 -0.5, %v1093
      %v1100 = vadd.f32 %v1099, 1.0
      %v1101 = vmul.f32 %v1100, %v1093
      %v1102 = vand.u32 2147483647, %v1093
      %vm1103 = vcmp.lt.f32.partialorder %v1102, 0.0004427343
      %v1104 = vsel %vm1103, %v1101, %v1098
      %v1105 = vadd.f32 %v1095, 1.0
      %v1106 = vlog2.pop %v1105
      %v1107 = vmul.f32 %v1106, 0.6931472
      %v1108 = vmul.f32 -0.5, %v1095
      %v1109 = vadd.f32 %v1108, 1.0
      %v1110 = vmul.f32 %v1109, %v1095
      %v1111 = vand.u32 2147483647, %v1095
      %vm1112 = vcmp.lt.f32.partialorder %v1111, 0.0004427343
      %v1113 = vsel %vm1112, %v1110, %v1107
      %v1114 = vadd.f32 %v1082, %v1104
      %v1115 = vadd.f32 %v1083, %v1113
      %v1116 = vsel %vm1084, %v1086, %v1114
      %v1117 = vsel %vm1085, %v1087, %v1115
      %1118 = vst [vmem:[#allocation3] sm:$0xff] %v1116
      %1119 = vst [vmem:[#allocation3 + $0x8] sm:$0xff] %v1117
      %v1120 = vld [vmem:[%s9] sm:$0xff]
      %v1121 = vld [vmem:[%s9 + $0x8] sm:$0xff]
      %v1122 = vld [vmem:[%s10] sm:$0x1]
      %v1123 = vld [vmem:[#allocation3] sm:$0xff]
      %v1124 = vld [vmem:[#allocation2] sm:$0xff]
      %v1125 = vld [vmem:[#allocation4] sm:$0xff]
      %v1127 = vrot.slane %v1123, 7
      %v1129 = vsel %vm642, %v1123, %v1127
      %v1130 = vrot.slane %v1123, 5
      %v1132 = vsel %vm642, %v1123, %v1130
      %v1133 = vrot.slane %v1123, 3
      %v1135 = vsel %vm642, %v1123, %v1133
      %v1136 = vrot.slane %v1123, 1
      %v1138 = vsel %vm642, %v1123, %v1136
      %vm1139 = vcmask 1040384
      %v1140 = vsel %vm1139, %v1129, %v1132
      %vm1141 = vcmask 1041408
      %v1142 = vsel %vm1141, %v1140, %v1135
      %v1143 = vsel %vm649, %v1142, %v1138
      %v1144 = vsel %vm1003, %v1143, %v1129
      %v1145 = vsel %vm787, %v1144, %v1132
      %v1146 = vsel %vm738, %v1145, %v1135
      %v1147 = vsel %vm689, %v1146, %v1138
      %v1149 = vrot.slane %v1124, 7
      %v1151 = vsel %vm642, %v1124, %v1149
      %v1152 = vrot.slane %v1124, 5
      %v1154 = vsel %vm642, %v1124, %v1152
      %v1155 = vrot.slane %v1124, 3
      %v1157 = vsel %vm642, %v1124, %v1155
      %v1158 = vrot.slane %v1124, 1
      %v1160 = vsel %vm642, %v1124, %v1158
      %v1161 = vsel %vm1139, %v1151, %v1154
      %v1162 = vsel %vm1141, %v1161, %v1157
      %v1163 = vsel %vm649, %v1162, %v1160
      %v1164 = vsel %vm1003, %v1163, %v1151
      %v1165 = vsel %vm787, %v1164, %v1154
      %v1166 = vsel %vm738, %v1165, %v1157
      %v1167 = vsel %vm689, %v1166, %v1160
      %v1168 = vmul.f32 %v1147, %v1167
      %v1170 = vcombine.high %v1147, %v1147
      %v1172 = vunpack.c.l.s4 1966171168
      %v1173 = vunpack.c.0.s8 %v1172
      %v1174 = vlaneseq
      %v1175 = vshrl.u32 %v1174, 7
      %v1176 = vsub.s32 %v1173, %v1175
      %v1177 = vrot.slane %v1147, %v1176
      %v1179 = vunpack.c.l.s4 1966171168
      %v1180 = vunpack.c.0.s8 %v1179
      %v1181 = vlaneseq
      %v1182 = vshrl.u32 %v1181, 7
      %v1183 = vsub.s32 %v1180, %v1182
      %v1184 = vrot.slane %v1170, %v1183
      %v1185 = vcombine.high %v1177, %v1177
      %v1186 = vcombine.high %v1184, %v1184
      %v1188 = vunpack.c.l.s4 1966171168
      %v1189 = vunpack.c.0.s8 %v1188
      %v1190 = vlaneseq
      %v1191 = vshrl.u32 %v1190, 7
      %v1192 = vsub.s32 %v1189, %v1191
      %v1193 = vrot.slane %v1177, %v1192
      %v1195 = vunpack.c.l.s4 1966171168
      %v1196 = vunpack.c.0.s8 %v1195
      %v1197 = vlaneseq
      %v1198 = vshrl.u32 %v1197, 7
      %v1199 = vsub.s32 %v1196, %v1198
      %v1200 = vrot.slane %v1184, %v1199
      %v1202 = vunpack.c.l.s4 1966171168
      %v1203 = vunpack.c.0.s8 %v1202
      %v1204 = vlaneseq
      %v1205 = vshrl.u32 %v1204, 7
      %v1206 = vsub.s32 %v1203, %v1205
      %v1207 = vrot.slane %v1185, %v1206
      %v1209 = vunpack.c.l.s4 1966171168
      %v1210 = vunpack.c.0.s8 %v1209
      %v1211 = vlaneseq
      %v1212 = vshrl.u32 %v1211, 7
      %v1213 = vsub.s32 %v1210, %v1212
      %v1214 = vrot.slane %v1186, %v1213
      %v1215 = vcombine.high %v1193, %v1193
      %v1216 = vcombine.high %v1200, %v1200
      %v1217 = vcombine.high %v1207, %v1207
      %v1218 = vcombine.high %v1214, %v1214
      %v1219 = vlaneseq
      %v1220 = vshrl.u32 %v1219, 7
      %v1221 = vsub.s32 0, %v1220
      %v1222 = vrot.slane %v1193, %v1221
      %v1223 = vlaneseq
      %v1224 = vshrl.u32 %v1223, 7
      %v1225 = vsub.s32 0, %v1224
      %v1226 = vrot.slane %v1207, %v1225
      %v1227 = vlaneseq
      %v1228 = vshrl.u32 %v1227, 7
      %v1229 = vsub.s32 0, %v1228
      %v1230 = vrot.slane %v1215, %v1229
      %v1231 = vlaneseq
      %v1232 = vshrl.u32 %v1231, 7
      %v1233 = vsub.s32 0, %v1232
      %v1234 = vrot.slane %v1217, %v1233
      %v1235 = vlaneseq
      %v1236 = vshrl.u32 %v1235, 7
      %v1237 = vsub.s32 0, %v1236
      %v1238 = vrot.slane %v1200, %v1237
      %v1239 = vlaneseq
      %v1240 = vshrl.u32 %v1239, 7
      %v1241 = vsub.s32 0, %v1240
      %v1242 = vrot.slane %v1214, %v1241
      %v1243 = vlaneseq
      %v1244 = vshrl.u32 %v1243, 7
      %v1245 = vsub.s32 0, %v1244
      %v1246 = vrot.slane %v1216, %v1245
      %v1247 = vlaneseq
      %v1248 = vshrl.u32 %v1247, 7
      %v1249 = vsub.s32 0, %v1248
      %v1250 = vrot.slane %v1218, %v1249
      %v1259 = vmul.f32 %v1222, %v1120
      %v1260 = vmul.f32 %v1222, %v1121
      %v1261 = vmul.f32 %v1226, %v1120
      %v1262 = vmul.f32 %v1226, %v1121
      %v1263 = vmul.f32 %v1230, %v1120
      %v1264 = vmul.f32 %v1230, %v1121
      %v1265 = vmul.f32 %v1234, %v1120
      %v1266 = vmul.f32 %v1234, %v1121
      %v1267 = vmul.f32 %v1238, %v1120
      %v1268 = vmul.f32 %v1238, %v1121
      %v1269 = vmul.f32 %v1242, %v1120
      %v1270 = vmul.f32 %v1242, %v1121
      %v1271 = vmul.f32 %v1246, %v1120
      %v1272 = vmul.f32 %v1246, %v1121
      %v1273 = vmul.f32 %v1250, %v1120
      %v1274 = vmul.f32 %v1250, %v1121
      %v1275 = vmul.f32 %v1259, 1.442695
      %v1276 = vpow.pop %v1275
      %v1277 = vmul.f32 %v1260, 1.442695
      %v1278 = vpow.pop %v1277
      %v1279 = vmul.f32 %v1261, 1.442695
      %v1280 = vpow.pop %v1279
      %v1281 = vmul.f32 %v1262, 1.442695
      %v1282 = vpow.pop %v1281
      %v1283 = vmul.f32 %v1263, 1.442695
      %v1284 = vpow.pop %v1283
      %v1285 = vmul.f32 %v1264, 1.442695
      %v1286 = vpow.pop %v1285
      %v1287 = vmul.f32 %v1265, 1.442695
      %v1288 = vpow.pop %v1287
      %v1289 = vmul.f32 %v1266, 1.442695
      %v1290 = vpow.pop %v1289
      %v1291 = vmul.f32 %v1267, 1.442695
      %v1292 = vpow.pop %v1291
      %v1293 = vmul.f32 %v1268, 1.442695
      %v1294 = vpow.pop %v1293
      %v1295 = vmul.f32 %v1269, 1.442695
      %v1296 = vpow.pop %v1295
      %v1297 = vmul.f32 %v1270, 1.442695
      %v1298 = vpow.pop %v1297
      %v1299 = vmul.f32 %v1271, 1.442695
      %v1300 = vpow.pop %v1299
      %v1301 = vmul.f32 %v1272, 1.442695
      %v1302 = vpow.pop %v1301
      %v1303 = vmul.f32 %v1273, 1.442695
      %v1304 = vpow.pop %v1303
      %v1305 = vmul.f32 %v1274, 1.442695
      %v1306 = vpow.pop %v1305
      %1307 = vxpose.xlu0.b32.start [1/16] %v1125, 128
      %1308 = vxpose.xlu0.b32.cont [2/16] 0.0, 128
      %1309 = vxpose.xlu0.b32.cont [3/16] 0.0, 128
      %1310 = vxpose.xlu0.b32.cont [4/16] 0.0, 128
      %1311 = vxpose.xlu0.b32.cont [5/16] 0.0, 128
      %1312 = vxpose.xlu0.b32.cont [6/16] 0.0, 128
      %1313 = vxpose.xlu0.b32.cont [7/16] 0.0, 128
      %1314 = vxpose.xlu0.b32.cont [8/16] 0.0, 128
      %1315 = vxpose.xlu0.b32.cont [9/16] 0.0, 128
      %1316 = vxpose.xlu0.b32.cont [10/16] 0.0, 128
      %1317 = vxpose.xlu0.b32.cont [11/16] 0.0, 128
      %1318 = vxpose.xlu0.b32.cont [12/16] 0.0, 128
      %1319 = vxpose.xlu0.b32.cont [13/16] 0.0, 128
      %1320 = vxpose.xlu0.b32.cont [14/16] 0.0, 128
      %1321 = vxpose.xlu0.b32.cont [15/16] 0.0, 128
      %1322 = vxpose.xlu0.b32.end [16/16] 0.0, 128
      %v1323 = vpop.trf.xlu0
      %v1324 = vpop.trf.xlu0
      %v1325 = vpop.trf.xlu0
      %v1326 = vpop.trf.xlu0
      %v1327 = vpop.trf.xlu0
      %v1328 = vpop.trf.xlu0
      %v1329 = vpop.trf.xlu0
      %v1330 = vpop.trf.xlu0
      %v1331 = vpop.trf.xlu0
      %v1332 = vpop.trf.xlu0
      %v1333 = vpop.trf.xlu0
      %v1334 = vpop.trf.xlu0
      %v1335 = vpop.trf.xlu0
      %v1336 = vpop.trf.xlu0
      %v1337 = vpop.trf.xlu0
      %v1338 = vpop.trf.xlu0
      %1340 = vrot.lane.b32.xlu0 %v1125, 112
      %v1341 = vpop.permute.xlu0 %1340
      %1343 = vxpose.xlu0.b32.start [1/16] %v1341, 128
      %1344 = vxpose.xlu0.b32.cont [2/16] 0.0, 128
      %1345 = vxpose.xlu0.b32.cont [3/16] 0.0, 128
      %1346 = vxpose.xlu0.b32.cont [4/16] 0.0, 128
      %1347 = vxpose.xlu0.b32.cont [5/16] 0.0, 128
      %1348 = vxpose.xlu0.b32.cont [6/16] 0.0, 128
      %1349 = vxpose.xlu0.b32.cont [7/16] 0.0, 128
      %1350 = vxpose.xlu0.b32.cont [8/16] 0.0, 128
      %1351 = vxpose.xlu0.b32.cont [9/16] 0.0, 128
      %1352 = vxpose.xlu0.b32.cont [10/16] 0.0, 128
      %1353 = vxpose.xlu0.b32.cont [11/16] 0.0, 128
      %1354 = vxpose.xlu0.b32.cont [12/16] 0.0, 128
      %1355 = vxpose.xlu0.b32.cont [13/16] 0.0, 128
      %1356 = vxpose.xlu0.b32.cont [14/16] 0.0, 128
      %1357 = vxpose.xlu0.b32.cont [15/16] 0.0, 128
      %1358 = vxpose.xlu0.b32.end [16/16] 0.0, 128
      %v1359 = vpop.trf.xlu0
      %v1360 = vpop.trf.xlu0
      %v1361 = vpop.trf.xlu0
      %v1362 = vpop.trf.xlu0
      %v1363 = vpop.trf.xlu0
      %v1364 = vpop.trf.xlu0
      %v1365 = vpop.trf.xlu0
      %v1366 = vpop.trf.xlu0
      %v1367 = vpop.trf.xlu0
      %v1368 = vpop.trf.xlu0
      %v1369 = vpop.trf.xlu0
      %v1370 = vpop.trf.xlu0
      %v1371 = vpop.trf.xlu0
      %v1372 = vpop.trf.xlu0
      %v1373 = vpop.trf.xlu0
      %v1374 = vpop.trf.xlu0
      %1375 = vrot.lane.b32.xlu0 %v1125, 96
      %v1376 = vpop.permute.xlu0 %1375
      %1378 = vxpose.xlu0.b32.start [1/16] %v1376, 128
      %1379 = vxpose.xlu0.b32.cont [2/16] 0.0, 128
      %1380 = vxpose.xlu0.b32.cont [3/16] 0.0, 128
      %1381 = vxpose.xlu0.b32.cont [4/16] 0.0, 128
      %1382 = vxpose.xlu0.b32.cont [5/16] 0.0, 128
      %1383 = vxpose.xlu0.b32.cont [6/16] 0.0, 128
      %1384 = vxpose.xlu0.b32.cont [7/16] 0.0, 128
      %1385 = vxpose.xlu0.b32.cont [8/16] 0.0, 128
      %1386 = vxpose.xlu0.b32.cont [9/16] 0.0, 128
      %1387 = vxpose.xlu0.b32.cont [10/16] 0.0, 128
      %1388 = vxpose.xlu0.b32.cont [11/16] 0.0, 128
      %1389 = vxpose.xlu0.b32.cont [12/16] 0.0, 128
      %1390 = vxpose.xlu0.b32.cont [13/16] 0.0, 128
      %1391 = vxpose.xlu0.b32.cont [14/16] 0.0, 128
      %1392 = vxpose.xlu0.b32.cont [15/16] 0.0, 128
      %1393 = vxpose.xlu0.b32.end [16/16] 0.0, 128
      %v1394 = vpop.trf.xlu0
      %v1395 = vpop.trf.xlu0
      %v1396 = vpop.trf.xlu0
      %v1397 = vpop.trf.xlu0
      %v1398 = vpop.trf.xlu0
      %v1399 = vpop.trf.xlu0
      %v1400 = vpop.trf.xlu0
      %v1401 = vpop.trf.xlu0
      %v1402 = vpop.trf.xlu0
      %v1403 = vpop.trf.xlu0
      %v1404 = vpop.trf.xlu0
      %v1405 = vpop.trf.xlu0
      %v1406 = vpop.trf.xlu0
      %v1407 = vpop.trf.xlu0
      %v1408 = vpop.trf.xlu0
      %v1409 = vpop.trf.xlu0
      %1410 = vrot.lane.b32.xlu0 %v1125, 80
      %v1411 = vpop.permute.xlu0 %1410
      %1413 = vxpose.xlu0.b32.start [1/16] %v1411, 128
      %1414 = vxpose.xlu0.b32.cont [2/16] 0.0, 128
      %1415 = vxpose.xlu0.b32.cont [3/16] 0.0, 128
      %1416 = vxpose.xlu0.b32.cont [4/16] 0.0, 128
      %1417 = vxpose.xlu0.b32.cont [5/16] 0.0, 128
      %1418 = vxpose.xlu0.b32.cont [6/16] 0.0, 128
      %1419 = vxpose.xlu0.b32.cont [7/16] 0.0, 128
      %1420 = vxpose.xlu0.b32.cont [8/16] 0.0, 128
      %1421 = vxpose.xlu0.b32.cont [9/16] 0.0, 128
      %1422 = vxpose.xlu0.b32.cont [10/16] 0.0, 128
      %1423 = vxpose.xlu0.b32.cont [11/16] 0.0, 128
      %1424 = vxpose.xlu0.b32.cont [12/16] 0.0, 128
      %1425 = vxpose.xlu0.b32.cont [13/16] 0.0, 128
      %1426 = vxpose.xlu0.b32.cont [14/16] 0.0, 128
      %1427 = vxpose.xlu0.b32.cont [15/16] 0.0, 128
      %1428 = vxpose.xlu0.b32.end [16/16] 0.0, 128
      %v1429 = vpop.trf.xlu0
      %v1430 = vpop.trf.xlu0
      %v1431 = vpop.trf.xlu0
      %v1432 = vpop.trf.xlu0
      %v1433 = vpop.trf.xlu0
      %v1434 = vpop.trf.xlu0
      %v1435 = vpop.trf.xlu0
      %v1436 = vpop.trf.xlu0
      %v1437 = vpop.trf.xlu0
      %v1438 = vpop.trf.xlu0
      %v1439 = vpop.trf.xlu0
      %v1440 = vpop.trf.xlu0
      %v1441 = vpop.trf.xlu0
      %v1442 = vpop.trf.xlu0
      %v1443 = vpop.trf.xlu0
      %v1444 = vpop.trf.xlu0
      %1446 = vset.pattern.permute.xlu0 0
      %1447 = vperm.xlu0 %1446, %v1323
      %v1448 = vpop.permute.xlu0 %1447
      %1451 = vset.pattern.permute.xlu0 0
      %1452 = vperm.xlu0 %1451, %v1324
      %v1453 = vpop.permute.xlu0 %1452
      %1456 = vset.pattern.permute.xlu0 7
      %1457 = vperm.xlu0 %1456, %v1359
      %v1458 = vpop.permute.xlu0 %1457
      %1461 = vset.pattern.permute.xlu0 7
      %1462 = vperm.xlu0 %1461, %v1360
      %v1463 = vpop.permute.xlu0 %1462
      %v1465 = vsel %vm642, %v1448, %v1458
      %v1466 = vsel %vm642, %v1453, %v1463
      %v1467 = vlaneseq
      %v1468 = vshrl.u32 %v1467, 7
      %v1469 = vsub.s32 0, %v1468
      %v1470 = vrot.slane %v1168, %v1469
      %v1471 = vmul.f32 %v1465, %v1470
      %v1472 = vmul.f32 %v1466, %v1470
      %1473 = vset.pattern.permute.xlu0 1
      %1474 = vperm.xlu0 %1473, %v1323
      %v1475 = vpop.permute.xlu0 %1474
      %1477 = vset.pattern.permute.xlu0 1
      %1478 = vperm.xlu0 %1477, %v1324
      %v1479 = vpop.permute.xlu0 %1478
      %1481 = vset.pattern.permute.xlu0 6
      %1482 = vperm.xlu0 %1481, %v1359
      %v1483 = vpop.permute.xlu0 %1482
      %1485 = vset.pattern.permute.xlu0 6
      %1486 = vperm.xlu0 %1485, %v1360
      %v1487 = vpop.permute.xlu0 %1486
      %v1489 = vsel %vm642, %v1475, %v1483
      %v1490 = vsel %vm642, %v1479, %v1487
      %v1491 = vlaneseq
      %v1492 = vshrl.u32 %v1491, 7
      %v1493 = vsub.s32 1, %v1492
      %v1494 = vrot.slane %v1168, %v1493
      %v1495 = vmul.f32 %v1489, %v1494
      %v1496 = vmul.f32 %v1490, %v1494
      %1497 = vset.pattern.permute.xlu0 2
      %1498 = vperm.xlu0 %1497, %v1323
      %v1499 = vpop.permute.xlu0 %1498
      %1501 = vset.pattern.permute.xlu0 2
      %1502 = vperm.xlu0 %1501, %v1324
      %v1503 = vpop.permute.xlu0 %1502
      %1505 = vset.pattern.permute.xlu0 5
      %1506 = vperm.xlu0 %1505, %v1359
      %v1507 = vpop.permute.xlu0 %1506
      %1509 = vset.pattern.permute.xlu0 5
      %1510 = vperm.xlu0 %1509, %v1360
      %v1511 = vpop.permute.xlu0 %1510
      %v1513 = vsel %vm642, %v1499, %v1507
      %v1514 = vsel %vm642, %v1503, %v1511
      %v1515 = vlaneseq
      %v1516 = vshrl.u32 %v1515, 7
      %v1517 = vsub.s32 2, %v1516
      %v1518 = vrot.slane %v1168, %v1517
      %v1519 = vmul.f32 %v1513, %v1518
      %v1520 = vmul.f32 %v1514, %v1518
      %1521 = vset.pattern.permute.xlu0 3
      %1522 = vperm.xlu0 %1521, %v1323
      %v1523 = vpop.permute.xlu0 %1522
      %1525 = vset.pattern.permute.xlu0 3
      %1526 = vperm.xlu0 %1525, %v1324
      %v1527 = vpop.permute.xlu0 %1526
      %1529 = vset.pattern.permute.xlu0 4
      %1530 = vperm.xlu0 %1529, %v1359
      %v1531 = vpop.permute.xlu0 %1530
      %1533 = vset.pattern.permute.xlu0 4
      %1534 = vperm.xlu0 %1533, %v1360
      %v1535 = vpop.permute.xlu0 %1534
      %v1537 = vsel %vm642, %v1523, %v1531
      %v1538 = vsel %vm642, %v1527, %v1535
      %v1539 = vlaneseq
      %v1540 = vshrl.u32 %v1539, 7
      %v1541 = vsub.s32 3, %v1540
      %v1542 = vrot.slane %v1168, %v1541
      %v1543 = vmul.f32 %v1537, %v1542
      %v1544 = vmul.f32 %v1538, %v1542
      %1545 = vset.pattern.permute.xlu0 4
      %1546 = vperm.xlu0 %1545, %v1323
      %v1547 = vpop.permute.xlu0 %1546
      %1549 = vset.pattern.permute.xlu0 4
      %1550 = vperm.xlu0 %1549, %v1324
      %v1551 = vpop.permute.xlu0 %1550
      %1553 = vset.pattern.permute.xlu0 3
      %1554 = vperm.xlu0 %1553, %v1359
      %v1555 = vpop.permute.xlu0 %1554
      %1557 = vset.pattern.permute.xlu0 3
      %1558 = vperm.xlu0 %1557, %v1360
      %v1559 = vpop.permute.xlu0 %1558
      %v1561 = vsel %vm642, %v1547, %v1555
      %v1562 = vsel %vm642, %v1551, %v1559
      %v1563 = vlaneseq
      %v1564 = vshrl.u32 %v1563, 7
      %v1565 = vsub.s32 4, %v1564
      %v1566 = vrot.slane %v1168, %v1565
      %v1567 = vmul.f32 %v1561, %v1566
      %v1568 = vmul.f32 %v1562, %v1566
      %1569 = vset.pattern.permute.xlu0 5
      %1570 = vperm.xlu0 %1569, %v1323
      %v1571 = vpop.permute.xlu0 %1570
      %1573 = vset.pattern.permute.xlu0 5
      %1574 = vperm.xlu0 %1573, %v1324
      %v1575 = vpop.permute.xlu0 %1574
      %1577 = vset.pattern.permute.xlu0 2
      %1578 = vperm.xlu0 %1577, %v1359
      %v1579 = vpop.permute.xlu0 %1578
      %1581 = vset.pattern.permute.xlu0 2
      %1582 = vperm.xlu0 %1581, %v1360
      %v1583 = vpop.permute.xlu0 %1582
      %v1585 = vsel %vm642, %v1571, %v1579
      %v1586 = vsel %vm642, %v1575, %v1583
      %v1587 = vlaneseq
      %v1588 = vshrl.u32 %v1587, 7
      %v1589 = vsub.s32 5, %v1588
      %v1590 = vrot.slane %v1168, %v1589
      %v1591 = vmul.f32 %v1585, %v1590
      %v1592 = vmul.f32 %v1586, %v1590
      %1593 = vset.pattern.permute.xlu0 6
      %1594 = vperm.xlu0 %1593, %v1323
      %v1595 = vpop.permute.xlu0 %1594
      %1597 = vset.pattern.permute.xlu0 6
      %1598 = vperm.xlu0 %1597, %v1324
      %v1599 = vpop.permute.xlu0 %1598
      %1601 = vset.pattern.permute.xlu0 1
      %1602 = vperm.xlu0 %1601, %v1359
      %v1603 = vpop.permute.xlu0 %1602
      %1605 = vset.pattern.permute.xlu0 1
      %1606 = vperm.xlu0 %1605, %v1360
      %v1607 = vpop.permute.xlu0 %1606
      %v1609 = vsel %vm642, %v1595, %v1603
      %v1610 = vsel %vm642, %v1599, %v1607
      %v1611 = vlaneseq
      %v1612 = vshrl.u32 %v1611, 7
      %v1613 = vsub.s32 6, %v1612
      %v1614 = vrot.slane %v1168, %v1613
      %v1615 = vmul.f32 %v1609, %v1614
      %v1616 = vmul.f32 %v1610, %v1614
      %1617 = vset.pattern.permute.xlu0 7
      %1618 = vperm.xlu0 %1617, %v1323
      %v1619 = vpop.permute.xlu0 %1618
      %1621 = vset.pattern.permute.xlu0 7
      %1622 = vperm.xlu0 %1621, %v1324
      %v1623 = vpop.permute.xlu0 %1622
      %1625 = vset.pattern.permute.xlu0 0
      %1626 = vperm.xlu0 %1625, %v1359
      %v1627 = vpop.permute.xlu0 %1626
      %1629 = vset.pattern.permute.xlu0 0
      %1630 = vperm.xlu0 %1629, %v1360
      %v1631 = vpop.permute.xlu0 %1630
      %v1633 = vsel %vm642, %v1619, %v1627
      %v1634 = vsel %vm642, %v1623, %v1631
      %v1635 = vlaneseq
      %v1636 = vshrl.u32 %v1635, 7
      %v1637 = vsub.s32 7, %v1636
      %v1638 = vrot.slane %v1168, %v1637
      %v1639 = vmul.f32 %v1633, %v1638
      %v1640 = vmul.f32 %v1634, %v1638
      %v1641 = vmul.f32 %v1276, 0.0
      %v1642 = vmul.f32 %v1278, 0.0
      %v1643 = vadd.f32 %v1641, %v1471
      %v1644 = vadd.f32 %v1642, %v1472
      %v1645 = vmul.f32 %v1280, %v1643
      %v1646 = vmul.f32 %v1282, %v1644
      %v1647 = vadd.f32 %v1645, %v1495
      %v1648 = vadd.f32 %v1646, %v1496
      %v1649 = vmul.f32 %v1284, %v1647
      %v1650 = vmul.f32 %v1286, %v1648
      %v1651 = vadd.f32 %v1649, %v1519
      %v1652 = vadd.f32 %v1650, %v1520
      %v1653 = vmul.f32 %v1288, %v1651
      %v1654 = vmul.f32 %v1290, %v1652
      %v1655 = vadd.f32 %v1653, %v1543
      %v1656 = vadd.f32 %v1654, %v1544
      %v1657 = vmul.f32 %v1292, %v1655
      %v1658 = vmul.f32 %v1294, %v1656
      %v1659 = vadd.f32 %v1657, %v1567
      %v1660 = vadd.f32 %v1658, %v1568
      %v1661 = vmul.f32 %v1296, %v1659
      %v1662 = vmul.f32 %v1298, %v1660
      %v1663 = vadd.f32 %v1661, %v1591
      %v1664 = vadd.f32 %v1662, %v1592
      %v1665 = vmul.f32 %v1300, %v1663
      %v1666 = vmul.f32 %v1302, %v1664
      %v1667 = vadd.f32 %v1665, %v1615
      %v1668 = vadd.f32 %v1666, %v1616
      %v1669 = vmul.f32 %v1304, %v1667
      %v1670 = vmul.f32 %v1306, %v1668
      %v1671 = vadd.f32 %v1669, %v1639
      %v1672 = vadd.f32 %v1670, %v1640
      %1674 = vset.pattern.permute.xlu0 0
      %1675 = vperm.xlu0 %1674, %v1394
      %v1676 = vpop.permute.xlu0 %1675
      %1679 = vset.pattern.permute.xlu0 0
      %1680 = vperm.xlu0 %1679, %v1395
      %v1681 = vpop.permute.xlu0 %1680
      %1684 = vset.pattern.permute.xlu0 7
      %1685 = vperm.xlu0 %1684, %v1429
      %v1686 = vpop.permute.xlu0 %1685
      %1689 = vset.pattern.permute.xlu0 7
      %1690 = vperm.xlu0 %1689, %v1430
      %v1691 = vpop.permute.xlu0 %1690
      %v1693 = vsel %vm642, %v1676, %v1686
      %v1694 = vsel %vm642, %v1681, %v1691
      %v1695 = vmul.f32 %v1643, %v1693
      %v1696 = vmul.f32 %v1644, %v1694
      %v1697 = vadd.f32 %v1695, %v1696
      %v1698 = vrot.slane %v1697, 4
      %v1699 = vadd.f32 %v1697, %v1698
      %v1700 = vrot.slane %v1699, 2
      %v1701 = vadd.f32 %v1699, %v1700
      %v1702 = vrot.slane %v1701, 1
      %v1703 = vadd.f32 %v1701, %v1702
      %1704 = vset.pattern.permute.xlu0 1
      %1705 = vperm.xlu0 %1704, %v1394
      %v1706 = vpop.permute.xlu0 %1705
      %1708 = vset.pattern.permute.xlu0 1
      %1709 = vperm.xlu0 %1708, %v1395
      %v1710 = vpop.permute.xlu0 %1709
      %1712 = vset.pattern.permute.xlu0 6
      %1713 = vperm.xlu0 %1712, %v1429
      %v1714 = vpop.permute.xlu0 %1713
      %1716 = vset.pattern.permute.xlu0 6
      %1717 = vperm.xlu0 %1716, %v1430
      %v1718 = vpop.permute.xlu0 %1717
      %v1720 = vsel %vm642, %v1706, %v1714
      %v1721 = vsel %vm642, %v1710, %v1718
      %v1722 = vmul.f32 %v1647, %v1720
      %v1723 = vmul.f32 %v1648, %v1721
      %v1724 = vadd.f32 %v1722, %v1723
      %v1725 = vrot.slane %v1724, 4
      %v1726 = vadd.f32 %v1724, %v1725
      %v1727 = vrot.slane %v1726, 2
      %v1728 = vadd.f32 %v1726, %v1727
      %v1729 = vrot.slane %v1728, 1
      %v1730 = vadd.f32 %v1728, %v1729
      %1731 = vset.pattern.permute.xlu0 2
      %1732 = vperm.xlu0 %1731, %v1394
      %v1733 = vpop.permute.xlu0 %1732
      %1735 = vset.pattern.permute.xlu0 2
      %1736 = vperm.xlu0 %1735, %v1395
      %v1737 = vpop.permute.xlu0 %1736
      %1739 = vset.pattern.permute.xlu0 5
      %1740 = vperm.xlu0 %1739, %v1429
      %v1741 = vpop.permute.xlu0 %1740
      %1743 = vset.pattern.permute.xlu0 5
      %1744 = vperm.xlu0 %1743, %v1430
      %v1745 = vpop.permute.xlu0 %1744
      %v1747 = vsel %vm642, %v1733, %v1741
      %v1748 = vsel %vm642, %v1737, %v1745
      %v1749 = vmul.f32 %v1651, %v1747
      %v1750 = vmul.f32 %v1652, %v1748
      %v1751 = vadd.f32 %v1749, %v1750
      %v1752 = vrot.slane %v1751, 4
      %v1753 = vadd.f32 %v1751, %v1752
      %v1754 = vrot.slane %v1753, 2
      %v1755 = vadd.f32 %v1753, %v1754
      %v1756 = vrot.slane %v1755, 1
      %v1757 = vadd.f32 %v1755, %v1756
      %1758 = vset.pattern.permute.xlu0 3
      %1759 = vperm.xlu0 %1758, %v1394
      %v1760 = vpop.permute.xlu0 %1759
      %1762 = vset.pattern.permute.xlu0 3
      %1763 = vperm.xlu0 %1762, %v1395
      %v1764 = vpop.permute.xlu0 %1763
      %1766 = vset.pattern.permute.xlu0 4
      %1767 = vperm.xlu0 %1766, %v1429
      %v1768 = vpop.permute.xlu0 %1767
      %1770 = vset.pattern.permute.xlu0 4
      %1771 = vperm.xlu0 %1770, %v1430
      %v1772 = vpop.permute.xlu0 %1771
      %v1774 = vsel %vm642, %v1760, %v1768
      %v1775 = vsel %vm642, %v1764, %v1772
      %v1776 = vmul.f32 %v1655, %v1774
      %v1777 = vmul.f32 %v1656, %v1775
      %v1778 = vadd.f32 %v1776, %v1777
      %v1779 = vrot.slane %v1778, 4
      %v1780 = vadd.f32 %v1778, %v1779
      %v1781 = vrot.slane %v1780, 2
      %v1782 = vadd.f32 %v1780, %v1781
      %v1783 = vrot.slane %v1782, 1
      %v1784 = vadd.f32 %v1782, %v1783
      %1785 = vset.pattern.permute.xlu0 4
      %1786 = vperm.xlu0 %1785, %v1394
      %v1787 = vpop.permute.xlu0 %1786
      %1789 = vset.pattern.permute.xlu0 4
      %1790 = vperm.xlu0 %1789, %v1395
      %v1791 = vpop.permute.xlu0 %1790
      %1793 = vset.pattern.permute.xlu0 3
      %1794 = vperm.xlu0 %1793, %v1429
      %v1795 = vpop.permute.xlu0 %1794
      %1797 = vset.pattern.permute.xlu0 3
      %1798 = vperm.xlu0 %1797, %v1430
      %v1799 = vpop.permute.xlu0 %1798
      %v1801 = vsel %vm642, %v1787, %v1795
      %v1802 = vsel %vm642, %v1791, %v1799
      %v1803 = vmul.f32 %v1659, %v1801
      %v1804 = vmul.f32 %v1660, %v1802
      %v1805 = vadd.f32 %v1803, %v1804
      %v1806 = vrot.slane %v1805, 4
      %v1807 = vadd.f32 %v1805, %v1806
      %v1808 = vrot.slane %v1807, 2
      %v1809 = vadd.f32 %v1807, %v1808
      %v1810 = vrot.slane %v1809, 1
      %v1811 = vadd.f32 %v1809, %v1810
      %1812 = vset.pattern.permute.xlu0 5
      %1813 = vperm.xlu0 %1812, %v1394
      %v1814 = vpop.permute.xlu0 %1813
      %1816 = vset.pattern.permute.xlu0 5
      %1817 = vperm.xlu0 %1816, %v1395
      %v1818 = vpop.permute.xlu0 %1817
      %1820 = vset.pattern.permute.xlu0 2
      %1821 = vperm.xlu0 %1820, %v1429
      %v1822 = vpop.permute.xlu0 %1821
      %1824 = vset.pattern.permute.xlu0 2
      %1825 = vperm.xlu0 %1824, %v1430
      %v1826 = vpop.permute.xlu0 %1825
      %v1828 = vsel %vm642, %v1814, %v1822
      %v1829 = vsel %vm642, %v1818, %v1826
      %v1830 = vmul.f32 %v1663, %v1828
      %v1831 = vmul.f32 %v1664, %v1829
      %v1832 = vadd.f32 %v1830, %v1831
      %v1833 = vrot.slane %v1832, 4
      %v1834 = vadd.f32 %v1832, %v1833
      %v1835 = vrot.slane %v1834, 2
      %v1836 = vadd.f32 %v1834, %v1835
      %v1837 = vrot.slane %v1836, 1
      %v1838 = vadd.f32 %v1836, %v1837
      %1839 = vset.pattern.permute.xlu0 6
      %1840 = vperm.xlu0 %1839, %v1394
      %v1841 = vpop.permute.xlu0 %1840
      %1843 = vset.pattern.permute.xlu0 6
      %1844 = vperm.xlu0 %1843, %v1395
      %v1845 = vpop.permute.xlu0 %1844
      %1847 = vset.pattern.permute.xlu0 1
      %1848 = vperm.xlu0 %1847, %v1429
      %v1849 = vpop.permute.xlu0 %1848
      %1851 = vset.pattern.permute.xlu0 1
      %1852 = vperm.xlu0 %1851, %v1430
      %v1853 = vpop.permute.xlu0 %1852
      %v1855 = vsel %vm642, %v1841, %v1849
      %v1856 = vsel %vm642, %v1845, %v1853
      %v1857 = vmul.f32 %v1667, %v1855
      %v1858 = vmul.f32 %v1668, %v1856
      %v1859 = vadd.f32 %v1857, %v1858
      %v1860 = vrot.slane %v1859, 4
      %v1861 = vadd.f32 %v1859, %v1860
      %v1862 = vrot.slane %v1861, 2
      %v1863 = vadd.f32 %v1861, %v1862
      %v1864 = vrot.slane %v1863, 1
      %v1865 = vadd.f32 %v1863, %v1864
      %1866 = vset.pattern.permute.xlu0 7
      %1867 = vperm.xlu0 %1866, %v1394
      %v1868 = vpop.permute.xlu0 %1867
      %1870 = vset.pattern.permute.xlu0 7
      %1871 = vperm.xlu0 %1870, %v1395
      %v1872 = vpop.permute.xlu0 %1871
      %1874 = vset.pattern.permute.xlu0 0
      %1875 = vperm.xlu0 %1874, %v1429
      %v1876 = vpop.permute.xlu0 %1875
      %1878 = vset.pattern.permute.xlu0 0
      %1879 = vperm.xlu0 %1878, %v1430
      %v1880 = vpop.permute.xlu0 %1879
      %v1882 = vsel %vm642, %v1868, %v1876
      %v1883 = vsel %vm642, %v1872, %v1880
      %v1884 = vmul.f32 %v1671, %v1882
      %v1885 = vmul.f32 %v1672, %v1883
      %v1886 = vadd.f32 %v1884, %v1885
      %v1887 = vrot.slane %v1886, 4
      %v1888 = vadd.f32 %v1886, %v1887
      %v1889 = vrot.slane %v1888, 2
      %v1890 = vadd.f32 %v1888, %v1889
      %v1891 = vrot.slane %v1890, 1
      %v1892 = vadd.f32 %v1890, %v1891
      %v1893 = vsel %vm1139, %v1703, %v1730
      %v1894 = vsel %vm1141, %v1893, %v1757
      %v1895 = vsel %vm649, %v1894, %v1784
      %v1896 = vsel %vm1003, %v1895, %v1811
      %v1897 = vsel %vm787, %v1896, %v1838
      %v1898 = vsel %vm738, %v1897, %v1865
      %v1899 = vsel %vm689, %v1898, %v1892
      %v1901 = vlaneseq
      %v1902 = vshrl.u32 %v1901, 7
      %v1903 = vsub.s32 0, %v1902
      %v1904 = vrot.slane %v1122, %v1903
      %v1906 = vmul.f32 %v1904, %v1167
      %v1907 = vadd.f32 %v1899, %v1906
      %1908 = vst.msk [vmem:[#allocation6] sm:$0xff] %vm642, %v1907
      %v1910 = vrot.slane %v1907, 7
      %v1912 = vrot.slane %v1907, 5
      %v1914 = vrot.slane %v1907, 3
      %v1916 = vrot.slane %v1907, 1
      %v1918 = vsel %vm1139, %v1910, %v1912
      %v1919 = vsel %vm1141, %v1918, %v1914
      %v1920 = vsel %vm649, %v1919, %v1916
      %v1921 = vsel %vm1003, %v1920, %v1910
      %v1922 = vsel %vm787, %v1921, %v1912
      %v1923 = vsel %vm738, %v1922, %v1914
      %v1924 = vsel %vm689, %v1923, %v1916
      %1926 = vrot.lane.b32.xlu0 %v1924, 64
      %v1927 = vpop.permute.xlu0 %1926
      %1929 = vst.msk [vmem:[#allocation7] sm:$0xff] %vm642, %v1927
      %s1930 = scalar_lea.vmem [#allocation3], 8
      %v1931 = vld [vmem:[%s1930] sm:$0xff]
      %s1932 = scalar_lea.vmem [#allocation2], 8
      %v1933 = vld [vmem:[%s1932] sm:$0xff]
      %s1934 = scalar_lea.vmem [#allocation4], 8
      %v1935 = vld [vmem:[%s1934] sm:$0xff]
      %v1937 = vrot.slane %v1931, 7
      %v1939 = vsel %vm642, %v1931, %v1937
      %v1940 = vrot.slane %v1931, 5
      %v1942 = vsel %vm642, %v1931, %v1940
      %v1943 = vrot.slane %v1931, 3
      %v1945 = vsel %vm642, %v1931, %v1943
      %v1946 = vrot.slane %v1931, 1
      %v1948 = vsel %vm642, %v1931, %v1946
      %v1949 = vsel %vm1139, %v1939, %v1942
      %v1950 = vsel %vm1141, %v1949, %v1945
      %v1951 = vsel %vm649, %v1950, %v1948
      %v1952 = vsel %vm1003, %v1951, %v1939
      %v1953 = vsel %vm787, %v1952, %v1942
      %v1954 = vsel %vm738, %v1953, %v1945
      %v1955 = vsel %vm689, %v1954, %v1948
      %v1957 = vrot.slane %v1933, 7
      %v1959 = vsel %vm642, %v1933, %v1957
      %v1960 = vrot.slane %v1933, 5
      %v1962 = vsel %vm642, %v1933, %v1960
      %v1963 = vrot.slane %v1933, 3
      %v1965 = vsel %vm642, %v1933, %v1963
      %v1966 = vrot.slane %v1933, 1
      %v1968 = vsel %vm642, %v1933, %v1966
      %v1969 = vsel %vm1139, %v1959, %v1962
      %v1970 = vsel %vm1141, %v1969, %v1965
      %v1971 = vsel %vm649, %v1970, %v1968
      %v1972 = vsel %vm1003, %v1971, %v1959
      %v1973 = vsel %vm787, %v1972, %v1962
      %v1974 = vsel %vm738, %v1973, %v1965
      %v1975 = vsel %vm689, %v1974, %v1968
      %v1976 = vmul.f32 %v1955, %v1975
      %v1978 = vcombine.high %v1955, %v1955
      %v1980 = vunpack.c.l.s4 1966171168
      %v1981 = vunpack.c.0.s8 %v1980
      %v1982 = vlaneseq
      %v1983 = vshrl.u32 %v1982, 7
      %v1984 = vsub.s32 %v1981, %v1983
      %v1985 = vrot.slane %v1955, %v1984
      %v1987 = vunpack.c.l.s4 1966171168
      %v1988 = vunpack.c.0.s8 %v1987
      %v1989 = vlaneseq
      %v1990 = vshrl.u32 %v1989, 7
      %v1991 = vsub.s32 %v1988, %v1990
      %v1992 = vrot.slane %v1978, %v1991
      %v1993 = vcombine.high %v1985, %v1985
      %v1994 = vcombine.high %v1992, %v1992
      %v1996 = vunpack.c.l.s4 1966171168
      %v1997 = vunpack.c.0.s8 %v1996
      %v1998 = vlaneseq
      %v1999 = vshrl.u32 %v1998, 7
      %v2000 = vsub.s32 %v1997, %v1999
      %v2001 = vrot.slane %v1985, %v2000
      %v2003 = vunpack.c.l.s4 1966171168
      %v2004 = vunpack.c.0.s8 %v2003
      %v2005 = vlaneseq
      %v2006 = vshrl.u32 %v2005, 7
      %v2007 = vsub.s32 %v2004, %v2006
      %v2008 = vrot.slane %v1992, %v2007
      %v2010 = vunpack.c.l.s4 1966171168
      %v2011 = vunpack.c.0.s8 %v2010
      %v2012 = vlaneseq
      %v2013 = vshrl.u32 %v2012, 7
      %v2014 = vsub.s32 %v2011, %v2013
      %v2015 = vrot.slane %v1993, %v2014
      %v2017 = vunpack.c.l.s4 1966171168
      %v2018 = vunpack.c.0.s8 %v2017
      %v2019 = vlaneseq
      %v2020 = vshrl.u32 %v2019, 7
      %v2021 = vsub.s32 %v2018, %v2020
      %v2022 = vrot.slane %v1994, %v2021
      %v2023 = vcombine.high %v2001, %v2001
      %v2024 = vcombine.high %v2008, %v2008
      %v2025 = vcombine.high %v2015, %v2015
      %v2026 = vcombine.high %v2022, %v2022
      %v2027 = vlaneseq
      %v2028 = vshrl.u32 %v2027, 7
      %v2029 = vsub.s32 0, %v2028
      %v2030 = vrot.slane %v2001, %v2029
      %v2031 = vlaneseq
      %v2032 = vshrl.u32 %v2031, 7
      %v2033 = vsub.s32 0, %v2032
      %v2034 = vrot.slane %v2015, %v2033
      %v2035 = vlaneseq
      %v2036 = vshrl.u32 %v2035, 7
      %v2037 = vsub.s32 0, %v2036
      %v2038 = vrot.slane %v2023, %v2037
      %v2039 = vlaneseq
      %v2040 = vshrl.u32 %v2039, 7
      %v2041 = vsub.s32 0, %v2040
      %v2042 = vrot.slane %v2025, %v2041
      %v2043 = vlaneseq
      %v2044 = vshrl.u32 %v2043, 7
      %v2045 = vsub.s32 0, %v2044
      %v2046 = vrot.slane %v2008, %v2045
      %v2047 = vlaneseq
      %v2048 = vshrl.u32 %v2047, 7
      %v2049 = vsub.s32 0, %v2048
      %v2050 = vrot.slane %v2022, %v2049
      %v2051 = vlaneseq
      %v2052 = vshrl.u32 %v2051, 7
      %v2053 = vsub.s32 0, %v2052
      %v2054 = vrot.slane %v2024, %v2053
      %v2055 = vlaneseq
      %v2056 = vshrl.u32 %v2055, 7
      %v2057 = vsub.s32 0, %v2056
      %v2058 = vrot.slane %v2026, %v2057
      %v2067 = vmul.f32 %v2030, %v1120
      %v2068 = vmul.f32 %v2030, %v1121
      %v2069 = vmul.f32 %v2034, %v1120
      %v2070 = vmul.f32 %v2034, %v1121
      %v2071 = vmul.f32 %v2038, %v1120
      %v2072 = vmul.f32 %v2038, %v1121
      %v2073 = vmul.f32 %v2042, %v1120
      %v2074 = vmul.f32 %v2042, %v1121
      %v2075 = vmul.f32 %v2046, %v1120
      %v2076 = vmul.f32 %v2046, %v1121
      %v2077 = vmul.f32 %v2050, %v1120
      %v2078 = vmul.f32 %v2050, %v1121
      %v2079 = vmul.f32 %v2054, %v1120
      %v2080 = vmul.f32 %v2054, %v1121
      %v2081 = vmul.f32 %v2058, %v1120
      %v2082 = vmul.f32 %v2058, %v1121
      %v2083 = vmul.f32 %v2067, 1.442695
      %v2084 = vpow.pop %v2083
      %v2085 = vmul.f32 %v2068, 1.442695
      %v2086 = vpow.pop %v2085
      %v2087 = vmul.f32 %v2069, 1.442695
      %v2088 = vpow.pop %v2087
      %v2089 = vmul.f32 %v2070, 1.442695
      %v2090 = vpow.pop %v2089
      %v2091 = vmul.f32 %v2071, 1.442695
      %v2092 = vpow.pop %v2091
      %v2093 = vmul.f32 %v2072, 1.442695
      %v2094 = vpow.pop %v2093
      %v2095 = vmul.f32 %v2073, 1.442695
      %v2096 = vpow.pop %v2095
      %v2097 = vmul.f32 %v2074, 1.442695
      %v2098 = vpow.pop %v2097
      %v2099 = vmul.f32 %v2075, 1.442695
      %v2100 = vpow.pop %v2099
      %v2101 = vmul.f32 %v2076, 1.442695
      %v2102 = vpow.pop %v2101
      %v2103 = vmul.f32 %v2077, 1.442695
      %v2104 = vpow.pop %v2103
      %v2105 = vmul.f32 %v2078, 1.442695
      %v2106 = vpow.pop %v2105
      %v2107 = vmul.f32 %v2079, 1.442695
      %v2108 = vpow.pop %v2107
      %v2109 = vmul.f32 %v2080, 1.442695
      %v2110 = vpow.pop %v2109
      %v2111 = vmul.f32 %v2081, 1.442695
      %v2112 = vpow.pop %v2111
      %v2113 = vmul.f32 %v2082, 1.442695
      %v2114 = vpow.pop %v2113
      %2115 = vxpose.xlu0.b32.start [1/16] %v1935, 128
      %2116 = vxpose.xlu0.b32.cont [2/16] 0.0, 128
      %2117 = vxpose.xlu0.b32.cont [3/16] 0.0, 128
      %2118 = vxpose.xlu0.b32.cont [4/16] 0.0, 128
      %2119 = vxpose.xlu0.b32.cont [5/16] 0.0, 128
      %2120 = vxpose.xlu0.b32.cont [6/16] 0.0, 128
      %2121 = vxpose.xlu0.b32.cont [7/16] 0.0, 128
      %2122 = vxpose.xlu0.b32.cont [8/16] 0.0, 128
      %2123 = vxpose.xlu0.b32.cont [9/16] 0.0, 128
      %2124 = vxpose.xlu0.b32.cont [10/16] 0.0, 128
      %2125 = vxpose.xlu0.b32.cont [11/16] 0.0, 128
      %2126 = vxpose.xlu0.b32.cont [12/16] 0.0, 128
      %2127 = vxpose.xlu0.b32.cont [13/16] 0.0, 128
      %2128 = vxpose.xlu0.b32.cont [14/16] 0.0, 128
      %2129 = vxpose.xlu0.b32.cont [15/16] 0.0, 128
      %2130 = vxpose.xlu0.b32.end [16/16] 0.0, 128
      %v2131 = vpop.trf.xlu0
      %v2132 = vpop.trf.xlu0
      %v2133 = vpop.trf.xlu0
      %v2134 = vpop.trf.xlu0
      %v2135 = vpop.trf.xlu0
      %v2136 = vpop.trf.xlu0
      %v2137 = vpop.trf.xlu0
      %v2138 = vpop.trf.xlu0
      %v2139 = vpop.trf.xlu0
      %v2140 = vpop.trf.xlu0
      %v2141 = vpop.trf.xlu0
      %v2142 = vpop.trf.xlu0
      %v2143 = vpop.trf.xlu0
      %v2144 = vpop.trf.xlu0
      %v2145 = vpop.trf.xlu0
      %v2146 = vpop.trf.xlu0
      %2148 = vrot.lane.b32.xlu0 %v1935, 112
      %v2149 = vpop.permute.xlu0 %2148
      %2151 = vxpose.xlu0.b32.start [1/16] %v2149, 128
      %2152 = vxpose.xlu0.b32.cont [2/16] 0.0, 128
      %2153 = vxpose.xlu0.b32.cont [3/16] 0.0, 128
      %2154 = vxpose.xlu0.b32.cont [4/16] 0.0, 128
      %2155 = vxpose.xlu0.b32.cont [5/16] 0.0, 128
      %2156 = vxpose.xlu0.b32.cont [6/16] 0.0, 128
      %2157 = vxpose.xlu0.b32.cont [7/16] 0.0, 128
      %2158 = vxpose.xlu0.b32.cont [8/16] 0.0, 128
      %2159 = vxpose.xlu0.b32.cont [9/16] 0.0, 128
      %2160 = vxpose.xlu0.b32.cont [10/16] 0.0, 128
      %2161 = vxpose.xlu0.b32.cont [11/16] 0.0, 128
      %2162 = vxpose.xlu0.b32.cont [12/16] 0.0, 128
      %2163 = vxpose.xlu0.b32.cont [13/16] 0.0, 128
      %2164 = vxpose.xlu0.b32.cont [14/16] 0.0, 128
      %2165 = vxpose.xlu0.b32.cont [15/16] 0.0, 128
      %2166 = vxpose.xlu0.b32.end [16/16] 0.0, 128
      %v2167 = vpop.trf.xlu0
      %v2168 = vpop.trf.xlu0
      %v2169 = vpop.trf.xlu0
      %v2170 = vpop.trf.xlu0
      %v2171 = vpop.trf.xlu0
      %v2172 = vpop.trf.xlu0
      %v2173 = vpop.trf.xlu0
      %v2174 = vpop.trf.xlu0
      %v2175 = vpop.trf.xlu0
      %v2176 = vpop.trf.xlu0
      %v2177 = vpop.trf.xlu0
      %v2178 = vpop.trf.xlu0
      %v2179 = vpop.trf.xlu0
      %v2180 = vpop.trf.xlu0
      %v2181 = vpop.trf.xlu0
      %v2182 = vpop.trf.xlu0
      %2183 = vrot.lane.b32.xlu0 %v1935, 96
      %v2184 = vpop.permute.xlu0 %2183
      %2186 = vxpose.xlu0.b32.start [1/16] %v2184, 128
      %2187 = vxpose.xlu0.b32.cont [2/16] 0.0, 128
      %2188 = vxpose.xlu0.b32.cont [3/16] 0.0, 128
      %2189 = vxpose.xlu0.b32.cont [4/16] 0.0, 128
      %2190 = vxpose.xlu0.b32.cont [5/16] 0.0, 128
      %2191 = vxpose.xlu0.b32.cont [6/16] 0.0, 128
      %2192 = vxpose.xlu0.b32.cont [7/16] 0.0, 128
      %2193 = vxpose.xlu0.b32.cont [8/16] 0.0, 128
      %2194 = vxpose.xlu0.b32.cont [9/16] 0.0, 128
      %2195 = vxpose.xlu0.b32.cont [10/16] 0.0, 128
      %2196 = vxpose.xlu0.b32.cont [11/16] 0.0, 128
      %2197 = vxpose.xlu0.b32.cont [12/16] 0.0, 128
      %2198 = vxpose.xlu0.b32.cont [13/16] 0.0, 128
      %2199 = vxpose.xlu0.b32.cont [14/16] 0.0, 128
      %2200 = vxpose.xlu0.b32.cont [15/16] 0.0, 128
      %2201 = vxpose.xlu0.b32.end [16/16] 0.0, 128
      %v2202 = vpop.trf.xlu0
      %v2203 = vpop.trf.xlu0
      %v2204 = vpop.trf.xlu0
      %v2205 = vpop.trf.xlu0
      %v2206 = vpop.trf.xlu0
      %v2207 = vpop.trf.xlu0
      %v2208 = vpop.trf.xlu0
      %v2209 = vpop.trf.xlu0
      %v2210 = vpop.trf.xlu0
      %v2211 = vpop.trf.xlu0
      %v2212 = vpop.trf.xlu0
      %v2213 = vpop.trf.xlu0
      %v2214 = vpop.trf.xlu0
      %v2215 = vpop.trf.xlu0
      %v2216 = vpop.trf.xlu0
      %v2217 = vpop.trf.xlu0
      %2218 = vrot.lane.b32.xlu0 %v1935, 80
      %v2219 = vpop.permute.xlu0 %2218
      %2221 = vxpose.xlu0.b32.start [1/16] %v2219, 128
      %2222 = vxpose.xlu0.b32.cont [2/16] 0.0, 128
      %2223 = vxpose.xlu0.b32.cont [3/16] 0.0, 128
      %2224 = vxpose.xlu0.b32.cont [4/16] 0.0, 128
      %2225 = vxpose.xlu0.b32.cont [5/16] 0.0, 128
      %2226 = vxpose.xlu0.b32.cont [6/16] 0.0, 128
      %2227 = vxpose.xlu0.b32.cont [7/16] 0.0, 128
      %2228 = vxpose.xlu0.b32.cont [8/16] 0.0, 128
      %2229 = vxpose.xlu0.b32.cont [9/16] 0.0, 128
      %2230 = vxpose.xlu0.b32.cont [10/16] 0.0, 128
      %2231 = vxpose.xlu0.b32.cont [11/16] 0.0, 128
      %2232 = vxpose.xlu0.b32.cont [12/16] 0.0, 128
      %2233 = vxpose.xlu0.b32.cont [13/16] 0.0, 128
      %2234 = vxpose.xlu0.b32.cont [14/16] 0.0, 128
      %2235 = vxpose.xlu0.b32.cont [15/16] 0.0, 128
      %2236 = vxpose.xlu0.b32.end [16/16] 0.0, 128
      %v2237 = vpop.trf.xlu0
      %v2238 = vpop.trf.xlu0
      %v2239 = vpop.trf.xlu0
      %v2240 = vpop.trf.xlu0
      %v2241 = vpop.trf.xlu0
      %v2242 = vpop.trf.xlu0
      %v2243 = vpop.trf.xlu0
      %v2244 = vpop.trf.xlu0
      %v2245 = vpop.trf.xlu0
      %v2246 = vpop.trf.xlu0
      %v2247 = vpop.trf.xlu0
      %v2248 = vpop.trf.xlu0
      %v2249 = vpop.trf.xlu0
      %v2250 = vpop.trf.xlu0
      %v2251 = vpop.trf.xlu0
      %v2252 = vpop.trf.xlu0
      %2254 = vset.pattern.permute.xlu0 0
      %2255 = vperm.xlu0 %2254, %v2131
      %v2256 = vpop.permute.xlu0 %2255
      %2259 = vset.pattern.permute.xlu0 0
      %2260 = vperm.xlu0 %2259, %v2132
      %v2261 = vpop.permute.xlu0 %2260
      %2264 = vset.pattern.permute.xlu0 7
      %2265 = vperm.xlu0 %2264, %v2167
      %v2266 = vpop.permute.xlu0 %2265
      %2269 = vset.pattern.permute.xlu0 7
      %2270 = vperm.xlu0 %2269, %v2168
      %v2271 = vpop.permute.xlu0 %2270
      %v2273 = vsel %vm642, %v2256, %v2266
      %v2274 = vsel %vm642, %v2261, %v2271
      %v2275 = vlaneseq
      %v2276 = vshrl.u32 %v2275, 7
      %v2277 = vsub.s32 0, %v2276
      %v2278 = vrot.slane %v1976, %v2277
      %v2279 = vmul.f32 %v2273, %v2278
      %v2280 = vmul.f32 %v2274, %v2278
      %2281 = vset.pattern.permute.xlu0 1
      %2282 = vperm.xlu0 %2281, %v2131
      %v2283 = vpop.permute.xlu0 %2282
      %2285 = vset.pattern.permute.xlu0 1
      %2286 = vperm.xlu0 %2285, %v2132
      %v2287 = vpop.permute.xlu0 %2286
      %2289 = vset.pattern.permute.xlu0 6
      %2290 = vperm.xlu0 %2289, %v2167
      %v2291 = vpop.permute.xlu0 %2290
      %2293 = vset.pattern.permute.xlu0 6
      %2294 = vperm.xlu0 %2293, %v2168
      %v2295 = vpop.permute.xlu0 %2294
      %v2297 = vsel %vm642, %v2283, %v2291
      %v2298 = vsel %vm642, %v2287, %v2295
      %v2299 = vlaneseq
      %v2300 = vshrl.u32 %v2299, 7
      %v2301 = vsub.s32 1, %v2300
      %v2302 = vrot.slane %v1976, %v2301
      %v2303 = vmul.f32 %v2297, %v2302
      %v2304 = vmul.f32 %v2298, %v2302
      %2305 = vset.pattern.permute.xlu0 2
      %2306 = vperm.xlu0 %2305, %v2131
      %v2307 = vpop.permute.xlu0 %2306
      %2309 = vset.pattern.permute.xlu0 2
      %2310 = vperm.xlu0 %2309, %v2132
      %v2311 = vpop.permute.xlu0 %2310
      %2313 = vset.pattern.permute.xlu0 5
      %2314 = vperm.xlu0 %2313, %v2167
      %v2315 = vpop.permute.xlu0 %2314
      %2317 = vset.pattern.permute.xlu0 5
      %2318 = vperm.xlu0 %2317, %v2168
      %v2319 = vpop.permute.xlu0 %2318
      %v2321 = vsel %vm642, %v2307, %v2315
      %v2322 = vsel %vm642, %v2311, %v2319
      %v2323 = vlaneseq
      %v2324 = vshrl.u32 %v2323, 7
      %v2325 = vsub.s32 2, %v2324
      %v2326 = vrot.slane %v1976, %v2325
      %v2327 = vmul.f32 %v2321, %v2326
      %v2328 = vmul.f32 %v2322, %v2326
      %2329 = vset.pattern.permute.xlu0 3
      %2330 = vperm.xlu0 %2329, %v2131
      %v2331 = vpop.permute.xlu0 %2330
      %2333 = vset.pattern.permute.xlu0 3
      %2334 = vperm.xlu0 %2333, %v2132
      %v2335 = vpop.permute.xlu0 %2334
      %2337 = vset.pattern.permute.xlu0 4
      %2338 = vperm.xlu0 %2337, %v2167
      %v2339 = vpop.permute.xlu0 %2338
      %2341 = vset.pattern.permute.xlu0 4
      %2342 = vperm.xlu0 %2341, %v2168
      %v2343 = vpop.permute.xlu0 %2342
      %v2345 = vsel %vm642, %v2331, %v2339
      %v2346 = vsel %vm642, %v2335, %v2343
      %v2347 = vlaneseq
      %v2348 = vshrl.u32 %v2347, 7
      %v2349 = vsub.s32 3, %v2348
      %v2350 = vrot.slane %v1976, %v2349
      %v2351 = vmul.f32 %v2345, %v2350
      %v2352 = vmul.f32 %v2346, %v2350
      %2353 = vset.pattern.permute.xlu0 4
      %2354 = vperm.xlu0 %2353, %v2131
      %v2355 = vpop.permute.xlu0 %2354
      %2357 = vset.pattern.permute.xlu0 4
      %2358 = vperm.xlu0 %2357, %v2132
      %v2359 = vpop.permute.xlu0 %2358
      %2361 = vset.pattern.permute.xlu0 3
      %2362 = vperm.xlu0 %2361, %v2167
      %v2363 = vpop.permute.xlu0 %2362
      %2365 = vset.pattern.permute.xlu0 3
      %2366 = vperm.xlu0 %2365, %v2168
      %v2367 = vpop.permute.xlu0 %2366
      %v2369 = vsel %vm642, %v2355, %v2363
      %v2370 = vsel %vm642, %v2359, %v2367
      %v2371 = vlaneseq
      %v2372 = vshrl.u32 %v2371, 7
      %v2373 = vsub.s32 4, %v2372
      %v2374 = vrot.slane %v1976, %v2373
      %v2375 = vmul.f32 %v2369, %v2374
      %v2376 = vmul.f32 %v2370, %v2374
      %2377 = vset.pattern.permute.xlu0 5
      %2378 = vperm.xlu0 %2377, %v2131
      %v2379 = vpop.permute.xlu0 %2378
      %2381 = vset.pattern.permute.xlu0 5
      %2382 = vperm.xlu0 %2381, %v2132
      %v2383 = vpop.permute.xlu0 %2382
      %2385 = vset.pattern.permute.xlu0 2
      %2386 = vperm.xlu0 %2385, %v2167
      %v2387 = vpop.permute.xlu0 %2386
      %2389 = vset.pattern.permute.xlu0 2
      %2390 = vperm.xlu0 %2389, %v2168
      %v2391 = vpop.permute.xlu0 %2390
      %v2393 = vsel %vm642, %v2379, %v2387
      %v2394 = vsel %vm642, %v2383, %v2391
      %v2395 = vlaneseq
      %v2396 = vshrl.u32 %v2395, 7
      %v2397 = vsub.s32 5, %v2396
      %v2398 = vrot.slane %v1976, %v2397
      %v2399 = vmul.f32 %v2393, %v2398
      %v2400 = vmul.f32 %v2394, %v2398
      %2401 = vset.pattern.permute.xlu0 6
      %2402 = vperm.xlu0 %2401, %v2131
      %v2403 = vpop.permute.xlu0 %2402
      %2405 = vset.pattern.permute.xlu0 6
      %2406 = vperm.xlu0 %2405, %v2132
      %v2407 = vpop.permute.xlu0 %2406
      %2409 = vset.pattern.permute.xlu0 1
      %2410 = vperm.xlu0 %2409, %v2167
      %v2411 = vpop.permute.xlu0 %2410
      %2413 = vset.pattern.permute.xlu0 1
      %2414 = vperm.xlu0 %2413, %v2168
      %v2415 = vpop.permute.xlu0 %2414
      %v2417 = vsel %vm642, %v2403, %v2411
      %v2418 = vsel %vm642, %v2407, %v2415
      %v2419 = vlaneseq
      %v2420 = vshrl.u32 %v2419, 7
      %v2421 = vsub.s32 6, %v2420
      %v2422 = vrot.slane %v1976, %v2421
      %v2423 = vmul.f32 %v2417, %v2422
      %v2424 = vmul.f32 %v2418, %v2422
      %2425 = vset.pattern.permute.xlu0 7
      %2426 = vperm.xlu0 %2425, %v2131
      %v2427 = vpop.permute.xlu0 %2426
      %2429 = vset.pattern.permute.xlu0 7
      %2430 = vperm.xlu0 %2429, %v2132
      %v2431 = vpop.permute.xlu0 %2430
      %2433 = vset.pattern.permute.xlu0 0
      %2434 = vperm.xlu0 %2433, %v2167
      %v2435 = vpop.permute.xlu0 %2434
      %2437 = vset.pattern.permute.xlu0 0
      %2438 = vperm.xlu0 %2437, %v2168
      %v2439 = vpop.permute.xlu0 %2438
      %v2441 = vsel %vm642, %v2427, %v2435
      %v2442 = vsel %vm642, %v2431, %v2439
      %v2443 = vlaneseq
      %v2444 = vshrl.u32 %v2443, 7
      %v2445 = vsub.s32 7, %v2444
      %v2446 = vrot.slane %v1976, %v2445
      %v2447 = vmul.f32 %v2441, %v2446
      %v2448 = vmul.f32 %v2442, %v2446
      %v2449 = vmul.f32 %v2084, 0.0
      %v2450 = vmul.f32 %v2086, 0.0
      %v2451 = vadd.f32 %v2449, %v2279
      %v2452 = vadd.f32 %v2450, %v2280
      %v2453 = vmul.f32 %v2088, %v2451
      %v2454 = vmul.f32 %v2090, %v2452
      %v2455 = vadd.f32 %v2453, %v2303
      %v2456 = vadd.f32 %v2454, %v2304
      %v2457 = vmul.f32 %v2092, %v2455
      %v2458 = vmul.f32 %v2094, %v2456
      %v2459 = vadd.f32 %v2457, %v2327
      %v2460 = vadd.f32 %v2458, %v2328
      %v2461 = vmul.f32 %v2096, %v2459
      %v2462 = vmul.f32 %v2098, %v2460
      %v2463 = vadd.f32 %v2461, %v2351
      %v2464 = vadd.f32 %v2462, %v2352
      %v2465 = vmul.f32 %v2100, %v2463
      %v2466 = vmul.f32 %v2102, %v2464
      %v2467 = vadd.f32 %v2465, %v2375
      %v2468 = vadd.f32 %v2466, %v2376
      %v2469 = vmul.f32 %v2104, %v2467
      %v2470 = vmul.f32 %v2106, %v2468
      %v2471 = vadd.f32 %v2469, %v2399
      %v2472 = vadd.f32 %v2470, %v2400
      %v2473 = vmul.f32 %v2108, %v2471
      %v2474 = vmul.f32 %v2110, %v2472
      %v2475 = vadd.f32 %v2473, %v2423
      %v2476 = vadd.f32 %v2474, %v2424
      %v2477 = vmul.f32 %v2112, %v2475
      %v2478 = vmul.f32 %v2114, %v2476
      %v2479 = vadd.f32 %v2477, %v2447
      %v2480 = vadd.f32 %v2478, %v2448
      %2482 = vset.pattern.permute.xlu0 0
      %2483 = vperm.xlu0 %2482, %v2202
      %v2484 = vpop.permute.xlu0 %2483
      %2487 = vset.pattern.permute.xlu0 0
      %2488 = vperm.xlu0 %2487, %v2203
      %v2489 = vpop.permute.xlu0 %2488
      %2492 = vset.pattern.permute.xlu0 7
      %2493 = vperm.xlu0 %2492, %v2237
      %v2494 = vpop.permute.xlu0 %2493
      %2497 = vset.pattern.permute.xlu0 7
      %2498 = vperm.xlu0 %2497, %v2238
      %v2499 = vpop.permute.xlu0 %2498
      %v2501 = vsel %vm642, %v2484, %v2494
      %v2502 = vsel %vm642, %v2489, %v2499
      %v2503 = vmul.f32 %v2451, %v2501
      %v2504 = vmul.f32 %v2452, %v2502
      %v2505 = vadd.f32 %v2503, %v2504
      %v2506 = vrot.slane %v2505, 4
      %v2507 = vadd.f32 %v2505, %v2506
      %v2508 = vrot.slane %v2507, 2
      %v2509 = vadd.f32 %v2507, %v2508
      %v2510 = vrot.slane %v2509, 1
      %v2511 = vadd.f32 %v2509, %v2510
      %2512 = vset.pattern.permute.xlu0 1
      %2513 = vperm.xlu0 %2512, %v2202
      %v2514 = vpop.permute.xlu0 %2513
      %2516 = vset.pattern.permute.xlu0 1
      %2517 = vperm.xlu0 %2516, %v2203
      %v2518 = vpop.permute.xlu0 %2517
      %2520 = vset.pattern.permute.xlu0 6
      %2521 = vperm.xlu0 %2520, %v2237
      %v2522 = vpop.permute.xlu0 %2521
      %2524 = vset.pattern.permute.xlu0 6
      %2525 = vperm.xlu0 %2524, %v2238
      %v2526 = vpop.permute.xlu0 %2525
      %v2528 = vsel %vm642, %v2514, %v2522
      %v2529 = vsel %vm642, %v2518, %v2526
      %v2530 = vmul.f32 %v2455, %v2528
      %v2531 = vmul.f32 %v2456, %v2529
      %v2532 = vadd.f32 %v2530, %v2531
      %v2533 = vrot.slane %v2532, 4
      %v2534 = vadd.f32 %v2532, %v2533
      %v2535 = vrot.slane %v2534, 2
      %v2536 = vadd.f32 %v2534, %v2535
      %v2537 = vrot.slane %v2536, 1
      %v2538 = vadd.f32 %v2536, %v2537
      %2539 = vset.pattern.permute.xlu0 2
      %2540 = vperm.xlu0 %2539, %v2202
      %v2541 = vpop.permute.xlu0 %2540
      %2543 = vset.pattern.permute.xlu0 2
      %2544 = vperm.xlu0 %2543, %v2203
      %v2545 = vpop.permute.xlu0 %2544
      %2547 = vset.pattern.permute.xlu0 5
      %2548 = vperm.xlu0 %2547, %v2237
      %v2549 = vpop.permute.xlu0 %2548
      %2551 = vset.pattern.permute.xlu0 5
      %2552 = vperm.xlu0 %2551, %v2238
      %v2553 = vpop.permute.xlu0 %2552
      %v2555 = vsel %vm642, %v2541, %v2549
      %v2556 = vsel %vm642, %v2545, %v2553
      %v2557 = vmul.f32 %v2459, %v2555
      %v2558 = vmul.f32 %v2460, %v2556
      %v2559 = vadd.f32 %v2557, %v2558
      %v2560 = vrot.slane %v2559, 4
      %v2561 = vadd.f32 %v2559, %v2560
      %v2562 = vrot.slane %v2561, 2
      %v2563 = vadd.f32 %v2561, %v2562
      %v2564 = vrot.slane %v2563, 1
      %v2565 = vadd.f32 %v2563, %v2564
      %2566 = vset.pattern.permute.xlu0 3
      %2567 = vperm.xlu0 %2566, %v2202
      %v2568 = vpop.permute.xlu0 %2567
      %2570 = vset.pattern.permute.xlu0 3
      %2571 = vperm.xlu0 %2570, %v2203
      %v2572 = vpop.permute.xlu0 %2571
      %2574 = vset.pattern.permute.xlu0 4
      %2575 = vperm.xlu0 %2574, %v2237
      %v2576 = vpop.permute.xlu0 %2575
      %2578 = vset.pattern.permute.xlu0 4
      %2579 = vperm.xlu0 %2578, %v2238
      %v2580 = vpop.permute.xlu0 %2579
      %v2582 = vsel %vm642, %v2568, %v2576
      %v2583 = vsel %vm642, %v2572, %v2580
      %v2584 = vmul.f32 %v2463, %v2582
      %v2585 = vmul.f32 %v2464, %v2583
      %v2586 = vadd.f32 %v2584, %v2585
      %v2587 = vrot.slane %v2586, 4
      %v2588 = vadd.f32 %v2586, %v2587
      %v2589 = vrot.slane %v2588, 2
      %v2590 = vadd.f32 %v2588, %v2589
      %v2591 = vrot.slane %v2590, 1
      %v2592 = vadd.f32 %v2590, %v2591
      %2593 = vset.pattern.permute.xlu0 4
      %2594 = vperm.xlu0 %2593, %v2202
      %v2595 = vpop.permute.xlu0 %2594
      %2597 = vset.pattern.permute.xlu0 4
      %2598 = vperm.xlu0 %2597, %v2203
      %v2599 = vpop.permute.xlu0 %2598
      %2601 = vset.pattern.permute.xlu0 3
      %2602 = vperm.xlu0 %2601, %v2237
      %v2603 = vpop.permute.xlu0 %2602
      %2605 = vset.pattern.permute.xlu0 3
      %2606 = vperm.xlu0 %2605, %v2238
      %v2607 = vpop.permute.xlu0 %2606
      %v2609 = vsel %vm642, %v2595, %v2603
      %v2610 = vsel %vm642, %v2599, %v2607
      %v2611 = vmul.f32 %v2467, %v2609
      %v2612 = vmul.f32 %v2468, %v2610
      %v2613 = vadd.f32 %v2611, %v2612
      %v2614 = vrot.slane %v2613, 4
      %v2615 = vadd.f32 %v2613, %v2614
      %v2616 = vrot.slane %v2615, 2
      %v2617 = vadd.f32 %v2615, %v2616
      %v2618 = vrot.slane %v2617, 1
      %v2619 = vadd.f32 %v2617, %v2618
      %2620 = vset.pattern.permute.xlu0 5
      %2621 = vperm.xlu0 %2620, %v2202
      %v2622 = vpop.permute.xlu0 %2621
      %2624 = vset.pattern.permute.xlu0 5
      %2625 = vperm.xlu0 %2624, %v2203
      %v2626 = vpop.permute.xlu0 %2625
      %2628 = vset.pattern.permute.xlu0 2
      %2629 = vperm.xlu0 %2628, %v2237
      %v2630 = vpop.permute.xlu0 %2629
      %2632 = vset.pattern.permute.xlu0 2
      %2633 = vperm.xlu0 %2632, %v2238
      %v2634 = vpop.permute.xlu0 %2633
      %v2636 = vsel %vm642, %v2622, %v2630
      %v2637 = vsel %vm642, %v2626, %v2634
      %v2638 = vmul.f32 %v2471, %v2636
      %v2639 = vmul.f32 %v2472, %v2637
      %v2640 = vadd.f32 %v2638, %v2639
      %v2641 = vrot.slane %v2640, 4
      %v2642 = vadd.f32 %v2640, %v2641
      %v2643 = vrot.slane %v2642, 2
      %v2644 = vadd.f32 %v2642, %v2643
      %v2645 = vrot.slane %v2644, 1
      %v2646 = vadd.f32 %v2644, %v2645
      %2647 = vset.pattern.permute.xlu0 6
      %2648 = vperm.xlu0 %2647, %v2202
      %v2649 = vpop.permute.xlu0 %2648
      %2651 = vset.pattern.permute.xlu0 6
      %2652 = vperm.xlu0 %2651, %v2203
      %v2653 = vpop.permute.xlu0 %2652
      %2655 = vset.pattern.permute.xlu0 1
      %2656 = vperm.xlu0 %2655, %v2237
      %v2657 = vpop.permute.xlu0 %2656
      %2659 = vset.pattern.permute.xlu0 1
      %2660 = vperm.xlu0 %2659, %v2238
      %v2661 = vpop.permute.xlu0 %2660
      %v2663 = vsel %vm642, %v2649, %v2657
      %v2664 = vsel %vm642, %v2653, %v2661
      %v2665 = vmul.f32 %v2475, %v2663
      %v2666 = vmul.f32 %v2476, %v2664
      %v2667 = vadd.f32 %v2665, %v2666
      %v2668 = vrot.slane %v2667, 4
      %v2669 = vadd.f32 %v2667, %v2668
      %v2670 = vrot.slane %v2669, 2
      %v2671 = vadd.f32 %v2669, %v2670
      %v2672 = vrot.slane %v2671, 1
      %v2673 = vadd.f32 %v2671, %v2672
      %2674 = vset.pattern.permute.xlu0 7
      %2675 = vperm.xlu0 %2674, %v2202
      %v2676 = vpop.permute.xlu0 %2675
      %2678 = vset.pattern.permute.xlu0 7
      %2679 = vperm.xlu0 %2678, %v2203
      %v2680 = vpop.permute.xlu0 %2679
      %2682 = vset.pattern.permute.xlu0 0
      %2683 = vperm.xlu0 %2682, %v2237
      %v2684 = vpop.permute.xlu0 %2683
      %2686 = vset.pattern.permute.xlu0 0
      %2687 = vperm.xlu0 %2686, %v2238
      %v2688 = vpop.permute.xlu0 %2687
      %v2690 = vsel %vm642, %v2676, %v2684
      %v2691 = vsel %vm642, %v2680, %v2688
      %v2692 = vmul.f32 %v2479, %v2690
      %v2693 = vmul.f32 %v2480, %v2691
      %v2694 = vadd.f32 %v2692, %v2693
      %v2695 = vrot.slane %v2694, 4
      %v2696 = vadd.f32 %v2694, %v2695
      %v2697 = vrot.slane %v2696, 2
      %v2698 = vadd.f32 %v2696, %v2697
      %v2699 = vrot.slane %v2698, 1
      %v2700 = vadd.f32 %v2698, %v2699
      %v2701 = vsel %vm1139, %v2511, %v2538
      %v2702 = vsel %vm1141, %v2701, %v2565
      %v2703 = vsel %vm649, %v2702, %v2592
      %v2704 = vsel %vm1003, %v2703, %v2619
      %v2705 = vsel %vm787, %v2704, %v2646
      %v2706 = vsel %vm738, %v2705, %v2673
      %v2707 = vsel %vm689, %v2706, %v2700
      %v2708 = vmul.f32 %v1904, %v1975
      %v2709 = vadd.f32 %v2707, %v2708
      %s2710 = scalar_lea.vmem [#allocation6], 8
      %2711 = vst.msk [vmem:[%s2710] sm:$0xff] %vm642, %v2709
      %v2713 = vrot.slane %v2709, 7
      %v2715 = vrot.slane %v2709, 5
      %v2717 = vrot.slane %v2709, 3
      %v2719 = vrot.slane %v2709, 1
      %v2721 = vsel %vm1139, %v2713, %v2715
      %v2722 = vsel %vm1141, %v2721, %v2717
      %v2723 = vsel %vm649, %v2722, %v2719
      %v2724 = vsel %vm1003, %v2723, %v2713
      %v2725 = vsel %vm787, %v2724, %v2715
      %v2726 = vsel %vm738, %v2725, %v2717
      %v2727 = vsel %vm689, %v2726, %v2719
      %2729 = vrot.lane.b32.xlu0 %v2727, 64
      %v2730 = vpop.permute.xlu0 %2729
      %s2732 = scalar_lea.vmem [#allocation7], 8
      %2733 = vst.msk [vmem:[%s2732] sm:$0xff] %vm642, %v2730
      %v2734 = vld [vmem:[#allocation6] sm:$0xff]
      %v2735 = vld [vmem:[#allocation6 + $0x8] sm:$0xff]
      %v2736 = vld [vmem:[#allocation7] sm:$0xff]
      %v2737 = vld [vmem:[#allocation7 + $0x8] sm:$0xff]
      %v2738 = vadd.f32 %v2734, %v2736
      %v2739 = vadd.f32 %v2735, %v2737
      %v2740 = vld [vmem:[#allocation5] sm:$0xff]
      %v2741 = vld [vmem:[#allocation5 + $0x8] sm:$0xff]
      %v2742 = vxor.u32 %v2740, 2147483648
      %v2743 = vxor.u32 %v2741, 2147483648
      %v2744 = vmul.f32 %v2742, 1.442695
      %v2745 = vpow.pop %v2744
      %v2746 = vmul.f32 %v2743, 1.442695
      %v2747 = vpow.pop %v2746
      %v2748 = vadd.f32 %v2745, 1.0
      %v2749 = vadd.f32 %v2747, 1.0
      %v2750 = vrcp.pop %v2748
      %v2751 = vmul.f32 1.0, %v2750
      %v2752 = vrcp.pop %v2749
      %v2753 = vmul.f32 1.0, %v2752
      %v2754 = vmul.f32 %v2740, %v2751
      %v2755 = vmul.f32 %v2741, %v2753
      %v2756 = vmul.f32 %v2738, %v2754
      %v2757 = vmul.f32 %v2739, %v2755
      %v2758 = vpack.c.bf16 %v2757, %v2756
      %v2759 = vld [vmem:[%s11] sm:$0xf]
      %v2760 = vld [vmem:[%s11 + $0x4] sm:$0xf]
      %v2761 = vld [vmem:[%s11 + $0x8] sm:$0xf]
      %v2762 = vld [vmem:[%s11 + $0xc] sm:$0xf]
      %v2763 = vld [vmem:[%s11 + $0x10] sm:$0xf]
      %v2764 = vld [vmem:[%s11 + $0x14] sm:$0xf]
      %v2765 = vld [vmem:[%s11 + $0x18] sm:$0xf]
      %v2766 = vld [vmem:[%s11 + $0x1c] sm:$0xf]
      %v2767 = vld [vmem:[%s12] sm:$0x1]
      %v2769 = vlaneseq
      %v2770 = vshrl.u32 %v2769, 7
      %v2771 = vsub.s32 0, %v2770
      %v2772 = vrot.slane %v2767, %v2771
      %v2782 = vunpack.c.l.b16 %v2759
      %v2783 = vunpack.c.l.b16 %v2760
      %v2784 = vunpack.c.l.b16 %v2761
      %v2785 = vunpack.c.l.b16 %v2762
      %v2786 = vunpack.c.l.b16 %v2763
      %v2787 = vunpack.c.l.b16 %v2764
      %v2788 = vunpack.c.l.b16 %v2765
      %v2789 = vunpack.c.l.b16 %v2766
      %v2790 = vpack.c.b16 %v2783, %v2782
      %v2791 = vpack.c.b16 %v2785, %v2784
      %v2792 = vpack.c.b16 %v2787, %v2786
      %v2793 = vpack.c.b16 %v2789, %v2788
      %v2799 = vsel %vm642, %v2758, 0
      %2801 = vmatprep.subr.bf16.mxu0 0
      %2802 = vmatpush1.bf16.msra.mxu0 %v2790
      %2803 = vmatprep.subr.bf16.mxu0 0
      %2804 = vmatpush1.bf16.msra.mxu0 %v2791
      %2805 = vmatprep.subr.bf16.mxu0 0
      %2806 = vmatpush1.bf16.msra.mxu0 %v2792
      %2807 = vmatprep.subr.bf16.mxu0 0
      %2808 = vmatpush1.bf16.msra.mxu0 %v2793
      %2809 = vmatprep.subr.bf16.mxu0 0
      %2810 = vmatpush1.bf16.msra.mxu0 0
      %2811 = vmatprep.subr.bf16.mxu0 0
      %2812 = vmatpush1.bf16.msra.mxu0 0
      %2813 = vmatprep.subr.bf16.mxu0 0
      %2814 = vmatpush1.bf16.msra.mxu0 0
      %2815 = vmatprep.subr.bf16.mxu0 0
      %2816 = vmatpush1.bf16.msra.mxu0 0
      %2817 = vmatprep.subr.bf16.mxu0 0
      %2818 = vmatpush1.bf16.msra.mxu0 0
      %2819 = vmatprep.subr.bf16.mxu0 0
      %2820 = vmatpush1.bf16.msra.mxu0 0
      %2821 = vmatprep.subr.bf16.mxu0 0
      %2822 = vmatpush1.bf16.msra.mxu0 0
      %2823 = vmatprep.subr.bf16.mxu0 0
      %2824 = vmatpush1.bf16.msra.mxu0 0
      %2825 = vmatprep.subr.bf16.mxu0 0
      %2826 = vmatpush1.bf16.msra.mxu0 0
      %2827 = vmatprep.subr.bf16.mxu0 0
      %2828 = vmatpush1.bf16.msra.mxu0 0
      %2829 = vmatprep.subr.bf16.mxu0 0
      %2830 = vmatpush1.bf16.msra.mxu0 0
      %2831 = vmatprep.subr.bf16.mxu0 0
      %2832 = vmatpush1.bf16.msra.mxu0 0
      %2833 = vmatprep.mubr.bf16.mxu0 0
      %2834 = vmatmul.mubr.bf16.gmra.mrb[0].mxu0 %v2799
      %v2835 = vpop.f32.mrb[0].mxu0
      %v2836 = vadd.f32 %v2772, %v2835
      %v2837 = vpop.f32.mrb[0].mxu0
      %v2838 = vpop.f32.mrb[0].mxu0
      %v2839 = vadd.f32 %v2772, %v2838
      %v2840 = vpop.f32.mrb[0].mxu0
      %2841 = vdwg.mxu0
      %v2842 = vsel %vm589, %v2836, 0.0
      %2843 = vadd.xlane.f32.xlu0 %v2842
      %v2844 = vpop.xlane.xlu0 %2843
      %v2845 = vsel %vm589, %v2839, 0.0
      %2846 = vadd.xlane.f32.xlu0 %v2845
      %v2847 = vpop.xlane.xlu0 %2846
      %v2848 = vrcp.pop 32.0
      %v2849 = vmul.f32 %v2844, %v2848
      %v2850 = vmul.f32 %v2847, %v2848
      %v2851 = vsub.f32 %v2836, %v2849
      %v2852 = vsub.f32 %v2839, %v2850
      %v2853 = vmul.f32 %v2851, %v2851
      %v2854 = vmul.f32 %v2852, %v2852
      %v2855 = vsel %vm589, %v2853, 0.0
      %2856 = vadd.xlane.f32.xlu0 %v2855
      %v2857 = vpop.xlane.xlu0 %2856
      %v2858 = vsel %vm589, %v2854, 0.0
      %2859 = vadd.xlane.f32.xlu0 %v2858
      %v2860 = vpop.xlane.xlu0 %2859
      %v2861 = vmul.f32 %v2857, %v2848
      %v2862 = vmul.f32 %v2860, %v2848
      %v2863 = vld [vmem:[%s544] sm:$0xff]
      %v2864 = vld [vmem:[%s544 + $0x8] sm:$0xff]
      %v2865 = vadd.f32 %v2861, 1e-06
      %v2866 = vadd.f32 %v2862, 1e-06
      %v2867 = vrsqrt.pop %v2865
      %v2868 = vrsqrt.pop %v2866
      %v2869 = vmul.f32 %v2851, %v2867
      %v2870 = vmul.f32 %v2852, %v2868
      %v2871 = vld [vmem:[%s548] sm:$0x1]
      %v2873 = vlaneseq
      %v2874 = vshrl.u32 %v2873, 7
      %v2875 = vsub.s32 0, %v2874
      %v2876 = vrot.slane %v2871, %v2875
      %v2878 = vmul.f32 %v2869, %v2876
      %v2879 = vmul.f32 %v2870, %v2876
      %v2880 = vadd.f32 %v2863, %v2878
      %v2881 = vadd.f32 %v2864, %v2879
      %v2882 = vld [vmem:[%s551] sm:$0x1]
      %v2884 = vlaneseq
      %v2885 = vshrl.u32 %v2884, 7
      %v2886 = vsub.s32 0, %v2885
      %v2887 = vrot.slane %v2882, %v2886
      %v2889 = vadd.f32 %v2880, %v2887
      %v2890 = vadd.f32 %v2881, %v2887
      %2891 = vst.msk [vmem:[%s560] sm:$0xff] %vm589, %v2889
      %2892 = vst.msk [vmem:[%s560 + $0x8] sm:$0xff] %vm589, %v2890
      %s2893 = smul.u32 2, %s30
      %p2894 = scmp.lt.s32.totalorder %s31, 1
      %s2895 = scalar_select %p2894, %s31, 1
      %p2896 = scmp.lt.s32.totalorder %s2893, 1
      %s2897 = scalar_select %p2896, %s2893, 1
      %s2898 = smul.addr %s2895, 2
      %s2899 = sadd.s32 %s2897, %s2898
      %s2900 = smul.addr %s2899, 8
      %s2901 = scalar_lea.vmem %s15, %s2900
      // Predicated region
      $region81: #{mm_mamba_encoder_layer.1} parent=79 // pred_check
        %p2902 = pneg %p390
      $region82: #{mm_mamba_encoder_layer.1} parent=79 // pred_check_branch
        %2904 = sbr.rel (%p2902) target = $region84
      $region83: #{mm_mamba_encoder_layer.1} parent=79 // pred_region
        %s2905 = smul.u32 2, %s30
      $region84: #{mm_mamba_encoder_layer.1} parent=79 // pred_fallthru
        _
    $region80: #{mm_mamba_encoder_layer.1} parent=5 // pred_fallthru
      _
    %p2906 = scmp.le.s32.totalorder 2, %s21
    // Predicated region
    $region85: #{mm_mamba_encoder_layer.1} parent=5 // pred_check
      %p2907 = pneg %p2906
    $region86: #{mm_mamba_encoder_layer.1} parent=5 // pred_check_branch
      %2909 = sbr.rel (%p2907) target = $region88
    $region87: #{mm_mamba_encoder_layer.1} parent=5 // pred_region
      %s2910 = ssub.s32 %s21, 2
      // Predicated region
      $region89: #{mm_mamba_encoder_layer.1} parent=87 // pred_check
        %p2911 = pneg %p396
      $region90: #{mm_mamba_encoder_layer.1} parent=87 // pred_check_branch
        %2913 = sbr.rel (%p2911) target = $region92
      $region91: #{mm_mamba_encoder_layer.1} parent=87 // pred_region
        %s2914 = smul.u32 2, %s32
        %p2915 = scmp.lt.s32.totalorder %s33, 1
        %s2916 = scalar_select %p2915, %s33, 1
        %p2917 = scmp.lt.s32.totalorder %s2914, 1
        %s2918 = scalar_select %p2917, %s2914, 1
        %s2919 = smul.addr %s2916, 2
        %s2920 = sadd.s32 %s2918, %s2919
        %s2921 = smul.addr %s2920, 8
        %s2922 = scalar_lea.vmem %s15, %s2921
      $region92: #{mm_mamba_encoder_layer.1} parent=87 // pred_fallthru
        _
    $region88: #{mm_mamba_encoder_layer.1} parent=5 // pred_fallthru
      _
  $region6: #{mm_mamba_encoder_layer.1} parent=0 // loop_footer
    %s25 = sadd.s32 1, %s21
  $region7: #{mm_mamba_encoder_layer.1} parent=0 // loop_footer_branch
    %20 = sbr.rel target = $region3
  $region8: #{mm_mamba_encoder_layer.1} parent=0 // loop_exit
    _

</llo_original>
